<compile_context>
chip_gen: v7x
topology: tpu7x:2x2x1
jax: 0.10.0
libtpu: 0.0.40
codegen_flags: <defaults>
</compile_context>

<pallas_src>
import jax
import jax.numpy as jnp
import numpy as np
from jax.experimental import pallas as pl
from jax.experimental.pallas import tpu as pltpu

NEG_SLOPE = 0.01          # nn.LeakyReLU default negative_slope

N_BATCH = 2
K = 5                     # conv kernel size
C1 = 64                   # conv1 real output channels
C1P = 128                 # packed slab lanes: [conv1(row r) | conv1(row r+1)]
C2 = 128                  # conv2 output channels
H1 = 14                   # conv1 output spatial
H2 = 7                    # conv2 output spatial
GROUP_ROWS = N_BATCH * 9 * 9            # 162 rows per parity group (n, i, j), i,j in 0..8
PP_ROWS = 4 * GROUP_ROWS                # 648 rows: 4 parity groups
ACC_ROWS = (N_BATCH - 1) * 81 + 6 * 9 + 6 + 1   # 142: covers tau = n*81 + oh*9 + ow


def _leaky(x):
    return jnp.where(x >= 0.0, x, NEG_SLOPE * x)


def _conv2_plan():
    """Static MXU schedule for conv2: 15 matmuls covering all 25 taps.

    Each entry is (window_start_row, [taps]) with 1 or 2 (kh, kw) taps.  For a
    2-tap entry, lanes 0:64 of the slab (conv1 row r) contract against tap A
    and lanes 64:128 (conv1 row r+1 == window start+1) against tap B, so the
    pair is a single fully dense (142,128)@(128,128) matmul.
    """
    plan = []
    for rh in range(2):
        for rw in range(2):
            g = 2 * rh + rw
            for qh in range(3 if rh == 0 else 2):
                kh = 2 * qh + rh
                base = g * GROUP_ROWS + qh * 9
                plan.append((base + 0, [(kh, rw), (kh, 2 + rw)]))   # qw=0,1 paired
                if rw == 0:
                    plan.append((base + 2, [(kh, 4)]))              # qw=2 unpaired
    return plan


_CONV2_PLAN = _conv2_plan()        # 15 entries (10 pairs + 5 singles)


# ---------------------------------------------------------------------------
# Single fused Pallas kernel: conv1 + conv2 + linear + sigmoid
# ---------------------------------------------------------------------------
def fused_discriminator_kernel(p1_ref, w1_ref, w2_ref, b2_ref,
                               wl0_ref, wl1_ref, bl_ref, o_ref, pp_ref):
    # ---- conv1 (+bias via gate column) + LeakyReLU --------------------------
    # One (648,64)@(64,128) MXU matmul directly produces the 2-tap-packed slab:
    #   pp[r, 0:64]   = LeakyReLU(conv1 pre-act of slab row r)   (exact 0 on halo rows)
    #   pp[r, 64:128] = LeakyReLU(conv1 pre-act of slab row r+1)
    pp_ref[...] = _leaky(jnp.dot(p1_ref[...], w1_ref[...],
                                 preferred_element_type=jnp.float32))

    # ---- conv2: 15 matmuls, 2 taps packed per matmul where the pair exists --
    # Kept as a plain `acc + dot` chain so Mosaic can use MXU-side accumulation
    # (MRB on v7x) instead of pop + VPU re-add per tap.
    acc = jnp.zeros((ACC_ROWS, C2), jnp.float32)
    for m, (start, _) in enumerate(_CONV2_PLAN):
        acc = acc + jnp.dot(pp_ref[pl.ds(start, ACC_ROWS), :], w2_ref[m],
                            preferred_element_type=jnp.float32)

    # ---- epilogue: bias + LeakyReLU + linear + sigmoid (no unaligned slices) -
    # Invalid accumulator rows (halo / ow in {7,8}) are zeroed by the wl slabs.
    z = _leaky(acc + b2_ref[...])                               # (142,128)
    s0 = jnp.sum(z * wl0_ref[...], axis=0, keepdims=True)       # (1,128) sample 0
    s1 = jnp.sum(z * wl1_ref[...], axis=0, keepdims=True)       # (1,128) sample 1
    logits = jnp.sum(jnp.concatenate([s0, s1], axis=0),
                     axis=1, keepdims=True) + bl_ref[...]       # (2,1)
    o_ref[...] = jax.nn.sigmoid(logits)


# ---------------------------------------------------------------------------
# One-time parameter transform into kernel-friendly layouts
# ---------------------------------------------------------------------------
def prepare_params(params):
    w1, b1 = params["w1"], params["b1"]      # (64,1,5,5), (64,)
    w2, b2 = params["w2"], params["b2"]      # (128,64,5,5), (128,)
    wl, bl = params["wl"], params["bl"]      # (1,6272), (1,)
    f32 = jnp.float32

    # Identity im2col kernel for conv1 (OIHW): output channel f holds the input
    # tap (kh, kw) = divmod(f, 5).  Lets the wrapper extract all 25 conv1
    # patches with a single conv HLO instead of 25 strided slices.
    eye = np.zeros((K * K, 1, K, K), np.float32)
    for kh in range(K):
        for kw in range(K):
            eye[kh * K + kw, 0, kh, kw] = 1.0

    # conv1 packed weight (64,128).  Patch-matrix columns:
    #   [taps(r) | gate(r) | 0*6 | taps(r+1) | gate(r+1) | 0*6]
    # Output lanes 0:64 = conv1(row r), lanes 64:128 = conv1(row r+1).  The
    # gate column both adds the bias on valid rows and forces exact zeros on
    # conv2-halo rows, so no in-kernel mask / bias-broadcast is needed.
    w1m = jnp.transpose(w1, (2, 3, 1, 0)).reshape(K * K, C1)           # (25,64)
    blk = jnp.pad(jnp.concatenate([w1m, b1.reshape(1, C1)], axis=0),
                  ((0, 6), (0, 0)))                                    # (32,64)
    z32 = jnp.zeros((32, C1), f32)
    w1p = jnp.concatenate(
        [jnp.concatenate([blk, z32], axis=1),
         jnp.concatenate([z32, blk], axis=1)], axis=0)                 # (64,128)

    # Bias-gate columns (column 0 of a 7-wide zero block), for rows r and r+1.
    gate9 = np.zeros((9, 9), np.float32)
    gate9[1:8, 1:8] = 1.0
    gate = np.tile(gate9[None, None], (4, N_BATCH, 1, 1)).reshape(-1)  # (648,)
    gpad0 = np.zeros((PP_ROWS, 7), np.float32)
    gpad1 = np.zeros((PP_ROWS, 7), np.float32)
    gpad0[:, 0] = gate
    gpad1[:-1, 0] = gate[1:]

    # conv2: one (128,128) block per planned matmul; rows 0:64 = tap A (Cin),
    # rows 64:128 = tap B (or zero for an unpaired tap).
    w2t = jnp.transpose(w2, (1, 0, 2, 3))                              # (64,128,5,5)
    zero_blk = jnp.zeros((C1, C2), f32)
    blocks = []
    for _, taps in _CONV2_PLAN:
        top = w2t[:, :, taps[0][0], taps[0][1]]
        bot = w2t[:, :, taps[1][0], taps[1][1]] if len(taps) == 2 else zero_blk
        blocks.append(jnp.concatenate([top, bot], axis=0))
    w2p = jnp.stack(blocks, axis=0)                                    # (15,128,128)

    # Linear weight folded onto the (142,128) conv2-accumulator layout: PyTorch
    # NCHW flatten (feature = c*49 + oh*7 + ow) baked in, one pre-masked slab
    # per sample with zeros on invalid rows (ow/oh in {7,8}, other sample).
    wl49 = jnp.transpose(wl.reshape(C2, H2, H2), (1, 2, 0))            # (7,7,128)
    blk81 = jnp.pad(wl49, ((0, 2), (0, 2), (0, 0))).reshape(81, C2)    # (81,128)
    wl0 = jnp.concatenate([blk81, jnp.zeros((ACC_ROWS - 81, C2), f32)], axis=0)
    wl1 = jnp.concatenate([jnp.zeros((81, C2), f32),
                           blk81[:ACC_ROWS - 81]], axis=0)

    return {
        "p_eye": jnp.asarray(eye), "p_w1": w1p,
        "p_g0": jnp.asarray(gpad0), "p_g1": jnp.asarray(gpad1),
        "p_w2": w2p, "p_b2": b2.reshape(1, C2),
        "p_wl0": wl0, "p_wl1": wl1, "p_bl": bl.reshape(1, 1),
    }


# ---------------------------------------------------------------------------
# Forward pass (single pallas_call)
# ---------------------------------------------------------------------------
@jax.jit
def discriminator_forward(img_nchw, prepped):
    # Host-side conv1 im2col directly in the parity-grouped, zero-halo row
    # order (row = g*162 + n*81 + i*9 + j), plus the +1-row-shifted copy and
    # the bias-gate columns.  One conv HLO + a short reshape/concat chain.
    pt = jax.lax.conv_general_dilated(
        img_nchw, prepped["p_eye"], window_strides=(2, 2),
        padding=[(2, 2), (2, 2)],
        dimension_numbers=("NCHW", "OIHW", "NHWC"))                # (2,14,14,25)
    base = pt.reshape(N_BATCH, H2, 2, H2, 2, K * K)                # split parities
    base = base.transpose(2, 4, 0, 1, 3, 5)                        # (rh,rw,n,i7,j7,t)
    base = jnp.pad(base, ((0, 0), (0, 0), (0, 0), (1, 1), (1, 1), (0, 0)))
    base = base.reshape(PP_ROWS, K * K)                            # (648,25)
    shifted = jnp.concatenate(
        [base[1:], jnp.zeros((1, K * K), jnp.float32)], axis=0)    # rows r+1
    p1 = jnp.concatenate(
        [base, prepped["p_g0"], shifted, prepped["p_g1"]], axis=1)  # (648,64)

    return pl.pallas_call(
        fused_discriminator_kernel,
        out_shape=jax.ShapeDtypeStruct((N_BATCH, 1), jnp.float32),
        in_specs=[pl.BlockSpec(memory_space=pltpu.MemorySpace.VMEM)] * 7,
        out_specs=pl.BlockSpec(memory_space=pltpu.MemorySpace.VMEM),
        scratch_shapes=[pltpu.VMEM((PP_ROWS, C1P), jnp.float32)],
    )(p1, prepped["p_w1"], prepped["p_w2"], prepped["p_b2"],
      prepped["p_wl0"], prepped["p_wl1"], prepped["p_bl"])


# ---------------------------------------------------------------------------
# Pure-JAX reference (for correctness check)
# ---------------------------------------------------------------------------
def reference_forward(img_nchw, params):
    def conv(x, w, b):
        y = jax.lax.conv_general_dilated(
            x, w, window_strides=(2, 2), padding=[(2, 2), (2, 2)],
            dimension_numbers=("NCHW", "OIHW", "NCHW"))
        y = y + b.reshape(1, -1, 1, 1)
        return jnp.where(y >= 0.0, y, NEG_SLOPE * y)

    x = conv(img_nchw, params["w1"], params["b1"])
    x = conv(x, params["w2"], params["b2"])
    x = x.reshape(x.shape[0], -1)
    z = x @ params["wl"].T + params["bl"]
    return jax.nn.sigmoid(z)


# ---------------------------------------------------------------------------
# Main
# ---------------------------------------------------------------------------
if __name__ == "__main__":
    key = jax.random.PRNGKey(0)
    k_img, k_w1, k_b1, k_w2, k_b2, k_wl, k_bl = jax.random.split(key, 7)

    # Deterministic synthetic parameters (PyTorch layouts: OIHW convs, (out,in) linear)
    params = {
        "w1": 0.05 * jax.random.normal(k_w1, (64, 1, 5, 5), dtype=jnp.float32),
        "b1": 0.05 * jax.random.normal(k_b1, (64,), dtype=jnp.float32),
        "w2": 0.02 * jax.random.normal(k_w2, (128, 64, 5, 5), dtype=jnp.float32),
        "b2": 0.02 * jax.random.normal(k_b2, (128,), dtype=jnp.float32),
        "wl": 0.01 * jax.random.normal(k_wl, (1, 128 * 7 * 7), dtype=jnp.float32),
        "bl": 0.01 * jax.random.normal(k_bl, (1,), dtype=jnp.float32),
    }

    # The Linear(128*7*7) layer implies a 28x28 input (two stride-2 convs -> 7x7)
    img = jax.random.normal(k_img, (2, 1, 28, 28), dtype=jnp.float32)  # NCHW, batch=2

    prepped = prepare_params(params)      # one-time weight re-layout
    out = discriminator_forward(img, prepped)
    out = jax.block_until_ready(out)

    ref = reference_forward(img, params)
    np.testing.assert_allclose(np.asarray(out), np.asarray(ref), rtol=5e-4, atol=5e-5)
    assert out.shape == (2, 1)

    print("KERNEL_OK")
</pallas_src>

<mosaic_0001>
module attributes {stable_mosaic.version = 11 : i64} {
  func.func @fused_discriminator_kernel(%arg0: memref<648x64xf32, #tpu.memory_space<vmem>>, %arg1: memref<64x128xf32, #tpu.memory_space<vmem>>, %arg2: memref<15x128x128xf32, #tpu.memory_space<vmem>>, %arg3: memref<1x128xf32, #tpu.memory_space<vmem>>, %arg4: memref<142x128xf32, #tpu.memory_space<vmem>>, %arg5: memref<142x128xf32, #tpu.memory_space<vmem>>, %arg6: memref<1x1xf32, #tpu.memory_space<vmem>>, %arg7: memref<2x1xf32, #tpu.memory_space<vmem>>, %arg8: memref<648x128xf32, #tpu.memory_space<vmem>>) attributes {dimension_semantics = [], scalar_prefetch = 0 : i64, scratch_operands = 1 : i64, tpu.core_type = #tpu.core_type<tc>} {
    %c0 = arith.constant 0 : index
    %c0_0 = arith.constant 0 : index
    %0 = vector.load %arg0[%c0, %c0_0] : memref<648x64xf32, #tpu.memory_space<vmem>>, vector<648x64xf32>
    %c0_1 = arith.constant 0 : index
    %c0_2 = arith.constant 0 : index
    %1 = vector.load %arg1[%c0_1, %c0_2] : memref<64x128xf32, #tpu.memory_space<vmem>>, vector<64x128xf32>
    %cst = arith.constant dense<0.000000e+00> : vector<648x128xf32>
    %2 = tpu.matmul %0, %1, %cst {dimension_numbers = #tpu.dot_dimension_numbers<[1], [0], [0], [1], [0, 0, 1, 1], [], []>} : vector<648x64xf32>, vector<64x128xf32>, vector<648x128xf32> -> vector<648x128xf32>
    %cst_3 = arith.constant 0.000000e+00 : f32
    %3 = vector.broadcast %cst_3 : f32 to vector<648x128xf32>
    %4 = arith.cmpf oge, %2, %3 : vector<648x128xf32>
    %cst_4 = arith.constant 0.00999999977 : f32
    %5 = vector.broadcast %cst_4 : f32 to vector<648x128xf32>
    %6 = arith.mulf %5, %2 : vector<648x128xf32>
    %7 = arith.select %4, %2, %6 : vector<648x128xi1>, vector<648x128xf32>
    %c0_5 = arith.constant 0 : index
    %c0_6 = arith.constant 0 : index
    %8 = vector.load %arg8[%c0_5, %c0_6] : memref<648x128xf32, #tpu.memory_space<vmem>>, vector<648x128xf32>
    tpu.vector_store %arg8[%c0_5, %c0_6], %7 {strides = array<i32>} : memref<648x128xf32, #tpu.memory_space<vmem>>, vector<648x128xf32>,
    %cst_7 = arith.constant 0.000000e+00 : f32
    %9 = vector.broadcast %cst_7 : f32 to vector<142x128xf32>
    %c0_8 = arith.constant 0 : index
    %c0_9 = arith.constant 0 : index
    %10 = vector.load %arg8[%c0_8, %c0_9] : memref<648x128xf32, #tpu.memory_space<vmem>>, vector<142x128xf32>
    %c0_10 = arith.constant 0 : index
    %c0_11 = arith.constant 0 : index
    %c0_12 = arith.constant 0 : index
    %11 = vector.load %arg2[%c0_10, %c0_11, %c0_12] : memref<15x128x128xf32, #tpu.memory_space<vmem>>, vector<1x128x128xf32>
    %12 = vector.shape_cast %11 : vector<1x128x128xf32> to vector<128x128xf32>
    %cst_13 = arith.constant dense<0.000000e+00> : vector<142x128xf32>
    %13 = tpu.matmul %10, %12, %cst_13 {dimension_numbers = #tpu.dot_dimension_numbers<[1], [0], [0], [1], [0, 0, 1, 1], [], []>} : vector<142x128xf32>, vector<128x128xf32>, vector<142x128xf32> -> vector<142x128xf32>
    %14 = arith.addf %9, %13 : vector<142x128xf32>
    %c2 = arith.constant 2 : index
    %c0_14 = arith.constant 0 : index
    %15 = vector.load %arg8[%c2, %c0_14] : memref<648x128xf32, #tpu.memory_space<vmem>>, vector<142x128xf32>
    %c1 = arith.constant 1 : index
    %c0_15 = arith.constant 0 : index
    %c0_16 = arith.constant 0 : index
    %16 = vector.load %arg2[%c1, %c0_15, %c0_16] : memref<15x128x128xf32, #tpu.memory_space<vmem>>, vector<1x128x128xf32>
    %17 = vector.shape_cast %16 : vector<1x128x128xf32> to vector<128x128xf32>
    %cst_17 = arith.constant dense<0.000000e+00> : vector<142x128xf32>
    %18 = tpu.matmul %15, %17, %cst_17 {dimension_numbers = #tpu.dot_dimension_numbers<[1], [0], [0], [1], [0, 0, 1, 1], [], []>} : vector<142x128xf32>, vector<128x128xf32>, vector<142x128xf32> -> vector<142x128xf32>
    %19 = arith.addf %14, %18 : vector<142x128xf32>
    %c9 = arith.constant 9 : index
    %c0_18 = arith.constant 0 : index
    %20 = vector.load %arg8[%c9, %c0_18] : memref<648x128xf32, #tpu.memory_space<vmem>>, vector<142x128xf32>
    %c2_19 = arith.constant 2 : index
    %c0_20 = arith.constant 0 : index
    %c0_21 = arith.constant 0 : index
    %21 = vector.load %arg2[%c2_19, %c0_20, %c0_21] : memref<15x128x128xf32, #tpu.memory_space<vmem>>, vector<1x128x128xf32>
    %22 = vector.shape_cast %21 : vector<1x128x128xf32> to vector<128x128xf32>
    %cst_22 = arith.constant dense<0.000000e+00> : vector<142x128xf32>
    %23 = tpu.matmul %20, %22, %cst_22 {dimension_numbers = #tpu.dot_dimension_numbers<[1], [0], [0], [1], [0, 0, 1, 1], [], []>} : vector<142x128xf32>, vector<128x128xf32>, vector<142x128xf32> -> vector<142x128xf32>
    %24 = arith.addf %19, %23 : vector<142x128xf32>
    %c11 = arith.constant 11 : index
    %c0_23 = arith.constant 0 : index
    %25 = vector.load %arg8[%c11, %c0_23] : memref<648x128xf32, #tpu.memory_space<vmem>>, vector<142x128xf32>
    %c3 = arith.constant 3 : index
    %c0_24 = arith.constant 0 : index
    %c0_25 = arith.constant 0 : index
    %26 = vector.load %arg2[%c3, %c0_24, %c0_25] : memref<15x128x128xf32, #tpu.memory_space<vmem>>, vector<1x128x128xf32>
    %27 = vector.shape_cast %26 : vector<1x128x128xf32> to vector<128x128xf32>
    %cst_26 = arith.constant dense<0.000000e+00> : vector<142x128xf32>
    %28 = tpu.matmul %25, %27, %cst_26 {dimension_numbers = #tpu.dot_dimension_numbers<[1], [0], [0], [1], [0, 0, 1, 1], [], []>} : vector<142x128xf32>, vector<128x128xf32>, vector<142x128xf32> -> vector<142x128xf32>
    %29 = arith.addf %24, %28 : vector<142x128xf32>
    %c18 = arith.constant 18 : index
    %c0_27 = arith.constant 0 : index
    %30 = vector.load %arg8[%c18, %c0_27] : memref<648x128xf32, #tpu.memory_space<vmem>>, vector<142x128xf32>
    %c4 = arith.constant 4 : index
    %c0_28 = arith.constant 0 : index
    %c0_29 = arith.constant 0 : index
    %31 = vector.load %arg2[%c4, %c0_28, %c0_29] : memref<15x128x128xf32, #tpu.memory_space<vmem>>, vector<1x128x128xf32>
    %32 = vector.shape_cast %31 : vector<1x128x128xf32> to vector<128x128xf32>
    %cst_30 = arith.constant dense<0.000000e+00> : vector<142x128xf32>
    %33 = tpu.matmul %30, %32, %cst_30 {dimension_numbers = #tpu.dot_dimension_numbers<[1], [0], [0], [1], [0, 0, 1, 1], [], []>} : vector<142x128xf32>, vector<128x128xf32>, vector<142x128xf32> -> vector<142x128xf32>
    %34 = arith.addf %29, %33 : vector<142x128xf32>
    %c20 = arith.constant 20 : index
    %c0_31 = arith.constant 0 : index
    %35 = vector.load %arg8[%c20, %c0_31] : memref<648x128xf32, #tpu.memory_space<vmem>>, vector<142x128xf32>
    %c5 = arith.constant 5 : index
    %c0_32 = arith.constant 0 : index
    %c0_33 = arith.constant 0 : index
    %36 = vector.load %arg2[%c5, %c0_32, %c0_33] : memref<15x128x128xf32, #tpu.memory_space<vmem>>, vector<1x128x128xf32>
    %37 = vector.shape_cast %36 : vector<1x128x128xf32> to vector<128x128xf32>
    %cst_34 = arith.constant dense<0.000000e+00> : vector<142x128xf32>
    %38 = tpu.matmul %35, %37, %cst_34 {dimension_numbers = #tpu.dot_dimension_numbers<[1], [0], [0], [1], [0, 0, 1, 1], [], []>} : vector<142x128xf32>, vector<128x128xf32>, vector<142x128xf32> -> vector<142x128xf32>
    %39 = arith.addf %34, %38 : vector<142x128xf32>
    %c162 = arith.constant 162 : index
    %c0_35 = arith.constant 0 : index
    %40 = vector.load %arg8[%c162, %c0_35] : memref<648x128xf32, #tpu.memory_space<vmem>>, vector<142x128xf32>
    %c6 = arith.constant 6 : index
    %c0_36 = arith.constant 0 : index
    %c0_37 = arith.constant 0 : index
    %41 = vector.load %arg2[%c6, %c0_36, %c0_37] : memref<15x128x128xf32, #tpu.memory_space<vmem>>, vector<1x128x128xf32>
    %42 = vector.shape_cast %41 : vector<1x128x128xf32> to vector<128x128xf32>
    %cst_38 = arith.constant dense<0.000000e+00> : vector<142x128xf32>
    %43 = tpu.matmul %40, %42, %cst_38 {dimension_numbers = #tpu.dot_dimension_numbers<[1], [0], [0], [1], [0, 0, 1, 1], [], []>} : vector<142x128xf32>, vector<128x128xf32>, vector<142x128xf32> -> vector<142x128xf32>
    %44 = arith.addf %39, %43 : vector<142x128xf32>
    %c171 = arith.constant 171 : index
    %c0_39 = arith.constant 0 : index
    %45 = vector.load %arg8[%c171, %c0_39] : memref<648x128xf32, #tpu.memory_space<vmem>>, vector<142x128xf32>
    %c7 = arith.constant 7 : index
    %c0_40 = arith.constant 0 : index
    %c0_41 = arith.constant 0 : index
    %46 = vector.load %arg2[%c7, %c0_40, %c0_41] : memref<15x128x128xf32, #tpu.memory_space<vmem>>, vector<1x128x128xf32>
    %47 = vector.shape_cast %46 : vector<1x128x128xf32> to vector<128x128xf32>
    %cst_42 = arith.constant dense<0.000000e+00> : vector<142x128xf32>
    %48 = tpu.matmul %45, %47, %cst_42 {dimension_numbers = #tpu.dot_dimension_numbers<[1], [0], [0], [1], [0, 0, 1, 1], [], []>} : vector<142x128xf32>, vector<128x128xf32>, vector<142x128xf32> -> vector<142x128xf32>
    %49 = arith.addf %44, %48 : vector<142x128xf32>
    %c180 = arith.constant 180 : index
    %c0_43 = arith.constant 0 : index
    %50 = vector.load %arg8[%c180, %c0_43] : memref<648x128xf32, #tpu.memory_space<vmem>>, vector<142x128xf32>
    %c8 = arith.constant 8 : index
    %c0_44 = arith.constant 0 : index
    %c0_45 = arith.constant 0 : index
    %51 = vector.load %arg2[%c8, %c0_44, %c0_45] : memref<15x128x128xf32, #tpu.memory_space<vmem>>, vector<1x128x128xf32>
    %52 = vector.shape_cast %51 : vector<1x128x128xf32> to vector<128x128xf32>
    %cst_46 = arith.constant dense<0.000000e+00> : vector<142x128xf32>
    %53 = tpu.matmul %50, %52, %cst_46 {dimension_numbers = #tpu.dot_dimension_numbers<[1], [0], [0], [1], [0, 0, 1, 1], [], []>} : vector<142x128xf32>, vector<128x128xf32>, vector<142x128xf32> -> vector<142x128xf32>
    %54 = arith.addf %49, %53 : vector<142x128xf32>
    %c324 = arith.constant 324 : index
    %c0_47 = arith.constant 0 : index
    %55 = vector.load %arg8[%c324, %c0_47] : memref<648x128xf32, #tpu.memory_space<vmem>>, vector<142x128xf32>
    %c9_48 = arith.constant 9 : index
    %c0_49 = arith.constant 0 : index
    %c0_50 = arith.constant 0 : index
    %56 = vector.load %arg2[%c9_48, %c0_49, %c0_50] : memref<15x128x128xf32, #tpu.memory_space<vmem>>, vector<1x128x128xf32>
    %57 = vector.shape_cast %56 : vector<1x128x128xf32> to vector<128x128xf32>
    %cst_51 = arith.constant dense<0.000000e+00> : vector<142x128xf32>
    %58 = tpu.matmul %55, %57, %cst_51 {dimension_numbers = #tpu.dot_dimension_numbers<[1], [0], [0], [1], [0, 0, 1, 1], [], []>} : vector<142x128xf32>, vector<128x128xf32>, vector<142x128xf32> -> vector<142x128xf32>
    %59 = arith.addf %54, %58 : vector<142x128xf32>
    %c326 = arith.constant 326 : index
    %c0_52 = arith.constant 0 : index
    %60 = vector.load %arg8[%c326, %c0_52] : memref<648x128xf32, #tpu.memory_space<vmem>>, vector<142x128xf32>
    %c10 = arith.constant 10 : index
    %c0_53 = arith.constant 0 : index
    %c0_54 = arith.constant 0 : index
    %61 = vector.load %arg2[%c10, %c0_53, %c0_54] : memref<15x128x128xf32, #tpu.memory_space<vmem>>, vector<1x128x128xf32>
    %62 = vector.shape_cast %61 : vector<1x128x128xf32> to vector<128x128xf32>
    %cst_55 = arith.constant dense<0.000000e+00> : vector<142x128xf32>
    %63 = tpu.matmul %60, %62, %cst_55 {dimension_numbers = #tpu.dot_dimension_numbers<[1], [0], [0], [1], [0, 0, 1, 1], [], []>} : vector<142x128xf32>, vector<128x128xf32>, vector<142x128xf32> -> vector<142x128xf32>
    %64 = arith.addf %59, %63 : vector<142x128xf32>
    %c333 = arith.constant 333 : index
    %c0_56 = arith.constant 0 : index
    %65 = vector.load %arg8[%c333, %c0_56] : memref<648x128xf32, #tpu.memory_space<vmem>>, vector<142x128xf32>
    %c11_57 = arith.constant 11 : index
    %c0_58 = arith.constant 0 : index
    %c0_59 = arith.constant 0 : index
    %66 = vector.load %arg2[%c11_57, %c0_58, %c0_59] : memref<15x128x128xf32, #tpu.memory_space<vmem>>, vector<1x128x128xf32>
    %67 = vector.shape_cast %66 : vector<1x128x128xf32> to vector<128x128xf32>
    %cst_60 = arith.constant dense<0.000000e+00> : vector<142x128xf32>
    %68 = tpu.matmul %65, %67, %cst_60 {dimension_numbers = #tpu.dot_dimension_numbers<[1], [0], [0], [1], [0, 0, 1, 1], [], []>} : vector<142x128xf32>, vector<128x128xf32>, vector<142x128xf32> -> vector<142x128xf32>
    %69 = arith.addf %64, %68 : vector<142x128xf32>
    %c335 = arith.constant 335 : index
    %c0_61 = arith.constant 0 : index
    %70 = vector.load %arg8[%c335, %c0_61] : memref<648x128xf32, #tpu.memory_space<vmem>>, vector<142x128xf32>
    %c12 = arith.constant 12 : index
    %c0_62 = arith.constant 0 : index
    %c0_63 = arith.constant 0 : index
    %71 = vector.load %arg2[%c12, %c0_62, %c0_63] : memref<15x128x128xf32, #tpu.memory_space<vmem>>, vector<1x128x128xf32>
    %72 = vector.shape_cast %71 : vector<1x128x128xf32> to vector<128x128xf32>
    %cst_64 = arith.constant dense<0.000000e+00> : vector<142x128xf32>
    %73 = tpu.matmul %70, %72, %cst_64 {dimension_numbers = #tpu.dot_dimension_numbers<[1], [0], [0], [1], [0, 0, 1, 1], [], []>} : vector<142x128xf32>, vector<128x128xf32>, vector<142x128xf32> -> vector<142x128xf32>
    %74 = arith.addf %69, %73 : vector<142x128xf32>
    %c486 = arith.constant 486 : index
    %c0_65 = arith.constant 0 : index
    %75 = vector.load %arg8[%c486, %c0_65] : memref<648x128xf32, #tpu.memory_space<vmem>>, vector<142x128xf32>
    %c13 = arith.constant 13 : index
    %c0_66 = arith.constant 0 : index
    %c0_67 = arith.constant 0 : index
    %76 = vector.load %arg2[%c13, %c0_66, %c0_67] : memref<15x128x128xf32, #tpu.memory_space<vmem>>, vector<1x128x128xf32>
    %77 = vector.shape_cast %76 : vector<1x128x128xf32> to vector<128x128xf32>
    %cst_68 = arith.constant dense<0.000000e+00> : vector<142x128xf32>
    %78 = tpu.matmul %75, %77, %cst_68 {dimension_numbers = #tpu.dot_dimension_numbers<[1], [0], [0], [1], [0, 0, 1, 1], [], []>} : vector<142x128xf32>, vector<128x128xf32>, vector<142x128xf32> -> vector<142x128xf32>
    %79 = arith.addf %74, %78 : vector<142x128xf32>
    %c495 = arith.constant 495 : index
    %c0_69 = arith.constant 0 : index
    %80 = vector.load %arg8[%c495, %c0_69] : memref<648x128xf32, #tpu.memory_space<vmem>>, vector<142x128xf32>
    %c14 = arith.constant 14 : index
    %c0_70 = arith.constant 0 : index
    %c0_71 = arith.constant 0 : index
    %81 = vector.load %arg2[%c14, %c0_70, %c0_71] : memref<15x128x128xf32, #tpu.memory_space<vmem>>, vector<1x128x128xf32>
    %82 = vector.shape_cast %81 : vector<1x128x128xf32> to vector<128x128xf32>
    %cst_72 = arith.constant dense<0.000000e+00> : vector<142x128xf32>
    %83 = tpu.matmul %80, %82, %cst_72 {dimension_numbers = #tpu.dot_dimension_numbers<[1], [0], [0], [1], [0, 0, 1, 1], [], []>} : vector<142x128xf32>, vector<128x128xf32>, vector<142x128xf32> -> vector<142x128xf32>
    %84 = arith.addf %79, %83 : vector<142x128xf32>
    %c0_73 = arith.constant 0 : index
    %c0_74 = arith.constant 0 : index
    %85 = vector.load %arg3[%c0_73, %c0_74] : memref<1x128xf32, #tpu.memory_space<vmem>>, vector<1x128xf32>
    %86 = vector.broadcast %85 : vector<1x128xf32> to vector<142x128xf32>
    %87 = arith.addf %84, %86 : vector<142x128xf32>
    %cst_75 = arith.constant 0.000000e+00 : f32
    %88 = vector.broadcast %cst_75 : f32 to vector<142x128xf32>
    %89 = arith.cmpf oge, %87, %88 : vector<142x128xf32>
    %cst_76 = arith.constant 0.00999999977 : f32
    %90 = vector.broadcast %cst_76 : f32 to vector<142x128xf32>
    %91 = arith.mulf %90, %87 : vector<142x128xf32>
    %92 = arith.select %89, %87, %91 : vector<142x128xi1>, vector<142x128xf32>
    %c0_77 = arith.constant 0 : index
    %c0_78 = arith.constant 0 : index
    %93 = vector.load %arg4[%c0_77, %c0_78] : memref<142x128xf32, #tpu.memory_space<vmem>>, vector<142x128xf32>
    %94 = arith.mulf %92, %93 : vector<142x128xf32>
    %cst_79 = arith.constant dense<0.000000e+00> : vector<128xf32>
    %95 = vector.multi_reduction <add>, %94, %cst_79 [0] : vector<142x128xf32> to vector<128xf32>
    %96 = vector.shape_cast %95 : vector<128xf32> to vector<1x128xf32>
    %c0_80 = arith.constant 0 : index
    %c0_81 = arith.constant 0 : index
    %97 = vector.load %arg5[%c0_80, %c0_81] : memref<142x128xf32, #tpu.memory_space<vmem>>, vector<142x128xf32>
    %98 = arith.mulf %92, %97 : vector<142x128xf32>
    %cst_82 = arith.constant dense<0.000000e+00> : vector<128xf32>
    %99 = vector.multi_reduction <add>, %98, %cst_82 [0] : vector<142x128xf32> to vector<128xf32>
    %100 = vector.shape_cast %99 : vector<128xf32> to vector<1x128xf32>
    %101 = tpu.concatenate %96, %100 in 0 : vector<1x128xf32>, vector<1x128xf32> -> vector<2x128xf32>
    %cst_83 = arith.constant dense<0.000000e+00> : vector<2xf32>
    %102 = vector.multi_reduction <add>, %101, %cst_83 [1] : vector<2x128xf32> to vector<2xf32>
    %103 = vector.shape_cast %102 : vector<2xf32> to vector<2x1xf32>
    %c0_84 = arith.constant 0 : index
    %c0_85 = arith.constant 0 : index
    %104 = vector.load %arg6[%c0_84, %c0_85] : memref<1x1xf32, #tpu.memory_space<vmem>>, vector<1x1xf32>
    %105 = vector.broadcast %104 : vector<1x1xf32> to vector<2x1xf32>
    %106 = arith.addf %103, %105 : vector<2x1xf32>
    %107 = arith.negf %106 : vector<2x1xf32>
    %108 = math.exp %107 : vector<2x1xf32>
    %cst_86 = arith.constant 1.000000e+00 : f32
    %109 = vector.broadcast %cst_86 : f32 to vector<2x1xf32>
    %110 = arith.addf %109, %108 : vector<2x1xf32>
    %111 = arith.divf %109, %110 : vector<2x1xf32>
    %c0_87 = arith.constant 0 : index
    %c0_88 = arith.constant 0 : index
    %112 = vector.load %arg7[%c0_87, %c0_88] : memref<2x1xf32, #tpu.memory_space<vmem>>, vector<2x1xf32>
    tpu.vector_store %arg7[%c0_87, %c0_88], %111 {strides = array<i32>} : memref<2x1xf32, #tpu.memory_space<vmem>>, vector<2x1xf32>,
    return
  }
}

</mosaic_0001>

<llo_original>
// kernel: discriminator_forward.1
$region0: #{discriminator_forward.1}
  #allocation0 [shape = 'u32[]', space=smem, size = 0x4, offset = 0x4, fixed_abs, tag = 'smem constant byte address 0x4 - core index']
  #allocation1 [shape = 'u32[144,128]{1,0:T(1,128)}', space=vmem, size = 0x12000, scoped, tag = 'internal scratch']
  #allocation2 [shape = 'f32[648,128]{1,0:T(8,128)}', space=vmem, size = 0x51000, scoped, tag = 'scratch operand']
  #allocation3 [shape = 'f32[1,1]{1,0:T(1,128)S(1)}', space=vmem, size = 0x200, scoped, tag = 'scoped memory for discriminator_forward.1']
  %s0 = inlined_call_operand.vmem [shape: f32[648,64], index: 0, kind: input, shape index: {}]
  %s1 = inlined_call_operand.vmem [shape: f32[64,128], index: 1, kind: input, shape index: {}]
  %s2 = inlined_call_operand.vmem [shape: f32[15,128,128], index: 2, kind: input, shape index: {}]
  %s3 = inlined_call_operand.vmem [shape: f32[1,128], index: 3, kind: input, shape index: {}]
  %s4 = inlined_call_operand.vmem [shape: f32[142,128], index: 4, kind: input, shape index: {}]
  %s5 = inlined_call_operand.vmem [shape: f32[142,128], index: 5, kind: input, shape index: {}]
  %s6 = inlined_call_operand.<no memory space> [shape: f32[1,1], index: 6, kind: input, shape index: {}]
  %s7 = inlined_call_operand.vmem [shape: f32[2,1], index: 7, kind: output, shape index: {}]
  %s8 = sld [smem:[#allocation0]]
  $region38: #{discriminator_forward.1} parent=0
    _
  %s10 = ssub.s32 1, %s8
  %s11 = scalar_select 0, %s10, %s8
  %v12 = vstv %s6
  %13 = vst [vmem:[#allocation3] sm:$0x1] %v12
  // Predicated region
  $region2: #{discriminator_forward.1} parent=0 // pred_check
    _
  $region3: #{discriminator_forward.1} parent=0 // pred_check_branch
    %15 = sbr.rel (0) target = $region5
  $region4: #{discriminator_forward.1} parent=0 // pred_region
    _
  $region5: #{discriminator_forward.1} parent=0 // pred_fallthru
    _
  // Predicated region
  $region6: #{discriminator_forward.1} parent=0 // pred_check
    _
  $region7: #{discriminator_forward.1} parent=0 // pred_check_branch
    %17 = sbr.rel (0) target = $region9
  $region8: #{discriminator_forward.1} parent=0 // pred_region
    _
  $region9: #{discriminator_forward.1} parent=0 // pred_fallthru
    _
  // Predicated region
  $region10: #{discriminator_forward.1} parent=0 // pred_check
    _
  $region11: #{discriminator_forward.1} parent=0 // pred_check_branch
    %19 = sbr.rel (0) target = $region13
  $region12: #{discriminator_forward.1} parent=0 // pred_region
    _
  $region13: #{discriminator_forward.1} parent=0 // pred_fallthru
    _
  // Predicated region
  $region14: #{discriminator_forward.1} parent=0 // pred_check
    _
  $region15: #{discriminator_forward.1} parent=0 // pred_check_branch
    %21 = sbr.rel (0) target = $region17
  $region16: #{discriminator_forward.1} parent=0 // pred_region
    _
  $region17: #{discriminator_forward.1} parent=0 // pred_fallthru
    _
  // Predicated region
  $region18: #{discriminator_forward.1} parent=0 // pred_check
    _
  $region19: #{discriminator_forward.1} parent=0 // pred_check_branch
    %23 = sbr.rel (0) target = $region21
  $region20: #{discriminator_forward.1} parent=0 // pred_region
    _
  $region21: #{discriminator_forward.1} parent=0 // pred_fallthru
    _
  // Predicated region
  $region22: #{discriminator_forward.1} parent=0 // pred_check
    _
  $region23: #{discriminator_forward.1} parent=0 // pred_check_branch
    %25 = sbr.rel (0) target = $region25
  $region24: #{discriminator_forward.1} parent=0 // pred_region
    _
  $region25: #{discriminator_forward.1} parent=0 // pred_fallthru
    _
  // Predicated region
  $region26: #{discriminator_forward.1} parent=0 // pred_check
    _
  $region27: #{discriminator_forward.1} parent=0 // pred_check_branch
    %27 = sbr.rel (0) target = $region29
  $region28: #{discriminator_forward.1} parent=0 // pred_region
    _
  $region29: #{discriminator_forward.1} parent=0 // pred_fallthru
    _
  %v28 = vld [vmem:[%s0] sm:$0xff]
  %v29 = vld [vmem:[%s0 + $0x8] sm:$0xff]
  %v30 = vld [vmem:[%s0 + $0x10] sm:$0xff]
  %v31 = vld [vmem:[%s0 + $0x18] sm:$0xff]
  %v32 = vld [vmem:[%s0 + $0x20] sm:$0xff]
  %v33 = vld [vmem:[%s0 + $0x28] sm:$0xff]
  %v34 = vld [vmem:[%s0 + $0x30] sm:$0xff]
  %v35 = vld [vmem:[%s0 + $0x38] sm:$0xff]
  %v36 = vld [vmem:[%s0 + $0x40] sm:$0xff]
  %v37 = vld [vmem:[%s0 + $0x48] sm:$0xff]
  %v38 = vld [vmem:[%s0 + $0x50] sm:$0xff]
  %v39 = vld [vmem:[%s0 + $0x58] sm:$0xff]
  %v40 = vld [vmem:[%s0 + $0x60] sm:$0xff]
  %v41 = vld [vmem:[%s0 + $0x68] sm:$0xff]
  %v42 = vld [vmem:[%s0 + $0x70] sm:$0xff]
  %v43 = vld [vmem:[%s0 + $0x78] sm:$0xff]
  %v44 = vld [vmem:[%s0 + $0x80] sm:$0xff]
  %v45 = vld [vmem:[%s0 + $0x88] sm:$0xff]
  %v46 = vld [vmem:[%s0 + $0x90] sm:$0xff]
  %v47 = vld [vmem:[%s0 + $0x98] sm:$0xff]
  %v48 = vld [vmem:[%s0 + $0xa0] sm:$0xff]
  %v49 = vld [vmem:[%s0 + $0xa8] sm:$0xff]
  %v50 = vld [vmem:[%s0 + $0xb0] sm:$0xff]
  %v51 = vld [vmem:[%s0 + $0xb8] sm:$0xff]
  %v52 = vld [vmem:[%s0 + $0xc0] sm:$0xff]
  %v53 = vld [vmem:[%s0 + $0xc8] sm:$0xff]
  %v54 = vld [vmem:[%s0 + $0xd0] sm:$0xff]
  %v55 = vld [vmem:[%s0 + $0xd8] sm:$0xff]
  %v56 = vld [vmem:[%s0 + $0xe0] sm:$0xff]
  %v57 = vld [vmem:[%s0 + $0xe8] sm:$0xff]
  %v58 = vld [vmem:[%s0 + $0xf0] sm:$0xff]
  %v59 = vld [vmem:[%s0 + $0xf8] sm:$0xff]
  %v60 = vld [vmem:[%s0 + $0x100] sm:$0xff]
  %v61 = vld [vmem:[%s0 + $0x108] sm:$0xff]
  %v62 = vld [vmem:[%s0 + $0x110] sm:$0xff]
  %v63 = vld [vmem:[%s0 + $0x118] sm:$0xff]
  %v64 = vld [vmem:[%s0 + $0x120] sm:$0xff]
  %v65 = vld [vmem:[%s0 + $0x128] sm:$0xff]
  %v66 = vld [vmem:[%s0 + $0x130] sm:$0xff]
  %v67 = vld [vmem:[%s0 + $0x138] sm:$0xff]
  %v68 = vld [vmem:[%s0 + $0x140] sm:$0xff]
  %v69 = vld [vmem:[%s0 + $0x148] sm:$0xff]
  %v70 = vld [vmem:[%s0 + $0x150] sm:$0xff]
  %v71 = vld [vmem:[%s0 + $0x158] sm:$0xff]
  %v72 = vld [vmem:[%s0 + $0x160] sm:$0xff]
  %v73 = vld [vmem:[%s0 + $0x168] sm:$0xff]
  %v74 = vld [vmem:[%s0 + $0x170] sm:$0xff]
  %v75 = vld [vmem:[%s0 + $0x178] sm:$0xff]
  %v76 = vld [vmem:[%s0 + $0x180] sm:$0xff]
  %v77 = vld [vmem:[%s0 + $0x188] sm:$0xff]
  %v78 = vld [vmem:[%s0 + $0x190] sm:$0xff]
  %v79 = vld [vmem:[%s0 + $0x198] sm:$0xff]
  %v80 = vld [vmem:[%s0 + $0x1a0] sm:$0xff]
  %v81 = vld [vmem:[%s0 + $0x1a8] sm:$0xff]
  %v82 = vld [vmem:[%s0 + $0x1b0] sm:$0xff]
  %v83 = vld [vmem:[%s0 + $0x1b8] sm:$0xff]
  %v84 = vld [vmem:[%s0 + $0x1c0] sm:$0xff]
  %v85 = vld [vmem:[%s0 + $0x1c8] sm:$0xff]
  %v86 = vld [vmem:[%s0 + $0x1d0] sm:$0xff]
  %v87 = vld [vmem:[%s0 + $0x1d8] sm:$0xff]
  %v88 = vld [vmem:[%s0 + $0x1e0] sm:$0xff]
  %v89 = vld [vmem:[%s0 + $0x1e8] sm:$0xff]
  %v90 = vld [vmem:[%s0 + $0x1f0] sm:$0xff]
  %v91 = vld [vmem:[%s0 + $0x1f8] sm:$0xff]
  %v92 = vld [vmem:[%s0 + $0x200] sm:$0xff]
  %v93 = vld [vmem:[%s0 + $0x208] sm:$0xff]
  %v94 = vld [vmem:[%s0 + $0x210] sm:$0xff]
  %v95 = vld [vmem:[%s0 + $0x218] sm:$0xff]
  %v96 = vld [vmem:[%s0 + $0x220] sm:$0xff]
  %v97 = vld [vmem:[%s0 + $0x228] sm:$0xff]
  %v98 = vld [vmem:[%s0 + $0x230] sm:$0xff]
  %v99 = vld [vmem:[%s0 + $0x238] sm:$0xff]
  %v100 = vld [vmem:[%s0 + $0x240] sm:$0xff]
  %v101 = vld [vmem:[%s0 + $0x248] sm:$0xff]
  %v102 = vld [vmem:[%s0 + $0x250] sm:$0xff]
  %v103 = vld [vmem:[%s0 + $0x258] sm:$0xff]
  %v104 = vld [vmem:[%s0 + $0x260] sm:$0xff]
  %v105 = vld [vmem:[%s0 + $0x268] sm:$0xff]
  %v106 = vld [vmem:[%s0 + $0x270] sm:$0xff]
  %v107 = vld [vmem:[%s0 + $0x278] sm:$0xff]
  %v108 = vld [vmem:[%s0 + $0x280] sm:$0xff]
  %v109 = vld [vmem:[%s1] sm:$0xff]
  %v110 = vld [vmem:[%s1 + $0x8] sm:$0xff]
  %v111 = vld [vmem:[%s1 + $0x10] sm:$0xff]
  %v112 = vld [vmem:[%s1 + $0x18] sm:$0xff]
  %v113 = vld [vmem:[%s1 + $0x20] sm:$0xff]
  %v114 = vld [vmem:[%s1 + $0x28] sm:$0xff]
  %v115 = vld [vmem:[%s1 + $0x30] sm:$0xff]
  %v116 = vld [vmem:[%s1 + $0x38] sm:$0xff]
  %vm117 = vcmask 523264
  %v119 = vsel %vm117, %v28, 0
  %v122 = vsel %vm117, %v29, 0
  %v125 = vsel %vm117, %v30, 0
  %v128 = vsel %vm117, %v31, 0
  %v131 = vsel %vm117, %v32, 0
  %v134 = vsel %vm117, %v33, 0
  %v137 = vsel %vm117, %v34, 0
  %v140 = vsel %vm117, %v35, 0
  %v143 = vsel %vm117, %v36, 0
  %v146 = vsel %vm117, %v37, 0
  %v149 = vsel %vm117, %v38, 0
  %v152 = vsel %vm117, %v39, 0
  %v155 = vsel %vm117, %v40, 0
  %v158 = vsel %vm117, %v41, 0
  %v161 = vsel %vm117, %v42, 0
  %v164 = vsel %vm117, %v43, 0
  %v167 = vsel %vm117, %v44, 0
  %v170 = vsel %vm117, %v45, 0
  %v173 = vsel %vm117, %v46, 0
  %v176 = vsel %vm117, %v47, 0
  %v179 = vsel %vm117, %v48, 0
  %v182 = vsel %vm117, %v49, 0
  %v185 = vsel %vm117, %v50, 0
  %v188 = vsel %vm117, %v51, 0
  %v191 = vsel %vm117, %v52, 0
  %v194 = vsel %vm117, %v53, 0
  %v197 = vsel %vm117, %v54, 0
  %v200 = vsel %vm117, %v55, 0
  %v203 = vsel %vm117, %v56, 0
  %v206 = vsel %vm117, %v57, 0
  %v209 = vsel %vm117, %v58, 0
  %v212 = vsel %vm117, %v59, 0
  %v215 = vsel %vm117, %v60, 0
  %v218 = vsel %vm117, %v61, 0
  %v221 = vsel %vm117, %v62, 0
  %v224 = vsel %vm117, %v63, 0
  %v227 = vsel %vm117, %v64, 0
  %v230 = vsel %vm117, %v65, 0
  %v233 = vsel %vm117, %v66, 0
  %v236 = vsel %vm117, %v67, 0
  %v239 = vsel %vm117, %v68, 0
  %v242 = vsel %vm117, %v69, 0
  %v245 = vsel %vm117, %v70, 0
  %v248 = vsel %vm117, %v71, 0
  %v251 = vsel %vm117, %v72, 0
  %v254 = vsel %vm117, %v73, 0
  %v257 = vsel %vm117, %v74, 0
  %v260 = vsel %vm117, %v75, 0
  %v263 = vsel %vm117, %v76, 0
  %v266 = vsel %vm117, %v77, 0
  %v269 = vsel %vm117, %v78, 0
  %v272 = vsel %vm117, %v79, 0
  %v275 = vsel %vm117, %v80, 0
  %v278 = vsel %vm117, %v81, 0
  %v281 = vsel %vm117, %v82, 0
  %v284 = vsel %vm117, %v83, 0
  %v287 = vsel %vm117, %v84, 0
  %v290 = vsel %vm117, %v85, 0
  %v293 = vsel %vm117, %v86, 0
  %v296 = vsel %vm117, %v87, 0
  %v299 = vsel %vm117, %v88, 0
  %v302 = vsel %vm117, %v89, 0
  %v305 = vsel %vm117, %v90, 0
  %v308 = vsel %vm117, %v91, 0
  %v311 = vsel %vm117, %v92, 0
  %v314 = vsel %vm117, %v93, 0
  %v317 = vsel %vm117, %v94, 0
  %v320 = vsel %vm117, %v95, 0
  %v323 = vsel %vm117, %v96, 0
  %v326 = vsel %vm117, %v97, 0
  %v329 = vsel %vm117, %v98, 0
  %v332 = vsel %vm117, %v99, 0
  %v335 = vsel %vm117, %v100, 0
  %v338 = vsel %vm117, %v101, 0
  %v341 = vsel %vm117, %v102, 0
  %v344 = vsel %vm117, %v103, 0
  %v347 = vsel %vm117, %v104, 0
  %v350 = vsel %vm117, %v105, 0
  %v353 = vsel %vm117, %v106, 0
  %v356 = vsel %vm117, %v107, 0
  %v359 = vsel %vm117, %v108, 0
  %361 = vmatprep.subr.mxu0 0.0
  %362 = vmatpush1.msra.mxu0 %v109
  %363 = vmatprep.subr.mxu0 0.0
  %364 = vmatpush1.msra.mxu0 %v110
  %365 = vmatprep.subr.mxu0 0.0
  %366 = vmatpush1.msra.mxu0 %v111
  %367 = vmatprep.subr.mxu0 0.0
  %368 = vmatpush1.msra.mxu0 %v112
  %369 = vmatprep.subr.mxu0 0.0
  %370 = vmatpush1.msra.mxu0 %v113
  %371 = vmatprep.subr.mxu0 0.0
  %372 = vmatpush1.msra.mxu0 %v114
  %373 = vmatprep.subr.mxu0 0.0
  %374 = vmatpush1.msra.mxu0 %v115
  %375 = vmatprep.subr.mxu0 0.0
  %376 = vmatpush1.msra.mxu0 %v116
  %377 = vmatprep.subr.mxu0 0.0
  %378 = vmatpush1.msra.mxu0 0.0
  %379 = vmatprep.subr.mxu0 0.0
  %380 = vmatpush1.msra.mxu0 0.0
  %381 = vmatprep.subr.mxu0 0.0
  %382 = vmatpush1.msra.mxu0 0.0
  %383 = vmatprep.subr.mxu0 0.0
  %384 = vmatpush1.msra.mxu0 0.0
  %385 = vmatprep.subr.mxu0 0.0
  %386 = vmatpush1.msra.mxu0 0.0
  %387 = vmatprep.subr.mxu0 0.0
  %388 = vmatpush1.msra.mxu0 0.0
  %389 = vmatprep.subr.mxu0 0.0
  %390 = vmatpush1.msra.mxu0 0.0
  %391 = vmatprep.subr.mxu0 0.0
  %392 = vmatpush1.msra.mxu0 0.0
  %393 = vmatprep.subr.mxu0 0.0
  %394 = vmatpush1.msra.mxu0 0.0
  %395 = vmatprep.subr.mxu0 0.0
  %396 = vmatpush1.msra.mxu0 0.0
  %397 = vmatprep.subr.mxu0 0.0
  %398 = vmatpush1.msra.mxu0 0.0
  %399 = vmatprep.subr.mxu0 0.0
  %400 = vmatpush1.msra.mxu0 0.0
  %401 = vmatprep.subr.mxu0 0.0
  %402 = vmatpush1.msra.mxu0 0.0
  %403 = vmatprep.subr.mxu0 0.0
  %404 = vmatpush1.msra.mxu0 0.0
  %405 = vmatprep.subr.mxu0 0.0
  %406 = vmatpush1.msra.mxu0 0.0
  %407 = vmatprep.subr.mxu0 0.0
  %408 = vmatpush1.msra.mxu0 0.0
  %409 = vmatprep.subr.mxu0 0.0
  %410 = vmatpush1.msra.mxu0 0.0
  %411 = vmatprep.subr.mxu0 0.0
  %412 = vmatpush1.msra.mxu0 0.0
  %413 = vmatprep.subr.mxu0 0.0
  %414 = vmatpush1.msra.mxu0 0.0
  %415 = vmatprep.subr.mxu0 0.0
  %416 = vmatpush1.msra.mxu0 0.0
  %417 = vmatprep.subr.mxu0 0.0
  %418 = vmatpush1.msra.mxu0 0.0
  %419 = vmatprep.subr.mxu0 0.0
  %420 = vmatpush1.msra.mxu0 0.0
  %421 = vmatprep.subr.mxu0 0.0
  %422 = vmatpush1.msra.mxu0 0.0
  %423 = vmatprep.subr.mxu0 0.0
  %424 = vmatpush1.msra.mxu0 0.0
  %425 = vmatprep.mubr.f32.mxu0 0.0
  %426 = vmatmul.mubr.f32.gmra.mrb[0].mxu0 %v119
  %v427 = vpop.f32.mrb[0].mxu0
  %v428 = vadd.f32 0.0, %v427
  %v429 = vpop.f32.mrb[0].mxu0
  %430 = vmatprep.mubr.f32.mxu0 0.0
  %431 = vmatmul.mubr.f32.gmra.mrb[0].mxu0 %v122
  %v432 = vpop.f32.mrb[0].mxu0
  %v433 = vadd.f32 0.0, %v432
  %v434 = vpop.f32.mrb[0].mxu0
  %435 = vmatprep.mubr.f32.mxu0 0.0
  %436 = vmatmul.mubr.f32.gmra.mrb[0].mxu0 %v125
  %v437 = vpop.f32.mrb[0].mxu0
  %v438 = vadd.f32 0.0, %v437
  %v439 = vpop.f32.mrb[0].mxu0
  %440 = vmatprep.mubr.f32.mxu0 0.0
  %441 = vmatmul.mubr.f32.gmra.mrb[0].mxu0 %v128
  %v442 = vpop.f32.mrb[0].mxu0
  %v443 = vadd.f32 0.0, %v442
  %v444 = vpop.f32.mrb[0].mxu0
  %445 = vmatprep.mubr.f32.mxu0 0.0
  %446 = vmatmul.mubr.f32.gmra.mrb[0].mxu0 %v131
  %v447 = vpop.f32.mrb[0].mxu0
  %v448 = vadd.f32 0.0, %v447
  %v449 = vpop.f32.mrb[0].mxu0
  %450 = vmatprep.mubr.f32.mxu0 0.0
  %451 = vmatmul.mubr.f32.gmra.mrb[0].mxu0 %v134
  %v452 = vpop.f32.mrb[0].mxu0
  %v453 = vadd.f32 0.0, %v452
  %v454 = vpop.f32.mrb[0].mxu0
  %455 = vmatprep.mubr.f32.mxu0 0.0
  %456 = vmatmul.mubr.f32.gmra.mrb[0].mxu0 %v137
  %v457 = vpop.f32.mrb[0].mxu0
  %v458 = vadd.f32 0.0, %v457
  %v459 = vpop.f32.mrb[0].mxu0
  %460 = vmatprep.mubr.f32.mxu0 0.0
  %461 = vmatmul.mubr.f32.gmra.mrb[0].mxu0 %v140
  %v462 = vpop.f32.mrb[0].mxu0
  %v463 = vadd.f32 0.0, %v462
  %v464 = vpop.f32.mrb[0].mxu0
  %465 = vmatprep.mubr.f32.mxu0 0.0
  %466 = vmatmul.mubr.f32.gmra.mrb[0].mxu0 %v143
  %v467 = vpop.f32.mrb[0].mxu0
  %v468 = vadd.f32 0.0, %v467
  %v469 = vpop.f32.mrb[0].mxu0
  %470 = vmatprep.mubr.f32.mxu0 0.0
  %471 = vmatmul.mubr.f32.gmra.mrb[0].mxu0 %v146
  %v472 = vpop.f32.mrb[0].mxu0
  %v473 = vadd.f32 0.0, %v472
  %v474 = vpop.f32.mrb[0].mxu0
  %475 = vmatprep.mubr.f32.mxu0 0.0
  %476 = vmatmul.mubr.f32.gmra.mrb[0].mxu0 %v149
  %v477 = vpop.f32.mrb[0].mxu0
  %v478 = vadd.f32 0.0, %v477
  %v479 = vpop.f32.mrb[0].mxu0
  %480 = vmatprep.mubr.f32.mxu0 0.0
  %481 = vmatmul.mubr.f32.gmra.mrb[0].mxu0 %v152
  %v482 = vpop.f32.mrb[0].mxu0
  %v483 = vadd.f32 0.0, %v482
  %v484 = vpop.f32.mrb[0].mxu0
  %485 = vmatprep.mubr.f32.mxu0 0.0
  %486 = vmatmul.mubr.f32.gmra.mrb[0].mxu0 %v155
  %v487 = vpop.f32.mrb[0].mxu0
  %v488 = vadd.f32 0.0, %v487
  %v489 = vpop.f32.mrb[0].mxu0
  %490 = vmatprep.mubr.f32.mxu0 0.0
  %491 = vmatmul.mubr.f32.gmra.mrb[0].mxu0 %v158
  %v492 = vpop.f32.mrb[0].mxu0
  %v493 = vadd.f32 0.0, %v492
  %v494 = vpop.f32.mrb[0].mxu0
  %495 = vmatprep.mubr.f32.mxu0 0.0
  %496 = vmatmul.mubr.f32.gmra.mrb[0].mxu0 %v161
  %v497 = vpop.f32.mrb[0].mxu0
  %v498 = vadd.f32 0.0, %v497
  %v499 = vpop.f32.mrb[0].mxu0
  %500 = vmatprep.mubr.f32.mxu0 0.0
  %501 = vmatmul.mubr.f32.gmra.mrb[0].mxu0 %v164
  %v502 = vpop.f32.mrb[0].mxu0
  %v503 = vadd.f32 0.0, %v502
  %v504 = vpop.f32.mrb[0].mxu0
  %505 = vmatprep.mubr.f32.mxu0 0.0
  %506 = vmatmul.mubr.f32.gmra.mrb[0].mxu0 %v167
  %v507 = vpop.f32.mrb[0].mxu0
  %v508 = vadd.f32 0.0, %v507
  %v509 = vpop.f32.mrb[0].mxu0
  %510 = vmatprep.mubr.f32.mxu0 0.0
  %511 = vmatmul.mubr.f32.gmra.mrb[0].mxu0 %v170
  %v512 = vpop.f32.mrb[0].mxu0
  %v513 = vadd.f32 0.0, %v512
  %v514 = vpop.f32.mrb[0].mxu0
  %515 = vmatprep.mubr.f32.mxu0 0.0
  %516 = vmatmul.mubr.f32.gmra.mrb[0].mxu0 %v173
  %v517 = vpop.f32.mrb[0].mxu0
  %v518 = vadd.f32 0.0, %v517
  %v519 = vpop.f32.mrb[0].mxu0
  %520 = vmatprep.mubr.f32.mxu0 0.0
  %521 = vmatmul.mubr.f32.gmra.mrb[0].mxu0 %v176
  %v522 = vpop.f32.mrb[0].mxu0
  %v523 = vadd.f32 0.0, %v522
  %v524 = vpop.f32.mrb[0].mxu0
  %525 = vmatprep.mubr.f32.mxu0 0.0
  %526 = vmatmul.mubr.f32.gmra.mrb[0].mxu0 %v179
  %v527 = vpop.f32.mrb[0].mxu0
  %v528 = vadd.f32 0.0, %v527
  %v529 = vpop.f32.mrb[0].mxu0
  %530 = vmatprep.mubr.f32.mxu0 0.0
  %531 = vmatmul.mubr.f32.gmra.mrb[0].mxu0 %v182
  %v532 = vpop.f32.mrb[0].mxu0
  %v533 = vadd.f32 0.0, %v532
  %v534 = vpop.f32.mrb[0].mxu0
  %535 = vmatprep.mubr.f32.mxu0 0.0
  %536 = vmatmul.mubr.f32.gmra.mrb[0].mxu0 %v185
  %v537 = vpop.f32.mrb[0].mxu0
  %v538 = vadd.f32 0.0, %v537
  %v539 = vpop.f32.mrb[0].mxu0
  %540 = vmatprep.mubr.f32.mxu0 0.0
  %541 = vmatmul.mubr.f32.gmra.mrb[0].mxu0 %v188
  %v542 = vpop.f32.mrb[0].mxu0
  %v543 = vadd.f32 0.0, %v542
  %v544 = vpop.f32.mrb[0].mxu0
  %545 = vmatprep.mubr.f32.mxu0 0.0
  %546 = vmatmul.mubr.f32.gmra.mrb[0].mxu0 %v191
  %v547 = vpop.f32.mrb[0].mxu0
  %v548 = vadd.f32 0.0, %v547
  %v549 = vpop.f32.mrb[0].mxu0
  %550 = vmatprep.mubr.f32.mxu0 0.0
  %551 = vmatmul.mubr.f32.gmra.mrb[0].mxu0 %v194
  %v552 = vpop.f32.mrb[0].mxu0
  %v553 = vadd.f32 0.0, %v552
  %v554 = vpop.f32.mrb[0].mxu0
  %555 = vmatprep.mubr.f32.mxu0 0.0
  %556 = vmatmul.mubr.f32.gmra.mrb[0].mxu0 %v197
  %v557 = vpop.f32.mrb[0].mxu0
  %v558 = vadd.f32 0.0, %v557
  %v559 = vpop.f32.mrb[0].mxu0
  %560 = vmatprep.mubr.f32.mxu0 0.0
  %561 = vmatmul.mubr.f32.gmra.mrb[0].mxu0 %v200
  %v562 = vpop.f32.mrb[0].mxu0
  %v563 = vadd.f32 0.0, %v562
  %v564 = vpop.f32.mrb[0].mxu0
  %565 = vmatprep.mubr.f32.mxu0 0.0
  %566 = vmatmul.mubr.f32.gmra.mrb[0].mxu0 %v203
  %v567 = vpop.f32.mrb[0].mxu0
  %v568 = vadd.f32 0.0, %v567
  %v569 = vpop.f32.mrb[0].mxu0
  %570 = vmatprep.mubr.f32.mxu0 0.0
  %571 = vmatmul.mubr.f32.gmra.mrb[0].mxu0 %v206
  %v572 = vpop.f32.mrb[0].mxu0
  %v573 = vadd.f32 0.0, %v572
  %v574 = vpop.f32.mrb[0].mxu0
  %575 = vmatprep.mubr.f32.mxu0 0.0
  %576 = vmatmul.mubr.f32.gmra.mrb[0].mxu0 %v209
  %v577 = vpop.f32.mrb[0].mxu0
  %v578 = vadd.f32 0.0, %v577
  %v579 = vpop.f32.mrb[0].mxu0
  %580 = vmatprep.mubr.f32.mxu0 0.0
  %581 = vmatmul.mubr.f32.gmra.mrb[0].mxu0 %v212
  %v582 = vpop.f32.mrb[0].mxu0
  %v583 = vadd.f32 0.0, %v582
  %v584 = vpop.f32.mrb[0].mxu0
  %585 = vmatprep.mubr.f32.mxu0 0.0
  %586 = vmatmul.mubr.f32.gmra.mrb[0].mxu0 %v215
  %v587 = vpop.f32.mrb[0].mxu0
  %v588 = vadd.f32 0.0, %v587
  %v589 = vpop.f32.mrb[0].mxu0
  %590 = vmatprep.mubr.f32.mxu0 0.0
  %591 = vmatmul.mubr.f32.gmra.mrb[0].mxu0 %v218
  %v592 = vpop.f32.mrb[0].mxu0
  %v593 = vadd.f32 0.0, %v592
  %v594 = vpop.f32.mrb[0].mxu0
  %595 = vmatprep.mubr.f32.mxu0 0.0
  %596 = vmatmul.mubr.f32.gmra.mrb[0].mxu0 %v221
  %v597 = vpop.f32.mrb[0].mxu0
  %v598 = vadd.f32 0.0, %v597
  %v599 = vpop.f32.mrb[0].mxu0
  %600 = vmatprep.mubr.f32.mxu0 0.0
  %601 = vmatmul.mubr.f32.gmra.mrb[0].mxu0 %v224
  %v602 = vpop.f32.mrb[0].mxu0
  %v603 = vadd.f32 0.0, %v602
  %v604 = vpop.f32.mrb[0].mxu0
  %605 = vmatprep.mubr.f32.mxu0 0.0
  %606 = vmatmul.mubr.f32.gmra.mrb[0].mxu0 %v227
  %v607 = vpop.f32.mrb[0].mxu0
  %v608 = vadd.f32 0.0, %v607
  %v609 = vpop.f32.mrb[0].mxu0
  %610 = vmatprep.mubr.f32.mxu0 0.0
  %611 = vmatmul.mubr.f32.gmra.mrb[0].mxu0 %v230
  %v612 = vpop.f32.mrb[0].mxu0
  %v613 = vadd.f32 0.0, %v612
  %v614 = vpop.f32.mrb[0].mxu0
  %615 = vmatprep.mubr.f32.mxu0 0.0
  %616 = vmatmul.mubr.f32.gmra.mrb[0].mxu0 %v233
  %v617 = vpop.f32.mrb[0].mxu0
  %v618 = vadd.f32 0.0, %v617
  %v619 = vpop.f32.mrb[0].mxu0
  %620 = vmatprep.mubr.f32.mxu0 0.0
  %621 = vmatmul.mubr.f32.gmra.mrb[0].mxu0 %v236
  %v622 = vpop.f32.mrb[0].mxu0
  %v623 = vadd.f32 0.0, %v622
  %v624 = vpop.f32.mrb[0].mxu0
  %625 = vmatprep.mubr.f32.mxu0 0.0
  %626 = vmatmul.mubr.f32.gmra.mrb[0].mxu0 %v239
  %v627 = vpop.f32.mrb[0].mxu0
  %v628 = vadd.f32 0.0, %v627
  %v629 = vpop.f32.mrb[0].mxu0
  %630 = vmatprep.mubr.f32.mxu0 0.0
  %631 = vmatmul.mubr.f32.gmra.mrb[0].mxu0 %v242
  %v632 = vpop.f32.mrb[0].mxu0
  %v633 = vadd.f32 0.0, %v632
  %v634 = vpop.f32.mrb[0].mxu0
  %635 = vmatprep.mubr.f32.mxu0 0.0
  %636 = vmatmul.mubr.f32.gmra.mrb[0].mxu0 %v245
  %v637 = vpop.f32.mrb[0].mxu0
  %v638 = vadd.f32 0.0, %v637
  %v639 = vpop.f32.mrb[0].mxu0
  %640 = vmatprep.mubr.f32.mxu0 0.0
  %641 = vmatmul.mubr.f32.gmra.mrb[0].mxu0 %v248
  %v642 = vpop.f32.mrb[0].mxu0
  %v643 = vadd.f32 0.0, %v642
  %v644 = vpop.f32.mrb[0].mxu0
  %645 = vmatprep.mubr.f32.mxu0 0.0
  %646 = vmatmul.mubr.f32.gmra.mrb[0].mxu0 %v251
  %v647 = vpop.f32.mrb[0].mxu0
  %v648 = vadd.f32 0.0, %v647
  %v649 = vpop.f32.mrb[0].mxu0
  %650 = vmatprep.mubr.f32.mxu0 0.0
  %651 = vmatmul.mubr.f32.gmra.mrb[0].mxu0 %v254
  %v652 = vpop.f32.mrb[0].mxu0
  %v653 = vadd.f32 0.0, %v652
  %v654 = vpop.f32.mrb[0].mxu0
  %655 = vmatprep.mubr.f32.mxu0 0.0
  %656 = vmatmul.mubr.f32.gmra.mrb[0].mxu0 %v257
  %v657 = vpop.f32.mrb[0].mxu0
  %v658 = vadd.f32 0.0, %v657
  %v659 = vpop.f32.mrb[0].mxu0
  %660 = vmatprep.mubr.f32.mxu0 0.0
  %661 = vmatmul.mubr.f32.gmra.mrb[0].mxu0 %v260
  %v662 = vpop.f32.mrb[0].mxu0
  %v663 = vadd.f32 0.0, %v662
  %v664 = vpop.f32.mrb[0].mxu0
  %665 = vmatprep.mubr.f32.mxu0 0.0
  %666 = vmatmul.mubr.f32.gmra.mrb[0].mxu0 %v263
  %v667 = vpop.f32.mrb[0].mxu0
  %v668 = vadd.f32 0.0, %v667
  %v669 = vpop.f32.mrb[0].mxu0
  %670 = vmatprep.mubr.f32.mxu0 0.0
  %671 = vmatmul.mubr.f32.gmra.mrb[0].mxu0 %v266
  %v672 = vpop.f32.mrb[0].mxu0
  %v673 = vadd.f32 0.0, %v672
  %v674 = vpop.f32.mrb[0].mxu0
  %675 = vmatprep.mubr.f32.mxu0 0.0
  %676 = vmatmul.mubr.f32.gmra.mrb[0].mxu0 %v269
  %v677 = vpop.f32.mrb[0].mxu0
  %v678 = vadd.f32 0.0, %v677
  %v679 = vpop.f32.mrb[0].mxu0
  %680 = vmatprep.mubr.f32.mxu0 0.0
  %681 = vmatmul.mubr.f32.gmra.mrb[0].mxu0 %v272
  %v682 = vpop.f32.mrb[0].mxu0
  %v683 = vadd.f32 0.0, %v682
  %v684 = vpop.f32.mrb[0].mxu0
  %685 = vmatprep.mubr.f32.mxu0 0.0
  %686 = vmatmul.mubr.f32.gmra.mrb[0].mxu0 %v275
  %v687 = vpop.f32.mrb[0].mxu0
  %v688 = vadd.f32 0.0, %v687
  %v689 = vpop.f32.mrb[0].mxu0
  %690 = vmatprep.mubr.f32.mxu0 0.0
  %691 = vmatmul.mubr.f32.gmra.mrb[0].mxu0 %v278
  %v692 = vpop.f32.mrb[0].mxu0
  %v693 = vadd.f32 0.0, %v692
  %v694 = vpop.f32.mrb[0].mxu0
  %695 = vmatprep.mubr.f32.mxu0 0.0
  %696 = vmatmul.mubr.f32.gmra.mrb[0].mxu0 %v281
  %v697 = vpop.f32.mrb[0].mxu0
  %v698 = vadd.f32 0.0, %v697
  %v699 = vpop.f32.mrb[0].mxu0
  %700 = vmatprep.mubr.f32.mxu0 0.0
  %701 = vmatmul.mubr.f32.gmra.mrb[0].mxu0 %v284
  %v702 = vpop.f32.mrb[0].mxu0
  %v703 = vadd.f32 0.0, %v702
  %v704 = vpop.f32.mrb[0].mxu0
  %705 = vmatprep.mubr.f32.mxu0 0.0
  %706 = vmatmul.mubr.f32.gmra.mrb[0].mxu0 %v287
  %v707 = vpop.f32.mrb[0].mxu0
  %v708 = vadd.f32 0.0, %v707
  %v709 = vpop.f32.mrb[0].mxu0
  %710 = vmatprep.mubr.f32.mxu0 0.0
  %711 = vmatmul.mubr.f32.gmra.mrb[0].mxu0 %v290
  %v712 = vpop.f32.mrb[0].mxu0
  %v713 = vadd.f32 0.0, %v712
  %v714 = vpop.f32.mrb[0].mxu0
  %715 = vmatprep.mubr.f32.mxu0 0.0
  %716 = vmatmul.mubr.f32.gmra.mrb[0].mxu0 %v293
  %v717 = vpop.f32.mrb[0].mxu0
  %v718 = vadd.f32 0.0, %v717
  %v719 = vpop.f32.mrb[0].mxu0
  %720 = vmatprep.mubr.f32.mxu0 0.0
  %721 = vmatmul.mubr.f32.gmra.mrb[0].mxu0 %v296
  %v722 = vpop.f32.mrb[0].mxu0
  %v723 = vadd.f32 0.0, %v722
  %v724 = vpop.f32.mrb[0].mxu0
  %725 = vmatprep.mubr.f32.mxu0 0.0
  %726 = vmatmul.mubr.f32.gmra.mrb[0].mxu0 %v299
  %v727 = vpop.f32.mrb[0].mxu0
  %v728 = vadd.f32 0.0, %v727
  %v729 = vpop.f32.mrb[0].mxu0
  %730 = vmatprep.mubr.f32.mxu0 0.0
  %731 = vmatmul.mubr.f32.gmra.mrb[0].mxu0 %v302
  %v732 = vpop.f32.mrb[0].mxu0
  %v733 = vadd.f32 0.0, %v732
  %v734 = vpop.f32.mrb[0].mxu0
  %735 = vmatprep.mubr.f32.mxu0 0.0
  %736 = vmatmul.mubr.f32.gmra.mrb[0].mxu0 %v305
  %v737 = vpop.f32.mrb[0].mxu0
  %v738 = vadd.f32 0.0, %v737
  %v739 = vpop.f32.mrb[0].mxu0
  %740 = vmatprep.mubr.f32.mxu0 0.0
  %741 = vmatmul.mubr.f32.gmra.mrb[0].mxu0 %v308
  %v742 = vpop.f32.mrb[0].mxu0
  %v743 = vadd.f32 0.0, %v742
  %v744 = vpop.f32.mrb[0].mxu0
  %745 = vmatprep.mubr.f32.mxu0 0.0
  %746 = vmatmul.mubr.f32.gmra.mrb[0].mxu0 %v311
  %v747 = vpop.f32.mrb[0].mxu0
  %v748 = vadd.f32 0.0, %v747
  %v749 = vpop.f32.mrb[0].mxu0
  %750 = vmatprep.mubr.f32.mxu0 0.0
  %751 = vmatmul.mubr.f32.gmra.mrb[0].mxu0 %v314
  %v752 = vpop.f32.mrb[0].mxu0
  %v753 = vadd.f32 0.0, %v752
  %v754 = vpop.f32.mrb[0].mxu0
  %755 = vmatprep.mubr.f32.mxu0 0.0
  %756 = vmatmul.mubr.f32.gmra.mrb[0].mxu0 %v317
  %v757 = vpop.f32.mrb[0].mxu0
  %v758 = vadd.f32 0.0, %v757
  %v759 = vpop.f32.mrb[0].mxu0
  %760 = vmatprep.mubr.f32.mxu0 0.0
  %761 = vmatmul.mubr.f32.gmra.mrb[0].mxu0 %v320
  %v762 = vpop.f32.mrb[0].mxu0
  %v763 = vadd.f32 0.0, %v762
  %v764 = vpop.f32.mrb[0].mxu0
  %765 = vmatprep.mubr.f32.mxu0 0.0
  %766 = vmatmul.mubr.f32.gmra.mrb[0].mxu0 %v323
  %v767 = vpop.f32.mrb[0].mxu0
  %v768 = vadd.f32 0.0, %v767
  %v769 = vpop.f32.mrb[0].mxu0
  %770 = vmatprep.mubr.f32.mxu0 0.0
  %771 = vmatmul.mubr.f32.gmra.mrb[0].mxu0 %v326
  %v772 = vpop.f32.mrb[0].mxu0
  %v773 = vadd.f32 0.0, %v772
  %v774 = vpop.f32.mrb[0].mxu0
  %775 = vmatprep.mubr.f32.mxu0 0.0
  %776 = vmatmul.mubr.f32.gmra.mrb[0].mxu0 %v329
  %v777 = vpop.f32.mrb[0].mxu0
  %v778 = vadd.f32 0.0, %v777
  %v779 = vpop.f32.mrb[0].mxu0
  %780 = vmatprep.mubr.f32.mxu0 0.0
  %781 = vmatmul.mubr.f32.gmra.mrb[0].mxu0 %v332
  %v782 = vpop.f32.mrb[0].mxu0
  %v783 = vadd.f32 0.0, %v782
  %v784 = vpop.f32.mrb[0].mxu0
  %785 = vmatprep.mubr.f32.mxu0 0.0
  %786 = vmatmul.mubr.f32.gmra.mrb[0].mxu0 %v335
  %v787 = vpop.f32.mrb[0].mxu0
  %v788 = vadd.f32 0.0, %v787
  %v789 = vpop.f32.mrb[0].mxu0
  %790 = vmatprep.mubr.f32.mxu0 0.0
  %791 = vmatmul.mubr.f32.gmra.mrb[0].mxu0 %v338
  %v792 = vpop.f32.mrb[0].mxu0
  %v793 = vadd.f32 0.0, %v792
  %v794 = vpop.f32.mrb[0].mxu0
  %795 = vmatprep.mubr.f32.mxu0 0.0
  %796 = vmatmul.mubr.f32.gmra.mrb[0].mxu0 %v341
  %v797 = vpop.f32.mrb[0].mxu0
  %v798 = vadd.f32 0.0, %v797
  %v799 = vpop.f32.mrb[0].mxu0
  %800 = vmatprep.mubr.f32.mxu0 0.0
  %801 = vmatmul.mubr.f32.gmra.mrb[0].mxu0 %v344
  %v802 = vpop.f32.mrb[0].mxu0
  %v803 = vadd.f32 0.0, %v802
  %v804 = vpop.f32.mrb[0].mxu0
  %805 = vmatprep.mubr.f32.mxu0 0.0
  %806 = vmatmul.mubr.f32.gmra.mrb[0].mxu0 %v347
  %v807 = vpop.f32.mrb[0].mxu0
  %v808 = vadd.f32 0.0, %v807
  %v809 = vpop.f32.mrb[0].mxu0
  %810 = vmatprep.mubr.f32.mxu0 0.0
  %811 = vmatmul.mubr.f32.gmra.mrb[0].mxu0 %v350
  %v812 = vpop.f32.mrb[0].mxu0
  %v813 = vadd.f32 0.0, %v812
  %v814 = vpop.f32.mrb[0].mxu0
  %815 = vmatprep.mubr.f32.mxu0 0.0
  %816 = vmatmul.mubr.f32.gmra.mrb[0].mxu0 %v353
  %v817 = vpop.f32.mrb[0].mxu0
  %v818 = vadd.f32 0.0, %v817
  %v819 = vpop.f32.mrb[0].mxu0
  %820 = vmatprep.mubr.f32.mxu0 0.0
  %821 = vmatmul.mubr.f32.gmra.mrb[0].mxu0 %v356
  %v822 = vpop.f32.mrb[0].mxu0
  %v823 = vadd.f32 0.0, %v822
  %v824 = vpop.f32.mrb[0].mxu0
  %825 = vmatprep.mubr.f32.mxu0 0.0
  %826 = vmatmul.mubr.f32.gmra.mrb[0].mxu0 %v359
  %v827 = vpop.f32.mrb[0].mxu0
  %v828 = vadd.f32 0.0, %v827
  %v829 = vpop.f32.mrb[0].mxu0
  %830 = vdwg.mxu0
  %vm831 = vcmp.ge.f32.partialorder %v428, 0.0
  %vm832 = vcmp.ge.f32.partialorder %v433, 0.0
  %vm833 = vcmp.ge.f32.partialorder %v438, 0.0
  %vm834 = vcmp.ge.f32.partialorder %v443, 0.0
  %vm835 = vcmp.ge.f32.partialorder %v448, 0.0
  %vm836 = vcmp.ge.f32.partialorder %v453, 0.0
  %vm837 = vcmp.ge.f32.partialorder %v458, 0.0
  %vm838 = vcmp.ge.f32.partialorder %v463, 0.0
  %vm839 = vcmp.ge.f32.partialorder %v468, 0.0
  %vm840 = vcmp.ge.f32.partialorder %v473, 0.0
  %vm841 = vcmp.ge.f32.partialorder %v478, 0.0
  %vm842 = vcmp.ge.f32.partialorder %v483, 0.0
  %vm843 = vcmp.ge.f32.partialorder %v488, 0.0
  %vm844 = vcmp.ge.f32.partialorder %v493, 0.0
  %vm845 = vcmp.ge.f32.partialorder %v498, 0.0
  %vm846 = vcmp.ge.f32.partialorder %v503, 0.0
  %vm847 = vcmp.ge.f32.partialorder %v508, 0.0
  %vm848 = vcmp.ge.f32.partialorder %v513, 0.0
  %vm849 = vcmp.ge.f32.partialorder %v518, 0.0
  %vm850 = vcmp.ge.f32.partialorder %v523, 0.0
  %vm851 = vcmp.ge.f32.partialorder %v528, 0.0
  %vm852 = vcmp.ge.f32.partialorder %v533, 0.0
  %vm853 = vcmp.ge.f32.partialorder %v538, 0.0
  %vm854 = vcmp.ge.f32.partialorder %v543, 0.0
  %vm855 = vcmp.ge.f32.partialorder %v548, 0.0
  %vm856 = vcmp.ge.f32.partialorder %v553, 0.0
  %vm857 = vcmp.ge.f32.partialorder %v558, 0.0
  %vm858 = vcmp.ge.f32.partialorder %v563, 0.0
  %vm859 = vcmp.ge.f32.partialorder %v568, 0.0
  %vm860 = vcmp.ge.f32.partialorder %v573, 0.0
  %vm861 = vcmp.ge.f32.partialorder %v578, 0.0
  %vm862 = vcmp.ge.f32.partialorder %v583, 0.0
  %vm863 = vcmp.ge.f32.partialorder %v588, 0.0
  %vm864 = vcmp.ge.f32.partialorder %v593, 0.0
  %vm865 = vcmp.ge.f32.partialorder %v598, 0.0
  %vm866 = vcmp.ge.f32.partialorder %v603, 0.0
  %vm867 = vcmp.ge.f32.partialorder %v608, 0.0
  %vm868 = vcmp.ge.f32.partialorder %v613, 0.0
  %vm869 = vcmp.ge.f32.partialorder %v618, 0.0
  %vm870 = vcmp.ge.f32.partialorder %v623, 0.0
  %vm871 = vcmp.ge.f32.partialorder %v628, 0.0
  %vm872 = vcmp.ge.f32.partialorder %v633, 0.0
  %vm873 = vcmp.ge.f32.partialorder %v638, 0.0
  %vm874 = vcmp.ge.f32.partialorder %v643, 0.0
  %vm875 = vcmp.ge.f32.partialorder %v648, 0.0
  %vm876 = vcmp.ge.f32.partialorder %v653, 0.0
  %vm877 = vcmp.ge.f32.partialorder %v658, 0.0
  %vm878 = vcmp.ge.f32.partialorder %v663, 0.0
  %vm879 = vcmp.ge.f32.partialorder %v668, 0.0
  %vm880 = vcmp.ge.f32.partialorder %v673, 0.0
  %vm881 = vcmp.ge.f32.partialorder %v678, 0.0
  %vm882 = vcmp.ge.f32.partialorder %v683, 0.0
  %vm883 = vcmp.ge.f32.partialorder %v688, 0.0
  %vm884 = vcmp.ge.f32.partialorder %v693, 0.0
  %vm885 = vcmp.ge.f32.partialorder %v698, 0.0
  %vm886 = vcmp.ge.f32.partialorder %v703, 0.0
  %vm887 = vcmp.ge.f32.partialorder %v708, 0.0
  %vm888 = vcmp.ge.f32.partialorder %v713, 0.0
  %vm889 = vcmp.ge.f32.partialorder %v718, 0.0
  %vm890 = vcmp.ge.f32.partialorder %v723, 0.0
  %vm891 = vcmp.ge.f32.partialorder %v728, 0.0
  %vm892 = vcmp.ge.f32.partialorder %v733, 0.0
  %vm893 = vcmp.ge.f32.partialorder %v738, 0.0
  %vm894 = vcmp.ge.f32.partialorder %v743, 0.0
  %vm895 = vcmp.ge.f32.partialorder %v748, 0.0
  %vm896 = vcmp.ge.f32.partialorder %v753, 0.0
  %vm897 = vcmp.ge.f32.partialorder %v758, 0.0
  %vm898 = vcmp.ge.f32.partialorder %v763, 0.0
  %vm899 = vcmp.ge.f32.partialorder %v768, 0.0
  %vm900 = vcmp.ge.f32.partialorder %v773, 0.0
  %vm901 = vcmp.ge.f32.partialorder %v778, 0.0
  %vm902 = vcmp.ge.f32.partialorder %v783, 0.0
  %vm903 = vcmp.ge.f32.partialorder %v788, 0.0
  %vm904 = vcmp.ge.f32.partialorder %v793, 0.0
  %vm905 = vcmp.ge.f32.partialorder %v798, 0.0
  %vm906 = vcmp.ge.f32.partialorder %v803, 0.0
  %vm907 = vcmp.ge.f32.partialorder %v808, 0.0
  %vm908 = vcmp.ge.f32.partialorder %v813, 0.0
  %vm909 = vcmp.ge.f32.partialorder %v818, 0.0
  %vm910 = vcmp.ge.f32.partialorder %v823, 0.0
  %vm911 = vcmp.ge.f32.partialorder %v828, 0.0
  %v912 = vmul.f32 %v428, 0.01
  %v913 = vmul.f32 %v433, 0.01
  %v914 = vmul.f32 %v438, 0.01
  %v915 = vmul.f32 %v443, 0.01
  %v916 = vmul.f32 %v448, 0.01
  %v917 = vmul.f32 %v453, 0.01
  %v918 = vmul.f32 %v458, 0.01
  %v919 = vmul.f32 %v463, 0.01
  %v920 = vmul.f32 %v468, 0.01
  %v921 = vmul.f32 %v473, 0.01
  %v922 = vmul.f32 %v478, 0.01
  %v923 = vmul.f32 %v483, 0.01
  %v924 = vmul.f32 %v488, 0.01
  %v925 = vmul.f32 %v493, 0.01
  %v926 = vmul.f32 %v498, 0.01
  %v927 = vmul.f32 %v503, 0.01
  %v928 = vmul.f32 %v508, 0.01
  %v929 = vmul.f32 %v513, 0.01
  %v930 = vmul.f32 %v518, 0.01
  %v931 = vmul.f32 %v523, 0.01
  %v932 = vmul.f32 %v528, 0.01
  %v933 = vmul.f32 %v533, 0.01
  %v934 = vmul.f32 %v538, 0.01
  %v935 = vmul.f32 %v543, 0.01
  %v936 = vmul.f32 %v548, 0.01
  %v937 = vmul.f32 %v553, 0.01
  %v938 = vmul.f32 %v558, 0.01
  %v939 = vmul.f32 %v563, 0.01
  %v940 = vmul.f32 %v568, 0.01
  %v941 = vmul.f32 %v573, 0.01
  %v942 = vmul.f32 %v578, 0.01
  %v943 = vmul.f32 %v583, 0.01
  %v944 = vmul.f32 %v588, 0.01
  %v945 = vmul.f32 %v593, 0.01
  %v946 = vmul.f32 %v598, 0.01
  %v947 = vmul.f32 %v603, 0.01
  %v948 = vmul.f32 %v608, 0.01
  %v949 = vmul.f32 %v613, 0.01
  %v950 = vmul.f32 %v618, 0.01
  %v951 = vmul.f32 %v623, 0.01
  %v952 = vmul.f32 %v628, 0.01
  %v953 = vmul.f32 %v633, 0.01
  %v954 = vmul.f32 %v638, 0.01
  %v955 = vmul.f32 %v643, 0.01
  %v956 = vmul.f32 %v648, 0.01
  %v957 = vmul.f32 %v653, 0.01
  %v958 = vmul.f32 %v658, 0.01
  %v959 = vmul.f32 %v663, 0.01
  %v960 = vmul.f32 %v668, 0.01
  %v961 = vmul.f32 %v673, 0.01
  %v962 = vmul.f32 %v678, 0.01
  %v963 = vmul.f32 %v683, 0.01
  %v964 = vmul.f32 %v688, 0.01
  %v965 = vmul.f32 %v693, 0.01
  %v966 = vmul.f32 %v698, 0.01
  %v967 = vmul.f32 %v703, 0.01
  %v968 = vmul.f32 %v708, 0.01
  %v969 = vmul.f32 %v713, 0.01
  %v970 = vmul.f32 %v718, 0.01
  %v971 = vmul.f32 %v723, 0.01
  %v972 = vmul.f32 %v728, 0.01
  %v973 = vmul.f32 %v733, 0.01
  %v974 = vmul.f32 %v738, 0.01
  %v975 = vmul.f32 %v743, 0.01
  %v976 = vmul.f32 %v748, 0.01
  %v977 = vmul.f32 %v753, 0.01
  %v978 = vmul.f32 %v758, 0.01
  %v979 = vmul.f32 %v763, 0.01
  %v980 = vmul.f32 %v768, 0.01
  %v981 = vmul.f32 %v773, 0.01
  %v982 = vmul.f32 %v778, 0.01
  %v983 = vmul.f32 %v783, 0.01
  %v984 = vmul.f32 %v788, 0.01
  %v985 = vmul.f32 %v793, 0.01
  %v986 = vmul.f32 %v798, 0.01
  %v987 = vmul.f32 %v803, 0.01
  %v988 = vmul.f32 %v808, 0.01
  %v989 = vmul.f32 %v813, 0.01
  %v990 = vmul.f32 %v818, 0.01
  %v991 = vmul.f32 %v823, 0.01
  %v992 = vmul.f32 %v828, 0.01
  %v993 = vsel %vm831, %v428, %v912
  %v994 = vsel %vm832, %v433, %v913
  %v995 = vsel %vm833, %v438, %v914
  %v996 = vsel %vm834, %v443, %v915
  %v997 = vsel %vm835, %v448, %v916
  %v998 = vsel %vm836, %v453, %v917
  %v999 = vsel %vm837, %v458, %v918
  %v1000 = vsel %vm838, %v463, %v919
  %v1001 = vsel %vm839, %v468, %v920
  %v1002 = vsel %vm840, %v473, %v921
  %v1003 = vsel %vm841, %v478, %v922
  %v1004 = vsel %vm842, %v483, %v923
  %v1005 = vsel %vm843, %v488, %v924
  %v1006 = vsel %vm844, %v493, %v925
  %v1007 = vsel %vm845, %v498, %v926
  %v1008 = vsel %vm846, %v503, %v927
  %v1009 = vsel %vm847, %v508, %v928
  %v1010 = vsel %vm848, %v513, %v929
  %v1011 = vsel %vm849, %v518, %v930
  %v1012 = vsel %vm850, %v523, %v931
  %v1013 = vsel %vm851, %v528, %v932
  %v1014 = vsel %vm852, %v533, %v933
  %v1015 = vsel %vm853, %v538, %v934
  %v1016 = vsel %vm854, %v543, %v935
  %v1017 = vsel %vm855, %v548, %v936
  %v1018 = vsel %vm856, %v553, %v937
  %v1019 = vsel %vm857, %v558, %v938
  %v1020 = vsel %vm858, %v563, %v939
  %v1021 = vsel %vm859, %v568, %v940
  %v1022 = vsel %vm860, %v573, %v941
  %v1023 = vsel %vm861, %v578, %v942
  %v1024 = vsel %vm862, %v583, %v943
  %v1025 = vsel %vm863, %v588, %v944
  %v1026 = vsel %vm864, %v593, %v945
  %v1027 = vsel %vm865, %v598, %v946
  %v1028 = vsel %vm866, %v603, %v947
  %v1029 = vsel %vm867, %v608, %v948
  %v1030 = vsel %vm868, %v613, %v949
  %v1031 = vsel %vm869, %v618, %v950
  %v1032 = vsel %vm870, %v623, %v951
  %v1033 = vsel %vm871, %v628, %v952
  %v1034 = vsel %vm872, %v633, %v953
  %v1035 = vsel %vm873, %v638, %v954
  %v1036 = vsel %vm874, %v643, %v955
  %v1037 = vsel %vm875, %v648, %v956
  %v1038 = vsel %vm876, %v653, %v957
  %v1039 = vsel %vm877, %v658, %v958
  %v1040 = vsel %vm878, %v663, %v959
  %v1041 = vsel %vm879, %v668, %v960
  %v1042 = vsel %vm880, %v673, %v961
  %v1043 = vsel %vm881, %v678, %v962
  %v1044 = vsel %vm882, %v683, %v963
  %v1045 = vsel %vm883, %v688, %v964
  %v1046 = vsel %vm884, %v693, %v965
  %v1047 = vsel %vm885, %v698, %v966
  %v1048 = vsel %vm886, %v703, %v967
  %v1049 = vsel %vm887, %v708, %v968
  %v1050 = vsel %vm888, %v713, %v969
  %v1051 = vsel %vm889, %v718, %v970
  %v1052 = vsel %vm890, %v723, %v971
  %v1053 = vsel %vm891, %v728, %v972
  %v1054 = vsel %vm892, %v733, %v973
  %v1055 = vsel %vm893, %v738, %v974
  %v1056 = vsel %vm894, %v743, %v975
  %v1057 = vsel %vm895, %v748, %v976
  %v1058 = vsel %vm896, %v753, %v977
  %v1059 = vsel %vm897, %v758, %v978
  %v1060 = vsel %vm898, %v763, %v979
  %v1061 = vsel %vm899, %v768, %v980
  %v1062 = vsel %vm900, %v773, %v981
  %v1063 = vsel %vm901, %v778, %v982
  %v1064 = vsel %vm902, %v783, %v983
  %v1065 = vsel %vm903, %v788, %v984
  %v1066 = vsel %vm904, %v793, %v985
  %v1067 = vsel %vm905, %v798, %v986
  %v1068 = vsel %vm906, %v803, %v987
  %v1069 = vsel %vm907, %v808, %v988
  %v1070 = vsel %vm908, %v813, %v989
  %v1071 = vsel %vm909, %v818, %v990
  %v1072 = vsel %vm910, %v823, %v991
  %v1073 = vsel %vm911, %v828, %v992
  %1074 = vst [vmem:[#allocation2] sm:$0xff] %v993
  %1075 = vst [vmem:[#allocation2 + $0x8] sm:$0xff] %v994
  %1076 = vst [vmem:[#allocation2 + $0x10] sm:$0xff] %v995
  %1077 = vst [vmem:[#allocation2 + $0x18] sm:$0xff] %v996
  %1078 = vst [vmem:[#allocation2 + $0x20] sm:$0xff] %v997
  %1079 = vst [vmem:[#allocation2 + $0x28] sm:$0xff] %v998
  %1080 = vst [vmem:[#allocation2 + $0x30] sm:$0xff] %v999
  %1081 = vst [vmem:[#allocation2 + $0x38] sm:$0xff] %v1000
  %1082 = vst [vmem:[#allocation2 + $0x40] sm:$0xff] %v1001
  %1083 = vst [vmem:[#allocation2 + $0x48] sm:$0xff] %v1002
  %1084 = vst [vmem:[#allocation2 + $0x50] sm:$0xff] %v1003
  %1085 = vst [vmem:[#allocation2 + $0x58] sm:$0xff] %v1004
  %1086 = vst [vmem:[#allocation2 + $0x60] sm:$0xff] %v1005
  %1087 = vst [vmem:[#allocation2 + $0x68] sm:$0xff] %v1006
  %1088 = vst [vmem:[#allocation2 + $0x70] sm:$0xff] %v1007
  %1089 = vst [vmem:[#allocation2 + $0x78] sm:$0xff] %v1008
  %1090 = vst [vmem:[#allocation2 + $0x80] sm:$0xff] %v1009
  %1091 = vst [vmem:[#allocation2 + $0x88] sm:$0xff] %v1010
  %1092 = vst [vmem:[#allocation2 + $0x90] sm:$0xff] %v1011
  %1093 = vst [vmem:[#allocation2 + $0x98] sm:$0xff] %v1012
  %1094 = vst [vmem:[#allocation2 + $0xa0] sm:$0xff] %v1013
  %1095 = vst [vmem:[#allocation2 + $0xa8] sm:$0xff] %v1014
  %1096 = vst [vmem:[#allocation2 + $0xb0] sm:$0xff] %v1015
  %1097 = vst [vmem:[#allocation2 + $0xb8] sm:$0xff] %v1016
  %1098 = vst [vmem:[#allocation2 + $0xc0] sm:$0xff] %v1017
  %1099 = vst [vmem:[#allocation2 + $0xc8] sm:$0xff] %v1018
  %1100 = vst [vmem:[#allocation2 + $0xd0] sm:$0xff] %v1019
  %1101 = vst [vmem:[#allocation2 + $0xd8] sm:$0xff] %v1020
  %1102 = vst [vmem:[#allocation2 + $0xe0] sm:$0xff] %v1021
  %1103 = vst [vmem:[#allocation2 + $0xe8] sm:$0xff] %v1022
  %1104 = vst [vmem:[#allocation2 + $0xf0] sm:$0xff] %v1023
  %1105 = vst [vmem:[#allocation2 + $0xf8] sm:$0xff] %v1024
  %1106 = vst [vmem:[#allocation2 + $0x100] sm:$0xff] %v1025
  %1107 = vst [vmem:[#allocation2 + $0x108] sm:$0xff] %v1026
  %1108 = vst [vmem:[#allocation2 + $0x110] sm:$0xff] %v1027
  %1109 = vst [vmem:[#allocation2 + $0x118] sm:$0xff] %v1028
  %1110 = vst [vmem:[#allocation2 + $0x120] sm:$0xff] %v1029
  %1111 = vst [vmem:[#allocation2 + $0x128] sm:$0xff] %v1030
  %1112 = vst [vmem:[#allocation2 + $0x130] sm:$0xff] %v1031
  %1113 = vst [vmem:[#allocation2 + $0x138] sm:$0xff] %v1032
  %1114 = vst [vmem:[#allocation2 + $0x140] sm:$0xff] %v1033
  %1115 = vst [vmem:[#allocation2 + $0x148] sm:$0xff] %v1034
  %1116 = vst [vmem:[#allocation2 + $0x150] sm:$0xff] %v1035
  %1117 = vst [vmem:[#allocation2 + $0x158] sm:$0xff] %v1036
  %1118 = vst [vmem:[#allocation2 + $0x160] sm:$0xff] %v1037
  %1119 = vst [vmem:[#allocation2 + $0x168] sm:$0xff] %v1038
  %1120 = vst [vmem:[#allocation2 + $0x170] sm:$0xff] %v1039
  %1121 = vst [vmem:[#allocation2 + $0x178] sm:$0xff] %v1040
  %1122 = vst [vmem:[#allocation2 + $0x180] sm:$0xff] %v1041
  %1123 = vst [vmem:[#allocation2 + $0x188] sm:$0xff] %v1042
  %1124 = vst [vmem:[#allocation2 + $0x190] sm:$0xff] %v1043
  %1125 = vst [vmem:[#allocation2 + $0x198] sm:$0xff] %v1044
  %1126 = vst [vmem:[#allocation2 + $0x1a0] sm:$0xff] %v1045
  %1127 = vst [vmem:[#allocation2 + $0x1a8] sm:$0xff] %v1046
  %1128 = vst [vmem:[#allocation2 + $0x1b0] sm:$0xff] %v1047
  %1129 = vst [vmem:[#allocation2 + $0x1b8] sm:$0xff] %v1048
  %1130 = vst [vmem:[#allocation2 + $0x1c0] sm:$0xff] %v1049
  %1131 = vst [vmem:[#allocation2 + $0x1c8] sm:$0xff] %v1050
  %1132 = vst [vmem:[#allocation2 + $0x1d0] sm:$0xff] %v1051
  %1133 = vst [vmem:[#allocation2 + $0x1d8] sm:$0xff] %v1052
  %1134 = vst [vmem:[#allocation2 + $0x1e0] sm:$0xff] %v1053
  %1135 = vst [vmem:[#allocation2 + $0x1e8] sm:$0xff] %v1054
  %1136 = vst [vmem:[#allocation2 + $0x1f0] sm:$0xff] %v1055
  %1137 = vst [vmem:[#allocation2 + $0x1f8] sm:$0xff] %v1056
  %1138 = vst [vmem:[#allocation2 + $0x200] sm:$0xff] %v1057
  %1139 = vst [vmem:[#allocation2 + $0x208] sm:$0xff] %v1058
  %1140 = vst [vmem:[#allocation2 + $0x210] sm:$0xff] %v1059
  %1141 = vst [vmem:[#allocation2 + $0x218] sm:$0xff] %v1060
  %1142 = vst [vmem:[#allocation2 + $0x220] sm:$0xff] %v1061
  %1143 = vst [vmem:[#allocation2 + $0x228] sm:$0xff] %v1062
  %1144 = vst [vmem:[#allocation2 + $0x230] sm:$0xff] %v1063
  %1145 = vst [vmem:[#allocation2 + $0x238] sm:$0xff] %v1064
  %1146 = vst [vmem:[#allocation2 + $0x240] sm:$0xff] %v1065
  %1147 = vst [vmem:[#allocation2 + $0x248] sm:$0xff] %v1066
  %1148 = vst [vmem:[#allocation2 + $0x250] sm:$0xff] %v1067
  %1149 = vst [vmem:[#allocation2 + $0x258] sm:$0xff] %v1068
  %1150 = vst [vmem:[#allocation2 + $0x260] sm:$0xff] %v1069
  %1151 = vst [vmem:[#allocation2 + $0x268] sm:$0xff] %v1070
  %1152 = vst [vmem:[#allocation2 + $0x270] sm:$0xff] %v1071
  %1153 = vst [vmem:[#allocation2 + $0x278] sm:$0xff] %v1072
  %1154 = vst [vmem:[#allocation2 + $0x280] sm:$0xff] %v1073
  %v1155 = vld [vmem:[#allocation2] sm:$0xff]
  %v1156 = vld [vmem:[#allocation2 + $0x8] sm:$0xff]
  %v1157 = vld [vmem:[#allocation2 + $0x10] sm:$0xff]
  %v1158 = vld [vmem:[#allocation2 + $0x18] sm:$0xff]
  %v1159 = vld [vmem:[#allocation2 + $0x20] sm:$0xff]
  %v1160 = vld [vmem:[#allocation2 + $0x28] sm:$0xff]
  %v1161 = vld [vmem:[#allocation2 + $0x30] sm:$0xff]
  %v1162 = vld [vmem:[#allocation2 + $0x38] sm:$0xff]
  %v1163 = vld [vmem:[#allocation2 + $0x40] sm:$0xff]
  %v1164 = vld [vmem:[#allocation2 + $0x48] sm:$0xff]
  %v1165 = vld [vmem:[#allocation2 + $0x50] sm:$0xff]
  %v1166 = vld [vmem:[#allocation2 + $0x58] sm:$0xff]
  %v1167 = vld [vmem:[#allocation2 + $0x60] sm:$0xff]
  %v1168 = vld [vmem:[#allocation2 + $0x68] sm:$0xff]
  %v1169 = vld [vmem:[#allocation2 + $0x70] sm:$0xff]
  %v1170 = vld [vmem:[#allocation2 + $0x78] sm:$0xff]
  %v1171 = vld [vmem:[#allocation2 + $0x80] sm:$0xff]
  %v1172 = vld [vmem:[#allocation2 + $0x88] sm:$0x3f]
  %v1173 = vld [vmem:[%s2] sm:$0xff]
  %v1174 = vld [vmem:[%s2 + $0x8] sm:$0xff]
  %v1175 = vld [vmem:[%s2 + $0x10] sm:$0xff]
  %v1176 = vld [vmem:[%s2 + $0x18] sm:$0xff]
  %v1177 = vld [vmem:[%s2 + $0x20] sm:$0xff]
  %v1178 = vld [vmem:[%s2 + $0x28] sm:$0xff]
  %v1179 = vld [vmem:[%s2 + $0x30] sm:$0xff]
  %v1180 = vld [vmem:[%s2 + $0x38] sm:$0xff]
  %v1181 = vld [vmem:[%s2 + $0x40] sm:$0xff]
  %v1182 = vld [vmem:[%s2 + $0x48] sm:$0xff]
  %v1183 = vld [vmem:[%s2 + $0x50] sm:$0xff]
  %v1184 = vld [vmem:[%s2 + $0x58] sm:$0xff]
  %v1185 = vld [vmem:[%s2 + $0x60] sm:$0xff]
  %v1186 = vld [vmem:[%s2 + $0x68] sm:$0xff]
  %v1187 = vld [vmem:[%s2 + $0x70] sm:$0xff]
  %v1188 = vld [vmem:[%s2 + $0x78] sm:$0xff]
  %v1189 = vld [vmem:[#allocation2 + $0x2] sm:$0xff]
  %v1190 = vld [vmem:[#allocation2 + $0xa] sm:$0xff]
  %v1191 = vld [vmem:[#allocation2 + $0x12] sm:$0xff]
  %v1192 = vld [vmem:[#allocation2 + $0x1a] sm:$0xff]
  %v1193 = vld [vmem:[#allocation2 + $0x22] sm:$0xff]
  %v1194 = vld [vmem:[#allocation2 + $0x2a] sm:$0xff]
  %v1195 = vld [vmem:[#allocation2 + $0x32] sm:$0xff]
  %v1196 = vld [vmem:[#allocation2 + $0x3a] sm:$0xff]
  %v1197 = vld [vmem:[#allocation2 + $0x42] sm:$0xff]
  %v1198 = vld [vmem:[#allocation2 + $0x4a] sm:$0xff]
  %v1199 = vld [vmem:[#allocation2 + $0x52] sm:$0xff]
  %v1200 = vld [vmem:[#allocation2 + $0x5a] sm:$0xff]
  %v1201 = vld [vmem:[#allocation2 + $0x62] sm:$0xff]
  %v1202 = vld [vmem:[#allocation2 + $0x6a] sm:$0xff]
  %v1203 = vld [vmem:[#allocation2 + $0x72] sm:$0xff]
  %v1204 = vld [vmem:[#allocation2 + $0x7a] sm:$0xff]
  %v1205 = vld [vmem:[#allocation2 + $0x82] sm:$0xff]
  %v1206 = vld [vmem:[#allocation2 + $0x8a] sm:$0x3f]
  %s1207 = scalar_lea.vmem %s2, 128
  %v1208 = vld [vmem:[%s1207] sm:$0xff]
  %v1209 = vld [vmem:[%s1207 + $0x8] sm:$0xff]
  %v1210 = vld [vmem:[%s1207 + $0x10] sm:$0xff]
  %v1211 = vld [vmem:[%s1207 + $0x18] sm:$0xff]
  %v1212 = vld [vmem:[%s1207 + $0x20] sm:$0xff]
  %v1213 = vld [vmem:[%s1207 + $0x28] sm:$0xff]
  %v1214 = vld [vmem:[%s1207 + $0x30] sm:$0xff]
  %v1215 = vld [vmem:[%s1207 + $0x38] sm:$0xff]
  %v1216 = vld [vmem:[%s1207 + $0x40] sm:$0xff]
  %v1217 = vld [vmem:[%s1207 + $0x48] sm:$0xff]
  %v1218 = vld [vmem:[%s1207 + $0x50] sm:$0xff]
  %v1219 = vld [vmem:[%s1207 + $0x58] sm:$0xff]
  %v1220 = vld [vmem:[%s1207 + $0x60] sm:$0xff]
  %v1221 = vld [vmem:[%s1207 + $0x68] sm:$0xff]
  %v1222 = vld [vmem:[%s1207 + $0x70] sm:$0xff]
  %v1223 = vld [vmem:[%s1207 + $0x78] sm:$0xff]
  %1224 = vmatprep.subr.mxu0 0.0
  %1225 = vmatpush1.msra.mxu0 %v1208
  %1226 = vmatprep.subr.mxu0 0.0
  %1227 = vmatpush1.msra.mxu0 %v1209
  %1228 = vmatprep.subr.mxu0 0.0
  %1229 = vmatpush1.msra.mxu0 %v1210
  %1230 = vmatprep.subr.mxu0 0.0
  %1231 = vmatpush1.msra.mxu0 %v1211
  %1232 = vmatprep.subr.mxu0 0.0
  %1233 = vmatpush1.msra.mxu0 %v1212
  %1234 = vmatprep.subr.mxu0 0.0
  %1235 = vmatpush1.msra.mxu0 %v1213
  %1236 = vmatprep.subr.mxu0 0.0
  %1237 = vmatpush1.msra.mxu0 %v1214
  %1238 = vmatprep.subr.mxu0 0.0
  %1239 = vmatpush1.msra.mxu0 %v1215
  %1240 = vmatprep.subr.mxu0 0.0
  %1241 = vmatpush1.msra.mxu0 %v1216
  %1242 = vmatprep.subr.mxu0 0.0
  %1243 = vmatpush1.msra.mxu0 %v1217
  %1244 = vmatprep.subr.mxu0 0.0
  %1245 = vmatpush1.msra.mxu0 %v1218
  %1246 = vmatprep.subr.mxu0 0.0
  %1247 = vmatpush1.msra.mxu0 %v1219
  %1248 = vmatprep.subr.mxu0 0.0
  %1249 = vmatpush1.msra.mxu0 %v1220
  %1250 = vmatprep.subr.mxu0 0.0
  %1251 = vmatpush1.msra.mxu0 %v1221
  %1252 = vmatprep.subr.mxu0 0.0
  %1253 = vmatpush1.msra.mxu0 %v1222
  %1254 = vmatprep.subr.mxu0 0.0
  %1255 = vmatpush1.msra.mxu0 %v1223
  %1256 = vmatprep.subr.mxu0 0.0
  %1257 = vmatpush1.msra.mxu0 0.0
  %1258 = vmatprep.subr.mxu0 0.0
  %1259 = vmatpush1.msra.mxu0 0.0
  %1260 = vmatprep.subr.mxu0 0.0
  %1261 = vmatpush1.msra.mxu0 0.0
  %1262 = vmatprep.subr.mxu0 0.0
  %1263 = vmatpush1.msra.mxu0 0.0
  %1264 = vmatprep.subr.mxu0 0.0
  %1265 = vmatpush1.msra.mxu0 0.0
  %1266 = vmatprep.subr.mxu0 0.0
  %1267 = vmatpush1.msra.mxu0 0.0
  %1268 = vmatprep.subr.mxu0 0.0
  %1269 = vmatpush1.msra.mxu0 0.0
  %1270 = vmatprep.subr.mxu0 0.0
  %1271 = vmatpush1.msra.mxu0 0.0
  %1272 = vmatprep.subr.mxu0 0.0
  %1273 = vmatpush1.msra.mxu0 0.0
  %1274 = vmatprep.subr.mxu0 0.0
  %1275 = vmatpush1.msra.mxu0 0.0
  %1276 = vmatprep.subr.mxu0 0.0
  %1277 = vmatpush1.msra.mxu0 0.0
  %1278 = vmatprep.subr.mxu0 0.0
  %1279 = vmatpush1.msra.mxu0 0.0
  %1280 = vmatprep.subr.mxu0 0.0
  %1281 = vmatpush1.msra.mxu0 0.0
  %1282 = vmatprep.subr.mxu0 0.0
  %1283 = vmatpush1.msra.mxu0 0.0
  %1284 = vmatprep.subr.mxu0 0.0
  %1285 = vmatpush1.msra.mxu0 0.0
  %1286 = vmatprep.subr.mxu0 0.0
  %1287 = vmatpush1.msra.mxu0 0.0
  %1288 = vmatprep.mubr.f32.mxu0 0.0
  %1289 = vmatmul.mubr.f32.gmra.mrb[0].mxu0 %v1189
  %v1290 = vpop.f32.mrb[0].mxu0
  %v1291 = vadd.f32 0.0, %v1290
  %v1292 = vpop.f32.mrb[0].mxu0
  %1293 = vmatprep.mubr.f32.mxu0 0.0
  %1294 = vmatmul.mubr.f32.gmra.mrb[0].mxu0 %v1190
  %v1295 = vpop.f32.mrb[0].mxu0
  %v1296 = vadd.f32 0.0, %v1295
  %v1297 = vpop.f32.mrb[0].mxu0
  %1298 = vmatprep.mubr.f32.mxu0 0.0
  %1299 = vmatmul.mubr.f32.gmra.mrb[0].mxu0 %v1191
  %v1300 = vpop.f32.mrb[0].mxu0
  %v1301 = vadd.f32 0.0, %v1300
  %v1302 = vpop.f32.mrb[0].mxu0
  %1303 = vmatprep.mubr.f32.mxu0 0.0
  %1304 = vmatmul.mubr.f32.gmra.mrb[0].mxu0 %v1192
  %v1305 = vpop.f32.mrb[0].mxu0
  %v1306 = vadd.f32 0.0, %v1305
  %v1307 = vpop.f32.mrb[0].mxu0
  %1308 = vmatprep.mubr.f32.mxu0 0.0
  %1309 = vmatmul.mubr.f32.gmra.mrb[0].mxu0 %v1193
  %v1310 = vpop.f32.mrb[0].mxu0
  %v1311 = vadd.f32 0.0, %v1310
  %v1312 = vpop.f32.mrb[0].mxu0
  %1313 = vmatprep.mubr.f32.mxu0 0.0
  %1314 = vmatmul.mubr.f32.gmra.mrb[0].mxu0 %v1194
  %v1315 = vpop.f32.mrb[0].mxu0
  %v1316 = vadd.f32 0.0, %v1315
  %v1317 = vpop.f32.mrb[0].mxu0
  %1318 = vmatprep.mubr.f32.mxu0 0.0
  %1319 = vmatmul.mubr.f32.gmra.mrb[0].mxu0 %v1195
  %v1320 = vpop.f32.mrb[0].mxu0
  %v1321 = vadd.f32 0.0, %v1320
  %v1322 = vpop.f32.mrb[0].mxu0
  %1323 = vmatprep.mubr.f32.mxu0 0.0
  %1324 = vmatmul.mubr.f32.gmra.mrb[0].mxu0 %v1196
  %v1325 = vpop.f32.mrb[0].mxu0
  %v1326 = vadd.f32 0.0, %v1325
  %v1327 = vpop.f32.mrb[0].mxu0
  %1328 = vmatprep.mubr.f32.mxu0 0.0
  %1329 = vmatmul.mubr.f32.gmra.mrb[0].mxu0 %v1197
  %v1330 = vpop.f32.mrb[0].mxu0
  %v1331 = vadd.f32 0.0, %v1330
  %v1332 = vpop.f32.mrb[0].mxu0
  %1333 = vmatprep.mubr.f32.mxu0 0.0
  %1334 = vmatmul.mubr.f32.gmra.mrb[0].mxu0 %v1198
  %v1335 = vpop.f32.mrb[0].mxu0
  %v1336 = vadd.f32 0.0, %v1335
  %v1337 = vpop.f32.mrb[0].mxu0
  %1338 = vmatprep.mubr.f32.mxu0 0.0
  %1339 = vmatmul.mubr.f32.gmra.mrb[0].mxu0 %v1199
  %v1340 = vpop.f32.mrb[0].mxu0
  %v1341 = vadd.f32 0.0, %v1340
  %v1342 = vpop.f32.mrb[0].mxu0
  %1343 = vmatprep.mubr.f32.mxu0 0.0
  %1344 = vmatmul.mubr.f32.gmra.mrb[0].mxu0 %v1200
  %v1345 = vpop.f32.mrb[0].mxu0
  %v1346 = vadd.f32 0.0, %v1345
  %v1347 = vpop.f32.mrb[0].mxu0
  %1348 = vmatprep.mubr.f32.mxu0 0.0
  %1349 = vmatmul.mubr.f32.gmra.mrb[0].mxu0 %v1201
  %v1350 = vpop.f32.mrb[0].mxu0
  %v1351 = vadd.f32 0.0, %v1350
  %v1352 = vpop.f32.mrb[0].mxu0
  %1353 = vmatprep.mubr.f32.mxu0 0.0
  %1354 = vmatmul.mubr.f32.gmra.mrb[0].mxu0 %v1202
  %v1355 = vpop.f32.mrb[0].mxu0
  %v1356 = vadd.f32 0.0, %v1355
  %v1357 = vpop.f32.mrb[0].mxu0
  %1358 = vmatprep.mubr.f32.mxu0 0.0
  %1359 = vmatmul.mubr.f32.gmra.mrb[0].mxu0 %v1203
  %v1360 = vpop.f32.mrb[0].mxu0
  %v1361 = vadd.f32 0.0, %v1360
  %v1362 = vpop.f32.mrb[0].mxu0
  %1363 = vmatprep.mubr.f32.mxu0 0.0
  %1364 = vmatmul.mubr.f32.gmra.mrb[0].mxu0 %v1204
  %v1365 = vpop.f32.mrb[0].mxu0
  %v1366 = vadd.f32 0.0, %v1365
  %v1367 = vpop.f32.mrb[0].mxu0
  %1368 = vmatprep.mubr.f32.mxu0 0.0
  %1369 = vmatmul.mubr.f32.gmra.mrb[0].mxu0 %v1205
  %v1370 = vpop.f32.mrb[0].mxu0
  %v1371 = vadd.f32 0.0, %v1370
  %v1372 = vpop.f32.mrb[0].mxu0
  %1373 = vmatprep.mubr.f32.mxu0 0.0
  %1374 = vmatmul.mubr.f32.gmra.mrb[0].mxu0 %v1206
  %v1375 = vpop.f32.mrb[0].mxu0
  %v1376 = vadd.f32 0.0, %v1375
  %v1377 = vpop.f32.mrb[0].mxu0
  %1378 = vdwg.mxu0
  %1379 = vmatprep.subr.mxu0 0.0
  %1380 = vmatpush1.msra.mxu0 %v1173
  %1381 = vmatprep.subr.mxu0 0.0
  %1382 = vmatpush1.msra.mxu0 %v1174
  %1383 = vmatprep.subr.mxu0 0.0
  %1384 = vmatpush1.msra.mxu0 %v1175
  %1385 = vmatprep.subr.mxu0 0.0
  %1386 = vmatpush1.msra.mxu0 %v1176
  %1387 = vmatprep.subr.mxu0 0.0
  %1388 = vmatpush1.msra.mxu0 %v1177
  %1389 = vmatprep.subr.mxu0 0.0
  %1390 = vmatpush1.msra.mxu0 %v1178
  %1391 = vmatprep.subr.mxu0 0.0
  %1392 = vmatpush1.msra.mxu0 %v1179
  %1393 = vmatprep.subr.mxu0 0.0
  %1394 = vmatpush1.msra.mxu0 %v1180
  %1395 = vmatprep.subr.mxu0 0.0
  %1396 = vmatpush1.msra.mxu0 %v1181
  %1397 = vmatprep.subr.mxu0 0.0
  %1398 = vmatpush1.msra.mxu0 %v1182
  %1399 = vmatprep.subr.mxu0 0.0
  %1400 = vmatpush1.msra.mxu0 %v1183
  %1401 = vmatprep.subr.mxu0 0.0
  %1402 = vmatpush1.msra.mxu0 %v1184
  %1403 = vmatprep.subr.mxu0 0.0
  %1404 = vmatpush1.msra.mxu0 %v1185
  %1405 = vmatprep.subr.mxu0 0.0
  %1406 = vmatpush1.msra.mxu0 %v1186
  %1407 = vmatprep.subr.mxu0 0.0
  %1408 = vmatpush1.msra.mxu0 %v1187
  %1409 = vmatprep.subr.mxu0 0.0
  %1410 = vmatpush1.msra.mxu0 %v1188
  %1411 = vmatprep.subr.mxu0 0.0
  %1412 = vmatpush1.msra.mxu0 0.0
  %1413 = vmatprep.subr.mxu0 0.0
  %1414 = vmatpush1.msra.mxu0 0.0
  %1415 = vmatprep.subr.mxu0 0.0
  %1416 = vmatpush1.msra.mxu0 0.0
  %1417 = vmatprep.subr.mxu0 0.0
  %1418 = vmatpush1.msra.mxu0 0.0
  %1419 = vmatprep.subr.mxu0 0.0
  %1420 = vmatpush1.msra.mxu0 0.0
  %1421 = vmatprep.subr.mxu0 0.0
  %1422 = vmatpush1.msra.mxu0 0.0
  %1423 = vmatprep.subr.mxu0 0.0
  %1424 = vmatpush1.msra.mxu0 0.0
  %1425 = vmatprep.subr.mxu0 0.0
  %1426 = vmatpush1.msra.mxu0 0.0
  %1427 = vmatprep.subr.mxu0 0.0
  %1428 = vmatpush1.msra.mxu0 0.0
  %1429 = vmatprep.subr.mxu0 0.0
  %1430 = vmatpush1.msra.mxu0 0.0
  %1431 = vmatprep.subr.mxu0 0.0
  %1432 = vmatpush1.msra.mxu0 0.0
  %1433 = vmatprep.subr.mxu0 0.0
  %1434 = vmatpush1.msra.mxu0 0.0
  %1435 = vmatprep.subr.mxu0 0.0
  %1436 = vmatpush1.msra.mxu0 0.0
  %1437 = vmatprep.subr.mxu0 0.0
  %1438 = vmatpush1.msra.mxu0 0.0
  %1439 = vmatprep.subr.mxu0 0.0
  %1440 = vmatpush1.msra.mxu0 0.0
  %1441 = vmatprep.subr.mxu0 0.0
  %1442 = vmatpush1.msra.mxu0 0.0
  %1443 = vmatprep.mubr.f32.mxu0 0.0
  %1444 = vmatmul.mubr.f32.gmra.mrb[0].mxu0 %v1155
  %v1445 = vpop.f32.mrb[0].mxu0
  %v1446 = vadd.f32 %v1291, %v1445
  %v1447 = vpop.f32.mrb[0].mxu0
  %1448 = vmatprep.mubr.f32.mxu0 0.0
  %1449 = vmatmul.mubr.f32.gmra.mrb[0].mxu0 %v1156
  %v1450 = vpop.f32.mrb[0].mxu0
  %v1451 = vadd.f32 %v1296, %v1450
  %v1452 = vpop.f32.mrb[0].mxu0
  %1453 = vmatprep.mubr.f32.mxu0 0.0
  %1454 = vmatmul.mubr.f32.gmra.mrb[0].mxu0 %v1157
  %v1455 = vpop.f32.mrb[0].mxu0
  %v1456 = vadd.f32 %v1301, %v1455
  %v1457 = vpop.f32.mrb[0].mxu0
  %1458 = vmatprep.mubr.f32.mxu0 0.0
  %1459 = vmatmul.mubr.f32.gmra.mrb[0].mxu0 %v1158
  %v1460 = vpop.f32.mrb[0].mxu0
  %v1461 = vadd.f32 %v1306, %v1460
  %v1462 = vpop.f32.mrb[0].mxu0
  %1463 = vmatprep.mubr.f32.mxu0 0.0
  %1464 = vmatmul.mubr.f32.gmra.mrb[0].mxu0 %v1159
  %v1465 = vpop.f32.mrb[0].mxu0
  %v1466 = vadd.f32 %v1311, %v1465
  %v1467 = vpop.f32.mrb[0].mxu0
  %1468 = vmatprep.mubr.f32.mxu0 0.0
  %1469 = vmatmul.mubr.f32.gmra.mrb[0].mxu0 %v1160
  %v1470 = vpop.f32.mrb[0].mxu0
  %v1471 = vadd.f32 %v1316, %v1470
  %v1472 = vpop.f32.mrb[0].mxu0
  %1473 = vmatprep.mubr.f32.mxu0 0.0
  %1474 = vmatmul.mubr.f32.gmra.mrb[0].mxu0 %v1161
  %v1475 = vpop.f32.mrb[0].mxu0
  %v1476 = vadd.f32 %v1321, %v1475
  %v1477 = vpop.f32.mrb[0].mxu0
  %1478 = vmatprep.mubr.f32.mxu0 0.0
  %1479 = vmatmul.mubr.f32.gmra.mrb[0].mxu0 %v1162
  %v1480 = vpop.f32.mrb[0].mxu0
  %v1481 = vadd.f32 %v1326, %v1480
  %v1482 = vpop.f32.mrb[0].mxu0
  %1483 = vmatprep.mubr.f32.mxu0 0.0
  %1484 = vmatmul.mubr.f32.gmra.mrb[0].mxu0 %v1163
  %v1485 = vpop.f32.mrb[0].mxu0
  %v1486 = vadd.f32 %v1331, %v1485
  %v1487 = vpop.f32.mrb[0].mxu0
  %1488 = vmatprep.mubr.f32.mxu0 0.0
  %1489 = vmatmul.mubr.f32.gmra.mrb[0].mxu0 %v1164
  %v1490 = vpop.f32.mrb[0].mxu0
  %v1491 = vadd.f32 %v1336, %v1490
  %v1492 = vpop.f32.mrb[0].mxu0
  %1493 = vmatprep.mubr.f32.mxu0 0.0
  %1494 = vmatmul.mubr.f32.gmra.mrb[0].mxu0 %v1165
  %v1495 = vpop.f32.mrb[0].mxu0
  %v1496 = vadd.f32 %v1341, %v1495
  %v1497 = vpop.f32.mrb[0].mxu0
  %1498 = vmatprep.mubr.f32.mxu0 0.0
  %1499 = vmatmul.mubr.f32.gmra.mrb[0].mxu0 %v1166
  %v1500 = vpop.f32.mrb[0].mxu0
  %v1501 = vadd.f32 %v1346, %v1500
  %v1502 = vpop.f32.mrb[0].mxu0
  %1503 = vmatprep.mubr.f32.mxu0 0.0
  %1504 = vmatmul.mubr.f32.gmra.mrb[0].mxu0 %v1167
  %v1505 = vpop.f32.mrb[0].mxu0
  %v1506 = vadd.f32 %v1351, %v1505
  %v1507 = vpop.f32.mrb[0].mxu0
  %1508 = vmatprep.mubr.f32.mxu0 0.0
  %1509 = vmatmul.mubr.f32.gmra.mrb[0].mxu0 %v1168
  %v1510 = vpop.f32.mrb[0].mxu0
  %v1511 = vadd.f32 %v1356, %v1510
  %v1512 = vpop.f32.mrb[0].mxu0
  %1513 = vmatprep.mubr.f32.mxu0 0.0
  %1514 = vmatmul.mubr.f32.gmra.mrb[0].mxu0 %v1169
  %v1515 = vpop.f32.mrb[0].mxu0
  %v1516 = vadd.f32 %v1361, %v1515
  %v1517 = vpop.f32.mrb[0].mxu0
  %1518 = vmatprep.mubr.f32.mxu0 0.0
  %1519 = vmatmul.mubr.f32.gmra.mrb[0].mxu0 %v1170
  %v1520 = vpop.f32.mrb[0].mxu0
  %v1521 = vadd.f32 %v1366, %v1520
  %v1522 = vpop.f32.mrb[0].mxu0
  %1523 = vmatprep.mubr.f32.mxu0 0.0
  %1524 = vmatmul.mubr.f32.gmra.mrb[0].mxu0 %v1171
  %v1525 = vpop.f32.mrb[0].mxu0
  %v1526 = vadd.f32 %v1371, %v1525
  %v1527 = vpop.f32.mrb[0].mxu0
  %1528 = vmatprep.mubr.f32.mxu0 0.0
  %1529 = vmatmul.mubr.f32.gmra.mrb[0].mxu0 %v1172
  %v1530 = vpop.f32.mrb[0].mxu0
  %v1531 = vadd.f32 %v1376, %v1530
  %v1532 = vpop.f32.mrb[0].mxu0
  %1533 = vdwg.mxu0
  %v1534 = vld [vmem:[#allocation2 + $0x9] sm:$0xff]
  %v1535 = vld [vmem:[#allocation2 + $0x11] sm:$0xff]
  %v1536 = vld [vmem:[#allocation2 + $0x19] sm:$0xff]
  %v1537 = vld [vmem:[#allocation2 + $0x21] sm:$0xff]
  %v1538 = vld [vmem:[#allocation2 + $0x29] sm:$0xff]
  %v1539 = vld [vmem:[#allocation2 + $0x31] sm:$0xff]
  %v1540 = vld [vmem:[#allocation2 + $0x39] sm:$0xff]
  %v1541 = vld [vmem:[#allocation2 + $0x41] sm:$0xff]
  %v1542 = vld [vmem:[#allocation2 + $0x49] sm:$0xff]
  %v1543 = vld [vmem:[#allocation2 + $0x51] sm:$0xff]
  %v1544 = vld [vmem:[#allocation2 + $0x59] sm:$0xff]
  %v1545 = vld [vmem:[#allocation2 + $0x61] sm:$0xff]
  %v1546 = vld [vmem:[#allocation2 + $0x69] sm:$0xff]
  %v1547 = vld [vmem:[#allocation2 + $0x71] sm:$0xff]
  %v1548 = vld [vmem:[#allocation2 + $0x79] sm:$0xff]
  %v1549 = vld [vmem:[#allocation2 + $0x81] sm:$0xff]
  %v1550 = vld [vmem:[#allocation2 + $0x89] sm:$0xff]
  %v1551 = vld [vmem:[#allocation2 + $0x91] sm:$0x3f]
  %s1552 = scalar_lea.vmem %s2, 256
  %v1553 = vld [vmem:[%s1552] sm:$0xff]
  %v1554 = vld [vmem:[%s1552 + $0x8] sm:$0xff]
  %v1555 = vld [vmem:[%s1552 + $0x10] sm:$0xff]
  %v1556 = vld [vmem:[%s1552 + $0x18] sm:$0xff]
  %v1557 = vld [vmem:[%s1552 + $0x20] sm:$0xff]
  %v1558 = vld [vmem:[%s1552 + $0x28] sm:$0xff]
  %v1559 = vld [vmem:[%s1552 + $0x30] sm:$0xff]
  %v1560 = vld [vmem:[%s1552 + $0x38] sm:$0xff]
  %v1561 = vld [vmem:[%s1552 + $0x40] sm:$0xff]
  %v1562 = vld [vmem:[%s1552 + $0x48] sm:$0xff]
  %v1563 = vld [vmem:[%s1552 + $0x50] sm:$0xff]
  %v1564 = vld [vmem:[%s1552 + $0x58] sm:$0xff]
  %v1565 = vld [vmem:[%s1552 + $0x60] sm:$0xff]
  %v1566 = vld [vmem:[%s1552 + $0x68] sm:$0xff]
  %v1567 = vld [vmem:[%s1552 + $0x70] sm:$0xff]
  %v1568 = vld [vmem:[%s1552 + $0x78] sm:$0xff]
  %1569 = vmatprep.subr.mxu0 0.0
  %1570 = vmatpush1.msra.mxu0 %v1553
  %1571 = vmatprep.subr.mxu0 0.0
  %1572 = vmatpush1.msra.mxu0 %v1554
  %1573 = vmatprep.subr.mxu0 0.0
  %1574 = vmatpush1.msra.mxu0 %v1555
  %1575 = vmatprep.subr.mxu0 0.0
  %1576 = vmatpush1.msra.mxu0 %v1556
  %1577 = vmatprep.subr.mxu0 0.0
  %1578 = vmatpush1.msra.mxu0 %v1557
  %1579 = vmatprep.subr.mxu0 0.0
  %1580 = vmatpush1.msra.mxu0 %v1558
  %1581 = vmatprep.subr.mxu0 0.0
  %1582 = vmatpush1.msra.mxu0 %v1559
  %1583 = vmatprep.subr.mxu0 0.0
  %1584 = vmatpush1.msra.mxu0 %v1560
  %1585 = vmatprep.subr.mxu0 0.0
  %1586 = vmatpush1.msra.mxu0 %v1561
  %1587 = vmatprep.subr.mxu0 0.0
  %1588 = vmatpush1.msra.mxu0 %v1562
  %1589 = vmatprep.subr.mxu0 0.0
  %1590 = vmatpush1.msra.mxu0 %v1563
  %1591 = vmatprep.subr.mxu0 0.0
  %1592 = vmatpush1.msra.mxu0 %v1564
  %1593 = vmatprep.subr.mxu0 0.0
  %1594 = vmatpush1.msra.mxu0 %v1565
  %1595 = vmatprep.subr.mxu0 0.0
  %1596 = vmatpush1.msra.mxu0 %v1566
  %1597 = vmatprep.subr.mxu0 0.0
  %1598 = vmatpush1.msra.mxu0 %v1567
  %1599 = vmatprep.subr.mxu0 0.0
  %1600 = vmatpush1.msra.mxu0 %v1568
  %1601 = vmatprep.subr.mxu0 0.0
  %1602 = vmatpush1.msra.mxu0 0.0
  %1603 = vmatprep.subr.mxu0 0.0
  %1604 = vmatpush1.msra.mxu0 0.0
  %1605 = vmatprep.subr.mxu0 0.0
  %1606 = vmatpush1.msra.mxu0 0.0
  %1607 = vmatprep.subr.mxu0 0.0
  %1608 = vmatpush1.msra.mxu0 0.0
  %1609 = vmatprep.subr.mxu0 0.0
  %1610 = vmatpush1.msra.mxu0 0.0
  %1611 = vmatprep.subr.mxu0 0.0
  %1612 = vmatpush1.msra.mxu0 0.0
  %1613 = vmatprep.subr.mxu0 0.0
  %1614 = vmatpush1.msra.mxu0 0.0
  %1615 = vmatprep.subr.mxu0 0.0
  %1616 = vmatpush1.msra.mxu0 0.0
  %1617 = vmatprep.subr.mxu0 0.0
  %1618 = vmatpush1.msra.mxu0 0.0
  %1619 = vmatprep.subr.mxu0 0.0
  %1620 = vmatpush1.msra.mxu0 0.0
  %1621 = vmatprep.subr.mxu0 0.0
  %1622 = vmatpush1.msra.mxu0 0.0
  %1623 = vmatprep.subr.mxu0 0.0
  %1624 = vmatpush1.msra.mxu0 0.0
  %1625 = vmatprep.subr.mxu0 0.0
  %1626 = vmatpush1.msra.mxu0 0.0
  %1627 = vmatprep.subr.mxu0 0.0
  %1628 = vmatpush1.msra.mxu0 0.0
  %1629 = vmatprep.subr.mxu0 0.0
  %1630 = vmatpush1.msra.mxu0 0.0
  %1631 = vmatprep.subr.mxu0 0.0
  %1632 = vmatpush1.msra.mxu0 0.0
  %1633 = vmatprep.mubr.f32.mxu0 0.0
  %1634 = vmatmul.mubr.f32.gmra.mrb[0].mxu0 %v1534
  %v1635 = vpop.f32.mrb[0].mxu0
  %v1636 = vadd.f32 0.0, %v1635
  %v1637 = vpop.f32.mrb[0].mxu0
  %1638 = vmatprep.mubr.f32.mxu0 0.0
  %1639 = vmatmul.mubr.f32.gmra.mrb[0].mxu0 %v1535
  %v1640 = vpop.f32.mrb[0].mxu0
  %v1641 = vadd.f32 0.0, %v1640
  %v1642 = vpop.f32.mrb[0].mxu0
  %1643 = vmatprep.mubr.f32.mxu0 0.0
  %1644 = vmatmul.mubr.f32.gmra.mrb[0].mxu0 %v1536
  %v1645 = vpop.f32.mrb[0].mxu0
  %v1646 = vadd.f32 0.0, %v1645
  %v1647 = vpop.f32.mrb[0].mxu0
  %1648 = vmatprep.mubr.f32.mxu0 0.0
  %1649 = vmatmul.mubr.f32.gmra.mrb[0].mxu0 %v1537
  %v1650 = vpop.f32.mrb[0].mxu0
  %v1651 = vadd.f32 0.0, %v1650
  %v1652 = vpop.f32.mrb[0].mxu0
  %1653 = vmatprep.mubr.f32.mxu0 0.0
  %1654 = vmatmul.mubr.f32.gmra.mrb[0].mxu0 %v1538
  %v1655 = vpop.f32.mrb[0].mxu0
  %v1656 = vadd.f32 0.0, %v1655
  %v1657 = vpop.f32.mrb[0].mxu0
  %1658 = vmatprep.mubr.f32.mxu0 0.0
  %1659 = vmatmul.mubr.f32.gmra.mrb[0].mxu0 %v1539
  %v1660 = vpop.f32.mrb[0].mxu0
  %v1661 = vadd.f32 0.0, %v1660
  %v1662 = vpop.f32.mrb[0].mxu0
  %1663 = vmatprep.mubr.f32.mxu0 0.0
  %1664 = vmatmul.mubr.f32.gmra.mrb[0].mxu0 %v1540
  %v1665 = vpop.f32.mrb[0].mxu0
  %v1666 = vadd.f32 0.0, %v1665
  %v1667 = vpop.f32.mrb[0].mxu0
  %1668 = vmatprep.mubr.f32.mxu0 0.0
  %1669 = vmatmul.mubr.f32.gmra.mrb[0].mxu0 %v1541
  %v1670 = vpop.f32.mrb[0].mxu0
  %v1671 = vadd.f32 0.0, %v1670
  %v1672 = vpop.f32.mrb[0].mxu0
  %1673 = vmatprep.mubr.f32.mxu0 0.0
  %1674 = vmatmul.mubr.f32.gmra.mrb[0].mxu0 %v1542
  %v1675 = vpop.f32.mrb[0].mxu0
  %v1676 = vadd.f32 0.0, %v1675
  %v1677 = vpop.f32.mrb[0].mxu0
  %1678 = vmatprep.mubr.f32.mxu0 0.0
  %1679 = vmatmul.mubr.f32.gmra.mrb[0].mxu0 %v1543
  %v1680 = vpop.f32.mrb[0].mxu0
  %v1681 = vadd.f32 0.0, %v1680
  %v1682 = vpop.f32.mrb[0].mxu0
  %1683 = vmatprep.mubr.f32.mxu0 0.0
  %1684 = vmatmul.mubr.f32.gmra.mrb[0].mxu0 %v1544
  %v1685 = vpop.f32.mrb[0].mxu0
  %v1686 = vadd.f32 0.0, %v1685
  %v1687 = vpop.f32.mrb[0].mxu0
  %1688 = vmatprep.mubr.f32.mxu0 0.0
  %1689 = vmatmul.mubr.f32.gmra.mrb[0].mxu0 %v1545
  %v1690 = vpop.f32.mrb[0].mxu0
  %v1691 = vadd.f32 0.0, %v1690
  %v1692 = vpop.f32.mrb[0].mxu0
  %1693 = vmatprep.mubr.f32.mxu0 0.0
  %1694 = vmatmul.mubr.f32.gmra.mrb[0].mxu0 %v1546
  %v1695 = vpop.f32.mrb[0].mxu0
  %v1696 = vadd.f32 0.0, %v1695
  %v1697 = vpop.f32.mrb[0].mxu0
  %1698 = vmatprep.mubr.f32.mxu0 0.0
  %1699 = vmatmul.mubr.f32.gmra.mrb[0].mxu0 %v1547
  %v1700 = vpop.f32.mrb[0].mxu0
  %v1701 = vadd.f32 0.0, %v1700
  %v1702 = vpop.f32.mrb[0].mxu0
  %1703 = vmatprep.mubr.f32.mxu0 0.0
  %1704 = vmatmul.mubr.f32.gmra.mrb[0].mxu0 %v1548
  %v1705 = vpop.f32.mrb[0].mxu0
  %v1706 = vadd.f32 0.0, %v1705
  %v1707 = vpop.f32.mrb[0].mxu0
  %1708 = vmatprep.mubr.f32.mxu0 0.0
  %1709 = vmatmul.mubr.f32.gmra.mrb[0].mxu0 %v1549
  %v1710 = vpop.f32.mrb[0].mxu0
  %v1711 = vadd.f32 0.0, %v1710
  %v1712 = vpop.f32.mrb[0].mxu0
  %1713 = vmatprep.mubr.f32.mxu0 0.0
  %1714 = vmatmul.mubr.f32.gmra.mrb[0].mxu0 %v1550
  %v1715 = vpop.f32.mrb[0].mxu0
  %v1716 = vadd.f32 0.0, %v1715
  %v1717 = vpop.f32.mrb[0].mxu0
  %1718 = vmatprep.mubr.f32.mxu0 0.0
  %1719 = vmatmul.mubr.f32.gmra.mrb[0].mxu0 %v1551
  %v1720 = vpop.f32.mrb[0].mxu0
  %v1721 = vadd.f32 0.0, %v1720
  %v1722 = vpop.f32.mrb[0].mxu0
  %1723 = vdwg.mxu0
  %v1724 = vadd.f32 %v1446, %v1636
  %v1725 = vadd.f32 %v1451, %v1641
  %v1726 = vadd.f32 %v1456, %v1646
  %v1727 = vadd.f32 %v1461, %v1651
  %v1728 = vadd.f32 %v1466, %v1656
  %v1729 = vadd.f32 %v1471, %v1661
  %v1730 = vadd.f32 %v1476, %v1666
  %v1731 = vadd.f32 %v1481, %v1671
  %v1732 = vadd.f32 %v1486, %v1676
  %v1733 = vadd.f32 %v1491, %v1681
  %v1734 = vadd.f32 %v1496, %v1686
  %v1735 = vadd.f32 %v1501, %v1691
  %v1736 = vadd.f32 %v1506, %v1696
  %v1737 = vadd.f32 %v1511, %v1701
  %v1738 = vadd.f32 %v1516, %v1706
  %v1739 = vadd.f32 %v1521, %v1711
  %v1740 = vadd.f32 %v1526, %v1716
  %v1741 = vadd.f32 %v1531, %v1721
  %v1742 = vld [vmem:[#allocation2 + $0xb] sm:$0xff]
  %v1743 = vld [vmem:[#allocation2 + $0x13] sm:$0xff]
  %v1744 = vld [vmem:[#allocation2 + $0x1b] sm:$0xff]
  %v1745 = vld [vmem:[#allocation2 + $0x23] sm:$0xff]
  %v1746 = vld [vmem:[#allocation2 + $0x2b] sm:$0xff]
  %v1747 = vld [vmem:[#allocation2 + $0x33] sm:$0xff]
  %v1748 = vld [vmem:[#allocation2 + $0x3b] sm:$0xff]
  %v1749 = vld [vmem:[#allocation2 + $0x43] sm:$0xff]
  %v1750 = vld [vmem:[#allocation2 + $0x4b] sm:$0xff]
  %v1751 = vld [vmem:[#allocation2 + $0x53] sm:$0xff]
  %v1752 = vld [vmem:[#allocation2 + $0x5b] sm:$0xff]
  %v1753 = vld [vmem:[#allocation2 + $0x63] sm:$0xff]
  %v1754 = vld [vmem:[#allocation2 + $0x6b] sm:$0xff]
  %v1755 = vld [vmem:[#allocation2 + $0x73] sm:$0xff]
  %v1756 = vld [vmem:[#allocation2 + $0x7b] sm:$0xff]
  %v1757 = vld [vmem:[#allocation2 + $0x83] sm:$0xff]
  %v1758 = vld [vmem:[#allocation2 + $0x8b] sm:$0xff]
  %v1759 = vld [vmem:[#allocation2 + $0x93] sm:$0x3f]
  %s1760 = scalar_lea.vmem %s2, 384
  %v1761 = vld [vmem:[%s1760] sm:$0xff]
  %v1762 = vld [vmem:[%s1760 + $0x8] sm:$0xff]
  %v1763 = vld [vmem:[%s1760 + $0x10] sm:$0xff]
  %v1764 = vld [vmem:[%s1760 + $0x18] sm:$0xff]
  %v1765 = vld [vmem:[%s1760 + $0x20] sm:$0xff]
  %v1766 = vld [vmem:[%s1760 + $0x28] sm:$0xff]
  %v1767 = vld [vmem:[%s1760 + $0x30] sm:$0xff]
  %v1768 = vld [vmem:[%s1760 + $0x38] sm:$0xff]
  %v1769 = vld [vmem:[%s1760 + $0x40] sm:$0xff]
  %v1770 = vld [vmem:[%s1760 + $0x48] sm:$0xff]
  %v1771 = vld [vmem:[%s1760 + $0x50] sm:$0xff]
  %v1772 = vld [vmem:[%s1760 + $0x58] sm:$0xff]
  %v1773 = vld [vmem:[%s1760 + $0x60] sm:$0xff]
  %v1774 = vld [vmem:[%s1760 + $0x68] sm:$0xff]
  %v1775 = vld [vmem:[%s1760 + $0x70] sm:$0xff]
  %v1776 = vld [vmem:[%s1760 + $0x78] sm:$0xff]
  %1777 = vmatprep.subr.mxu0 0.0
  %1778 = vmatpush1.msra.mxu0 %v1761
  %1779 = vmatprep.subr.mxu0 0.0
  %1780 = vmatpush1.msra.mxu0 %v1762
  %1781 = vmatprep.subr.mxu0 0.0
  %1782 = vmatpush1.msra.mxu0 %v1763
  %1783 = vmatprep.subr.mxu0 0.0
  %1784 = vmatpush1.msra.mxu0 %v1764
  %1785 = vmatprep.subr.mxu0 0.0
  %1786 = vmatpush1.msra.mxu0 %v1765
  %1787 = vmatprep.subr.mxu0 0.0
  %1788 = vmatpush1.msra.mxu0 %v1766
  %1789 = vmatprep.subr.mxu0 0.0
  %1790 = vmatpush1.msra.mxu0 %v1767
  %1791 = vmatprep.subr.mxu0 0.0
  %1792 = vmatpush1.msra.mxu0 %v1768
  %1793 = vmatprep.subr.mxu0 0.0
  %1794 = vmatpush1.msra.mxu0 %v1769
  %1795 = vmatprep.subr.mxu0 0.0
  %1796 = vmatpush1.msra.mxu0 %v1770
  %1797 = vmatprep.subr.mxu0 0.0
  %1798 = vmatpush1.msra.mxu0 %v1771
  %1799 = vmatprep.subr.mxu0 0.0
  %1800 = vmatpush1.msra.mxu0 %v1772
  %1801 = vmatprep.subr.mxu0 0.0
  %1802 = vmatpush1.msra.mxu0 %v1773
  %1803 = vmatprep.subr.mxu0 0.0
  %1804 = vmatpush1.msra.mxu0 %v1774
  %1805 = vmatprep.subr.mxu0 0.0
  %1806 = vmatpush1.msra.mxu0 %v1775
  %1807 = vmatprep.subr.mxu0 0.0
  %1808 = vmatpush1.msra.mxu0 %v1776
  %1809 = vmatprep.subr.mxu0 0.0
  %1810 = vmatpush1.msra.mxu0 0.0
  %1811 = vmatprep.subr.mxu0 0.0
  %1812 = vmatpush1.msra.mxu0 0.0
  %1813 = vmatprep.subr.mxu0 0.0
  %1814 = vmatpush1.msra.mxu0 0.0
  %1815 = vmatprep.subr.mxu0 0.0
  %1816 = vmatpush1.msra.mxu0 0.0
  %1817 = vmatprep.subr.mxu0 0.0
  %1818 = vmatpush1.msra.mxu0 0.0
  %1819 = vmatprep.subr.mxu0 0.0
  %1820 = vmatpush1.msra.mxu0 0.0
  %1821 = vmatprep.subr.mxu0 0.0
  %1822 = vmatpush1.msra.mxu0 0.0
  %1823 = vmatprep.subr.mxu0 0.0
  %1824 = vmatpush1.msra.mxu0 0.0
  %1825 = vmatprep.subr.mxu0 0.0
  %1826 = vmatpush1.msra.mxu0 0.0
  %1827 = vmatprep.subr.mxu0 0.0
  %1828 = vmatpush1.msra.mxu0 0.0
  %1829 = vmatprep.subr.mxu0 0.0
  %1830 = vmatpush1.msra.mxu0 0.0
  %1831 = vmatprep.subr.mxu0 0.0
  %1832 = vmatpush1.msra.mxu0 0.0
  %1833 = vmatprep.subr.mxu0 0.0
  %1834 = vmatpush1.msra.mxu0 0.0
  %1835 = vmatprep.subr.mxu0 0.0
  %1836 = vmatpush1.msra.mxu0 0.0
  %1837 = vmatprep.subr.mxu0 0.0
  %1838 = vmatpush1.msra.mxu0 0.0
  %1839 = vmatprep.subr.mxu0 0.0
  %1840 = vmatpush1.msra.mxu0 0.0
  %1841 = vmatprep.mubr.f32.mxu0 0.0
  %1842 = vmatmul.mubr.f32.gmra.mrb[0].mxu0 %v1742
  %v1843 = vpop.f32.mrb[0].mxu0
  %v1844 = vadd.f32 0.0, %v1843
  %v1845 = vpop.f32.mrb[0].mxu0
  %1846 = vmatprep.mubr.f32.mxu0 0.0
  %1847 = vmatmul.mubr.f32.gmra.mrb[0].mxu0 %v1743
  %v1848 = vpop.f32.mrb[0].mxu0
  %v1849 = vadd.f32 0.0, %v1848
  %v1850 = vpop.f32.mrb[0].mxu0
  %1851 = vmatprep.mubr.f32.mxu0 0.0
  %1852 = vmatmul.mubr.f32.gmra.mrb[0].mxu0 %v1744
  %v1853 = vpop.f32.mrb[0].mxu0
  %v1854 = vadd.f32 0.0, %v1853
  %v1855 = vpop.f32.mrb[0].mxu0
  %1856 = vmatprep.mubr.f32.mxu0 0.0
  %1857 = vmatmul.mubr.f32.gmra.mrb[0].mxu0 %v1745
  %v1858 = vpop.f32.mrb[0].mxu0
  %v1859 = vadd.f32 0.0, %v1858
  %v1860 = vpop.f32.mrb[0].mxu0
  %1861 = vmatprep.mubr.f32.mxu0 0.0
  %1862 = vmatmul.mubr.f32.gmra.mrb[0].mxu0 %v1746
  %v1863 = vpop.f32.mrb[0].mxu0
  %v1864 = vadd.f32 0.0, %v1863
  %v1865 = vpop.f32.mrb[0].mxu0
  %1866 = vmatprep.mubr.f32.mxu0 0.0
  %1867 = vmatmul.mubr.f32.gmra.mrb[0].mxu0 %v1747
  %v1868 = vpop.f32.mrb[0].mxu0
  %v1869 = vadd.f32 0.0, %v1868
  %v1870 = vpop.f32.mrb[0].mxu0
  %1871 = vmatprep.mubr.f32.mxu0 0.0
  %1872 = vmatmul.mubr.f32.gmra.mrb[0].mxu0 %v1748
  %v1873 = vpop.f32.mrb[0].mxu0
  %v1874 = vadd.f32 0.0, %v1873
  %v1875 = vpop.f32.mrb[0].mxu0
  %1876 = vmatprep.mubr.f32.mxu0 0.0
  %1877 = vmatmul.mubr.f32.gmra.mrb[0].mxu0 %v1749
  %v1878 = vpop.f32.mrb[0].mxu0
  %v1879 = vadd.f32 0.0, %v1878
  %v1880 = vpop.f32.mrb[0].mxu0
  %1881 = vmatprep.mubr.f32.mxu0 0.0
  %1882 = vmatmul.mubr.f32.gmra.mrb[0].mxu0 %v1750
  %v1883 = vpop.f32.mrb[0].mxu0
  %v1884 = vadd.f32 0.0, %v1883
  %v1885 = vpop.f32.mrb[0].mxu0
  %1886 = vmatprep.mubr.f32.mxu0 0.0
  %1887 = vmatmul.mubr.f32.gmra.mrb[0].mxu0 %v1751
  %v1888 = vpop.f32.mrb[0].mxu0
  %v1889 = vadd.f32 0.0, %v1888
  %v1890 = vpop.f32.mrb[0].mxu0
  %1891 = vmatprep.mubr.f32.mxu0 0.0
  %1892 = vmatmul.mubr.f32.gmra.mrb[0].mxu0 %v1752
  %v1893 = vpop.f32.mrb[0].mxu0
  %v1894 = vadd.f32 0.0, %v1893
  %v1895 = vpop.f32.mrb[0].mxu0
  %1896 = vmatprep.mubr.f32.mxu0 0.0
  %1897 = vmatmul.mubr.f32.gmra.mrb[0].mxu0 %v1753
  %v1898 = vpop.f32.mrb[0].mxu0
  %v1899 = vadd.f32 0.0, %v1898
  %v1900 = vpop.f32.mrb[0].mxu0
  %1901 = vmatprep.mubr.f32.mxu0 0.0
  %1902 = vmatmul.mubr.f32.gmra.mrb[0].mxu0 %v1754
  %v1903 = vpop.f32.mrb[0].mxu0
  %v1904 = vadd.f32 0.0, %v1903
  %v1905 = vpop.f32.mrb[0].mxu0
  %1906 = vmatprep.mubr.f32.mxu0 0.0
  %1907 = vmatmul.mubr.f32.gmra.mrb[0].mxu0 %v1755
  %v1908 = vpop.f32.mrb[0].mxu0
  %v1909 = vadd.f32 0.0, %v1908
  %v1910 = vpop.f32.mrb[0].mxu0
  %1911 = vmatprep.mubr.f32.mxu0 0.0
  %1912 = vmatmul.mubr.f32.gmra.mrb[0].mxu0 %v1756
  %v1913 = vpop.f32.mrb[0].mxu0
  %v1914 = vadd.f32 0.0, %v1913
  %v1915 = vpop.f32.mrb[0].mxu0
  %1916 = vmatprep.mubr.f32.mxu0 0.0
  %1917 = vmatmul.mubr.f32.gmra.mrb[0].mxu0 %v1757
  %v1918 = vpop.f32.mrb[0].mxu0
  %v1919 = vadd.f32 0.0, %v1918
  %v1920 = vpop.f32.mrb[0].mxu0
  %1921 = vmatprep.mubr.f32.mxu0 0.0
  %1922 = vmatmul.mubr.f32.gmra.mrb[0].mxu0 %v1758
  %v1923 = vpop.f32.mrb[0].mxu0
  %v1924 = vadd.f32 0.0, %v1923
  %v1925 = vpop.f32.mrb[0].mxu0
  %1926 = vmatprep.mubr.f32.mxu0 0.0
  %1927 = vmatmul.mubr.f32.gmra.mrb[0].mxu0 %v1759
  %v1928 = vpop.f32.mrb[0].mxu0
  %v1929 = vadd.f32 0.0, %v1928
  %v1930 = vpop.f32.mrb[0].mxu0
  %1931 = vdwg.mxu0
  %v1932 = vadd.f32 %v1724, %v1844
  %v1933 = vadd.f32 %v1725, %v1849
  %v1934 = vadd.f32 %v1726, %v1854
  %v1935 = vadd.f32 %v1727, %v1859
  %v1936 = vadd.f32 %v1728, %v1864
  %v1937 = vadd.f32 %v1729, %v1869
  %v1938 = vadd.f32 %v1730, %v1874
  %v1939 = vadd.f32 %v1731, %v1879
  %v1940 = vadd.f32 %v1732, %v1884
  %v1941 = vadd.f32 %v1733, %v1889
  %v1942 = vadd.f32 %v1734, %v1894
  %v1943 = vadd.f32 %v1735, %v1899
  %v1944 = vadd.f32 %v1736, %v1904
  %v1945 = vadd.f32 %v1737, %v1909
  %v1946 = vadd.f32 %v1738, %v1914
  %v1947 = vadd.f32 %v1739, %v1919
  %v1948 = vadd.f32 %v1740, %v1924
  %v1949 = vadd.f32 %v1741, %v1929
  %v1950 = vld [vmem:[#allocation2 + $0x12] sm:$0xff]
  %v1951 = vld [vmem:[#allocation2 + $0x1a] sm:$0xff]
  %v1952 = vld [vmem:[#allocation2 + $0x22] sm:$0xff]
  %v1953 = vld [vmem:[#allocation2 + $0x2a] sm:$0xff]
  %v1954 = vld [vmem:[#allocation2 + $0x32] sm:$0xff]
  %v1955 = vld [vmem:[#allocation2 + $0x3a] sm:$0xff]
  %v1956 = vld [vmem:[#allocation2 + $0x42] sm:$0xff]
  %v1957 = vld [vmem:[#allocation2 + $0x4a] sm:$0xff]
  %v1958 = vld [vmem:[#allocation2 + $0x52] sm:$0xff]
  %v1959 = vld [vmem:[#allocation2 + $0x5a] sm:$0xff]
  %v1960 = vld [vmem:[#allocation2 + $0x62] sm:$0xff]
  %v1961 = vld [vmem:[#allocation2 + $0x6a] sm:$0xff]
  %v1962 = vld [vmem:[#allocation2 + $0x72] sm:$0xff]
  %v1963 = vld [vmem:[#allocation2 + $0x7a] sm:$0xff]
  %v1964 = vld [vmem:[#allocation2 + $0x82] sm:$0xff]
  %v1965 = vld [vmem:[#allocation2 + $0x8a] sm:$0xff]
  %v1966 = vld [vmem:[#allocation2 + $0x92] sm:$0xff]
  %v1967 = vld [vmem:[#allocation2 + $0x9a] sm:$0x3f]
  %s1968 = scalar_lea.vmem %s2, 512
  %v1969 = vld [vmem:[%s1968] sm:$0xff]
  %v1970 = vld [vmem:[%s1968 + $0x8] sm:$0xff]
  %v1971 = vld [vmem:[%s1968 + $0x10] sm:$0xff]
  %v1972 = vld [vmem:[%s1968 + $0x18] sm:$0xff]
  %v1973 = vld [vmem:[%s1968 + $0x20] sm:$0xff]
  %v1974 = vld [vmem:[%s1968 + $0x28] sm:$0xff]
  %v1975 = vld [vmem:[%s1968 + $0x30] sm:$0xff]
  %v1976 = vld [vmem:[%s1968 + $0x38] sm:$0xff]
  %v1977 = vld [vmem:[%s1968 + $0x40] sm:$0xff]
  %v1978 = vld [vmem:[%s1968 + $0x48] sm:$0xff]
  %v1979 = vld [vmem:[%s1968 + $0x50] sm:$0xff]
  %v1980 = vld [vmem:[%s1968 + $0x58] sm:$0xff]
  %v1981 = vld [vmem:[%s1968 + $0x60] sm:$0xff]
  %v1982 = vld [vmem:[%s1968 + $0x68] sm:$0xff]
  %v1983 = vld [vmem:[%s1968 + $0x70] sm:$0xff]
  %v1984 = vld [vmem:[%s1968 + $0x78] sm:$0xff]
  %1985 = vmatprep.subr.mxu0 0.0
  %1986 = vmatpush1.msra.mxu0 %v1969
  %1987 = vmatprep.subr.mxu0 0.0
  %1988 = vmatpush1.msra.mxu0 %v1970
  %1989 = vmatprep.subr.mxu0 0.0
  %1990 = vmatpush1.msra.mxu0 %v1971
  %1991 = vmatprep.subr.mxu0 0.0
  %1992 = vmatpush1.msra.mxu0 %v1972
  %1993 = vmatprep.subr.mxu0 0.0
  %1994 = vmatpush1.msra.mxu0 %v1973
  %1995 = vmatprep.subr.mxu0 0.0
  %1996 = vmatpush1.msra.mxu0 %v1974
  %1997 = vmatprep.subr.mxu0 0.0
  %1998 = vmatpush1.msra.mxu0 %v1975
  %1999 = vmatprep.subr.mxu0 0.0
  %2000 = vmatpush1.msra.mxu0 %v1976
  %2001 = vmatprep.subr.mxu0 0.0
  %2002 = vmatpush1.msra.mxu0 %v1977
  %2003 = vmatprep.subr.mxu0 0.0
  %2004 = vmatpush1.msra.mxu0 %v1978
  %2005 = vmatprep.subr.mxu0 0.0
  %2006 = vmatpush1.msra.mxu0 %v1979
  %2007 = vmatprep.subr.mxu0 0.0
  %2008 = vmatpush1.msra.mxu0 %v1980
  %2009 = vmatprep.subr.mxu0 0.0
  %2010 = vmatpush1.msra.mxu0 %v1981
  %2011 = vmatprep.subr.mxu0 0.0
  %2012 = vmatpush1.msra.mxu0 %v1982
  %2013 = vmatprep.subr.mxu0 0.0
  %2014 = vmatpush1.msra.mxu0 %v1983
  %2015 = vmatprep.subr.mxu0 0.0
  %2016 = vmatpush1.msra.mxu0 %v1984
  %2017 = vmatprep.subr.mxu0 0.0
  %2018 = vmatpush1.msra.mxu0 0.0
  %2019 = vmatprep.subr.mxu0 0.0
  %2020 = vmatpush1.msra.mxu0 0.0
  %2021 = vmatprep.subr.mxu0 0.0
  %2022 = vmatpush1.msra.mxu0 0.0
  %2023 = vmatprep.subr.mxu0 0.0
  %2024 = vmatpush1.msra.mxu0 0.0
  %2025 = vmatprep.subr.mxu0 0.0
  %2026 = vmatpush1.msra.mxu0 0.0
  %2027 = vmatprep.subr.mxu0 0.0
  %2028 = vmatpush1.msra.mxu0 0.0
  %2029 = vmatprep.subr.mxu0 0.0
  %2030 = vmatpush1.msra.mxu0 0.0
  %2031 = vmatprep.subr.mxu0 0.0
  %2032 = vmatpush1.msra.mxu0 0.0
  %2033 = vmatprep.subr.mxu0 0.0
  %2034 = vmatpush1.msra.mxu0 0.0
  %2035 = vmatprep.subr.mxu0 0.0
  %2036 = vmatpush1.msra.mxu0 0.0
  %2037 = vmatprep.subr.mxu0 0.0
  %2038 = vmatpush1.msra.mxu0 0.0
  %2039 = vmatprep.subr.mxu0 0.0
  %2040 = vmatpush1.msra.mxu0 0.0
  %2041 = vmatprep.subr.mxu0 0.0
  %2042 = vmatpush1.msra.mxu0 0.0
  %2043 = vmatprep.subr.mxu0 0.0
  %2044 = vmatpush1.msra.mxu0 0.0
  %2045 = vmatprep.subr.mxu0 0.0
  %2046 = vmatpush1.msra.mxu0 0.0
  %2047 = vmatprep.subr.mxu0 0.0
  %2048 = vmatpush1.msra.mxu0 0.0
  %2049 = vmatprep.mubr.f32.mxu0 0.0
  %2050 = vmatmul.mubr.f32.gmra.mrb[0].mxu0 %v1950
  %v2051 = vpop.f32.mrb[0].mxu0
  %v2052 = vadd.f32 0.0, %v2051
  %v2053 = vpop.f32.mrb[0].mxu0
  %2054 = vmatprep.mubr.f32.mxu0 0.0
  %2055 = vmatmul.mubr.f32.gmra.mrb[0].mxu0 %v1951
  %v2056 = vpop.f32.mrb[0].mxu0
  %v2057 = vadd.f32 0.0, %v2056
  %v2058 = vpop.f32.mrb[0].mxu0
  %2059 = vmatprep.mubr.f32.mxu0 0.0
  %2060 = vmatmul.mubr.f32.gmra.mrb[0].mxu0 %v1952
  %v2061 = vpop.f32.mrb[0].mxu0
  %v2062 = vadd.f32 0.0, %v2061
  %v2063 = vpop.f32.mrb[0].mxu0
  %2064 = vmatprep.mubr.f32.mxu0 0.0
  %2065 = vmatmul.mubr.f32.gmra.mrb[0].mxu0 %v1953
  %v2066 = vpop.f32.mrb[0].mxu0
  %v2067 = vadd.f32 0.0, %v2066
  %v2068 = vpop.f32.mrb[0].mxu0
  %2069 = vmatprep.mubr.f32.mxu0 0.0
  %2070 = vmatmul.mubr.f32.gmra.mrb[0].mxu0 %v1954
  %v2071 = vpop.f32.mrb[0].mxu0
  %v2072 = vadd.f32 0.0, %v2071
  %v2073 = vpop.f32.mrb[0].mxu0
  %2074 = vmatprep.mubr.f32.mxu0 0.0
  %2075 = vmatmul.mubr.f32.gmra.mrb[0].mxu0 %v1955
  %v2076 = vpop.f32.mrb[0].mxu0
  %v2077 = vadd.f32 0.0, %v2076
  %v2078 = vpop.f32.mrb[0].mxu0
  %2079 = vmatprep.mubr.f32.mxu0 0.0
  %2080 = vmatmul.mubr.f32.gmra.mrb[0].mxu0 %v1956
  %v2081 = vpop.f32.mrb[0].mxu0
  %v2082 = vadd.f32 0.0, %v2081
  %v2083 = vpop.f32.mrb[0].mxu0
  %2084 = vmatprep.mubr.f32.mxu0 0.0
  %2085 = vmatmul.mubr.f32.gmra.mrb[0].mxu0 %v1957
  %v2086 = vpop.f32.mrb[0].mxu0
  %v2087 = vadd.f32 0.0, %v2086
  %v2088 = vpop.f32.mrb[0].mxu0
  %2089 = vmatprep.mubr.f32.mxu0 0.0
  %2090 = vmatmul.mubr.f32.gmra.mrb[0].mxu0 %v1958
  %v2091 = vpop.f32.mrb[0].mxu0
  %v2092 = vadd.f32 0.0, %v2091
  %v2093 = vpop.f32.mrb[0].mxu0
  %2094 = vmatprep.mubr.f32.mxu0 0.0
  %2095 = vmatmul.mubr.f32.gmra.mrb[0].mxu0 %v1959
  %v2096 = vpop.f32.mrb[0].mxu0
  %v2097 = vadd.f32 0.0, %v2096
  %v2098 = vpop.f32.mrb[0].mxu0
  %2099 = vmatprep.mubr.f32.mxu0 0.0
  %2100 = vmatmul.mubr.f32.gmra.mrb[0].mxu0 %v1960
  %v2101 = vpop.f32.mrb[0].mxu0
  %v2102 = vadd.f32 0.0, %v2101
  %v2103 = vpop.f32.mrb[0].mxu0
  %2104 = vmatprep.mubr.f32.mxu0 0.0
  %2105 = vmatmul.mubr.f32.gmra.mrb[0].mxu0 %v1961
  %v2106 = vpop.f32.mrb[0].mxu0
  %v2107 = vadd.f32 0.0, %v2106
  %v2108 = vpop.f32.mrb[0].mxu0
  %2109 = vmatprep.mubr.f32.mxu0 0.0
  %2110 = vmatmul.mubr.f32.gmra.mrb[0].mxu0 %v1962
  %v2111 = vpop.f32.mrb[0].mxu0
  %v2112 = vadd.f32 0.0, %v2111
  %v2113 = vpop.f32.mrb[0].mxu0
  %2114 = vmatprep.mubr.f32.mxu0 0.0
  %2115 = vmatmul.mubr.f32.gmra.mrb[0].mxu0 %v1963
  %v2116 = vpop.f32.mrb[0].mxu0
  %v2117 = vadd.f32 0.0, %v2116
  %v2118 = vpop.f32.mrb[0].mxu0
  %2119 = vmatprep.mubr.f32.mxu0 0.0
  %2120 = vmatmul.mubr.f32.gmra.mrb[0].mxu0 %v1964
  %v2121 = vpop.f32.mrb[0].mxu0
  %v2122 = vadd.f32 0.0, %v2121
  %v2123 = vpop.f32.mrb[0].mxu0
  %2124 = vmatprep.mubr.f32.mxu0 0.0
  %2125 = vmatmul.mubr.f32.gmra.mrb[0].mxu0 %v1965
  %v2126 = vpop.f32.mrb[0].mxu0
  %v2127 = vadd.f32 0.0, %v2126
  %v2128 = vpop.f32.mrb[0].mxu0
  %2129 = vmatprep.mubr.f32.mxu0 0.0
  %2130 = vmatmul.mubr.f32.gmra.mrb[0].mxu0 %v1966
  %v2131 = vpop.f32.mrb[0].mxu0
  %v2132 = vadd.f32 0.0, %v2131
  %v2133 = vpop.f32.mrb[0].mxu0
  %2134 = vmatprep.mubr.f32.mxu0 0.0
  %2135 = vmatmul.mubr.f32.gmra.mrb[0].mxu0 %v1967
  %v2136 = vpop.f32.mrb[0].mxu0
  %v2137 = vadd.f32 0.0, %v2136
  %v2138 = vpop.f32.mrb[0].mxu0
  %2139 = vdwg.mxu0
  %v2140 = vadd.f32 %v1932, %v2052
  %v2141 = vadd.f32 %v1933, %v2057
  %v2142 = vadd.f32 %v1934, %v2062
  %v2143 = vadd.f32 %v1935, %v2067
  %v2144 = vadd.f32 %v1936, %v2072
  %v2145 = vadd.f32 %v1937, %v2077
  %v2146 = vadd.f32 %v1938, %v2082
  %v2147 = vadd.f32 %v1939, %v2087
  %v2148 = vadd.f32 %v1940, %v2092
  %v2149 = vadd.f32 %v1941, %v2097
  %v2150 = vadd.f32 %v1942, %v2102
  %v2151 = vadd.f32 %v1943, %v2107
  %v2152 = vadd.f32 %v1944, %v2112
  %v2153 = vadd.f32 %v1945, %v2117
  %v2154 = vadd.f32 %v1946, %v2122
  %v2155 = vadd.f32 %v1947, %v2127
  %v2156 = vadd.f32 %v1948, %v2132
  %v2157 = vadd.f32 %v1949, %v2137
  %v2158 = vld [vmem:[#allocation2 + $0x14] sm:$0xff]
  %v2159 = vld [vmem:[#allocation2 + $0x1c] sm:$0xff]
  %v2160 = vld [vmem:[#allocation2 + $0x24] sm:$0xff]
  %v2161 = vld [vmem:[#allocation2 + $0x2c] sm:$0xff]
  %v2162 = vld [vmem:[#allocation2 + $0x34] sm:$0xff]
  %v2163 = vld [vmem:[#allocation2 + $0x3c] sm:$0xff]
  %v2164 = vld [vmem:[#allocation2 + $0x44] sm:$0xff]
  %v2165 = vld [vmem:[#allocation2 + $0x4c] sm:$0xff]
  %v2166 = vld [vmem:[#allocation2 + $0x54] sm:$0xff]
  %v2167 = vld [vmem:[#allocation2 + $0x5c] sm:$0xff]
  %v2168 = vld [vmem:[#allocation2 + $0x64] sm:$0xff]
  %v2169 = vld [vmem:[#allocation2 + $0x6c] sm:$0xff]
  %v2170 = vld [vmem:[#allocation2 + $0x74] sm:$0xff]
  %v2171 = vld [vmem:[#allocation2 + $0x7c] sm:$0xff]
  %v2172 = vld [vmem:[#allocation2 + $0x84] sm:$0xff]
  %v2173 = vld [vmem:[#allocation2 + $0x8c] sm:$0xff]
  %v2174 = vld [vmem:[#allocation2 + $0x94] sm:$0xff]
  %v2175 = vld [vmem:[#allocation2 + $0x9c] sm:$0x3f]
  %s2176 = scalar_lea.vmem %s2, 640
  %v2177 = vld [vmem:[%s2176] sm:$0xff]
  %v2178 = vld [vmem:[%s2176 + $0x8] sm:$0xff]
  %v2179 = vld [vmem:[%s2176 + $0x10] sm:$0xff]
  %v2180 = vld [vmem:[%s2176 + $0x18] sm:$0xff]
  %v2181 = vld [vmem:[%s2176 + $0x20] sm:$0xff]
  %v2182 = vld [vmem:[%s2176 + $0x28] sm:$0xff]
  %v2183 = vld [vmem:[%s2176 + $0x30] sm:$0xff]
  %v2184 = vld [vmem:[%s2176 + $0x38] sm:$0xff]
  %v2185 = vld [vmem:[%s2176 + $0x40] sm:$0xff]
  %v2186 = vld [vmem:[%s2176 + $0x48] sm:$0xff]
  %v2187 = vld [vmem:[%s2176 + $0x50] sm:$0xff]
  %v2188 = vld [vmem:[%s2176 + $0x58] sm:$0xff]
  %v2189 = vld [vmem:[%s2176 + $0x60] sm:$0xff]
  %v2190 = vld [vmem:[%s2176 + $0x68] sm:$0xff]
  %v2191 = vld [vmem:[%s2176 + $0x70] sm:$0xff]
  %v2192 = vld [vmem:[%s2176 + $0x78] sm:$0xff]
  %2193 = vmatprep.subr.mxu0 0.0
  %2194 = vmatpush1.msra.mxu0 %v2177
  %2195 = vmatprep.subr.mxu0 0.0
  %2196 = vmatpush1.msra.mxu0 %v2178
  %2197 = vmatprep.subr.mxu0 0.0
  %2198 = vmatpush1.msra.mxu0 %v2179
  %2199 = vmatprep.subr.mxu0 0.0
  %2200 = vmatpush1.msra.mxu0 %v2180
  %2201 = vmatprep.subr.mxu0 0.0
  %2202 = vmatpush1.msra.mxu0 %v2181
  %2203 = vmatprep.subr.mxu0 0.0
  %2204 = vmatpush1.msra.mxu0 %v2182
  %2205 = vmatprep.subr.mxu0 0.0
  %2206 = vmatpush1.msra.mxu0 %v2183
  %2207 = vmatprep.subr.mxu0 0.0
  %2208 = vmatpush1.msra.mxu0 %v2184
  %2209 = vmatprep.subr.mxu0 0.0
  %2210 = vmatpush1.msra.mxu0 %v2185
  %2211 = vmatprep.subr.mxu0 0.0
  %2212 = vmatpush1.msra.mxu0 %v2186
  %2213 = vmatprep.subr.mxu0 0.0
  %2214 = vmatpush1.msra.mxu0 %v2187
  %2215 = vmatprep.subr.mxu0 0.0
  %2216 = vmatpush1.msra.mxu0 %v2188
  %2217 = vmatprep.subr.mxu0 0.0
  %2218 = vmatpush1.msra.mxu0 %v2189
  %2219 = vmatprep.subr.mxu0 0.0
  %2220 = vmatpush1.msra.mxu0 %v2190
  %2221 = vmatprep.subr.mxu0 0.0
  %2222 = vmatpush1.msra.mxu0 %v2191
  %2223 = vmatprep.subr.mxu0 0.0
  %2224 = vmatpush1.msra.mxu0 %v2192
  %2225 = vmatprep.subr.mxu0 0.0
  %2226 = vmatpush1.msra.mxu0 0.0
  %2227 = vmatprep.subr.mxu0 0.0
  %2228 = vmatpush1.msra.mxu0 0.0
  %2229 = vmatprep.subr.mxu0 0.0
  %2230 = vmatpush1.msra.mxu0 0.0
  %2231 = vmatprep.subr.mxu0 0.0
  %2232 = vmatpush1.msra.mxu0 0.0
  %2233 = vmatprep.subr.mxu0 0.0
  %2234 = vmatpush1.msra.mxu0 0.0
  %2235 = vmatprep.subr.mxu0 0.0
  %2236 = vmatpush1.msra.mxu0 0.0
  %2237 = vmatprep.subr.mxu0 0.0
  %2238 = vmatpush1.msra.mxu0 0.0
  %2239 = vmatprep.subr.mxu0 0.0
  %2240 = vmatpush1.msra.mxu0 0.0
  %2241 = vmatprep.subr.mxu0 0.0
  %2242 = vmatpush1.msra.mxu0 0.0
  %2243 = vmatprep.subr.mxu0 0.0
  %2244 = vmatpush1.msra.mxu0 0.0
  %2245 = vmatprep.subr.mxu0 0.0
  %2246 = vmatpush1.msra.mxu0 0.0
  %2247 = vmatprep.subr.mxu0 0.0
  %2248 = vmatpush1.msra.mxu0 0.0
  %2249 = vmatprep.subr.mxu0 0.0
  %2250 = vmatpush1.msra.mxu0 0.0
  %2251 = vmatprep.subr.mxu0 0.0
  %2252 = vmatpush1.msra.mxu0 0.0
  %2253 = vmatprep.subr.mxu0 0.0
  %2254 = vmatpush1.msra.mxu0 0.0
  %2255 = vmatprep.subr.mxu0 0.0
  %2256 = vmatpush1.msra.mxu0 0.0
  %2257 = vmatprep.mubr.f32.mxu0 0.0
  %2258 = vmatmul.mubr.f32.gmra.mrb[0].mxu0 %v2158
  %v2259 = vpop.f32.mrb[0].mxu0
  %v2260 = vadd.f32 0.0, %v2259
  %v2261 = vpop.f32.mrb[0].mxu0
  %2262 = vmatprep.mubr.f32.mxu0 0.0
  %2263 = vmatmul.mubr.f32.gmra.mrb[0].mxu0 %v2159
  %v2264 = vpop.f32.mrb[0].mxu0
  %v2265 = vadd.f32 0.0, %v2264
  %v2266 = vpop.f32.mrb[0].mxu0
  %2267 = vmatprep.mubr.f32.mxu0 0.0
  %2268 = vmatmul.mubr.f32.gmra.mrb[0].mxu0 %v2160
  %v2269 = vpop.f32.mrb[0].mxu0
  %v2270 = vadd.f32 0.0, %v2269
  %v2271 = vpop.f32.mrb[0].mxu0
  %2272 = vmatprep.mubr.f32.mxu0 0.0
  %2273 = vmatmul.mubr.f32.gmra.mrb[0].mxu0 %v2161
  %v2274 = vpop.f32.mrb[0].mxu0
  %v2275 = vadd.f32 0.0, %v2274
  %v2276 = vpop.f32.mrb[0].mxu0
  %2277 = vmatprep.mubr.f32.mxu0 0.0
  %2278 = vmatmul.mubr.f32.gmra.mrb[0].mxu0 %v2162
  %v2279 = vpop.f32.mrb[0].mxu0
  %v2280 = vadd.f32 0.0, %v2279
  %v2281 = vpop.f32.mrb[0].mxu0
  %2282 = vmatprep.mubr.f32.mxu0 0.0
  %2283 = vmatmul.mubr.f32.gmra.mrb[0].mxu0 %v2163
  %v2284 = vpop.f32.mrb[0].mxu0
  %v2285 = vadd.f32 0.0, %v2284
  %v2286 = vpop.f32.mrb[0].mxu0
  %2287 = vmatprep.mubr.f32.mxu0 0.0
  %2288 = vmatmul.mubr.f32.gmra.mrb[0].mxu0 %v2164
  %v2289 = vpop.f32.mrb[0].mxu0
  %v2290 = vadd.f32 0.0, %v2289
  %v2291 = vpop.f32.mrb[0].mxu0
  %2292 = vmatprep.mubr.f32.mxu0 0.0
  %2293 = vmatmul.mubr.f32.gmra.mrb[0].mxu0 %v2165
  %v2294 = vpop.f32.mrb[0].mxu0
  %v2295 = vadd.f32 0.0, %v2294
  %v2296 = vpop.f32.mrb[0].mxu0
  %2297 = vmatprep.mubr.f32.mxu0 0.0
  %2298 = vmatmul.mubr.f32.gmra.mrb[0].mxu0 %v2166
  %v2299 = vpop.f32.mrb[0].mxu0
  %v2300 = vadd.f32 0.0, %v2299
  %v2301 = vpop.f32.mrb[0].mxu0
  %2302 = vmatprep.mubr.f32.mxu0 0.0
  %2303 = vmatmul.mubr.f32.gmra.mrb[0].mxu0 %v2167
  %v2304 = vpop.f32.mrb[0].mxu0
  %v2305 = vadd.f32 0.0, %v2304
  %v2306 = vpop.f32.mrb[0].mxu0
  %2307 = vmatprep.mubr.f32.mxu0 0.0
  %2308 = vmatmul.mubr.f32.gmra.mrb[0].mxu0 %v2168
  %v2309 = vpop.f32.mrb[0].mxu0
  %v2310 = vadd.f32 0.0, %v2309
  %v2311 = vpop.f32.mrb[0].mxu0
  %2312 = vmatprep.mubr.f32.mxu0 0.0
  %2313 = vmatmul.mubr.f32.gmra.mrb[0].mxu0 %v2169
  %v2314 = vpop.f32.mrb[0].mxu0
  %v2315 = vadd.f32 0.0, %v2314
  %v2316 = vpop.f32.mrb[0].mxu0
  %2317 = vmatprep.mubr.f32.mxu0 0.0
  %2318 = vmatmul.mubr.f32.gmra.mrb[0].mxu0 %v2170
  %v2319 = vpop.f32.mrb[0].mxu0
  %v2320 = vadd.f32 0.0, %v2319
  %v2321 = vpop.f32.mrb[0].mxu0
  %2322 = vmatprep.mubr.f32.mxu0 0.0
  %2323 = vmatmul.mubr.f32.gmra.mrb[0].mxu0 %v2171
  %v2324 = vpop.f32.mrb[0].mxu0
  %v2325 = vadd.f32 0.0, %v2324
  %v2326 = vpop.f32.mrb[0].mxu0
  %2327 = vmatprep.mubr.f32.mxu0 0.0
  %2328 = vmatmul.mubr.f32.gmra.mrb[0].mxu0 %v2172
  %v2329 = vpop.f32.mrb[0].mxu0
  %v2330 = vadd.f32 0.0, %v2329
  %v2331 = vpop.f32.mrb[0].mxu0
  %2332 = vmatprep.mubr.f32.mxu0 0.0
  %2333 = vmatmul.mubr.f32.gmra.mrb[0].mxu0 %v2173
  %v2334 = vpop.f32.mrb[0].mxu0
  %v2335 = vadd.f32 0.0, %v2334
  %v2336 = vpop.f32.mrb[0].mxu0
  %2337 = vmatprep.mubr.f32.mxu0 0.0
  %2338 = vmatmul.mubr.f32.gmra.mrb[0].mxu0 %v2174
  %v2339 = vpop.f32.mrb[0].mxu0
  %v2340 = vadd.f32 0.0, %v2339
  %v2341 = vpop.f32.mrb[0].mxu0
  %2342 = vmatprep.mubr.f32.mxu0 0.0
  %2343 = vmatmul.mubr.f32.gmra.mrb[0].mxu0 %v2175
  %v2344 = vpop.f32.mrb[0].mxu0
  %v2345 = vadd.f32 0.0, %v2344
  %v2346 = vpop.f32.mrb[0].mxu0
  %2347 = vdwg.mxu0
  %v2348 = vadd.f32 %v2140, %v2260
  %v2349 = vadd.f32 %v2141, %v2265
  %v2350 = vadd.f32 %v2142, %v2270
  %v2351 = vadd.f32 %v2143, %v2275
  %v2352 = vadd.f32 %v2144, %v2280
  %v2353 = vadd.f32 %v2145, %v2285
  %v2354 = vadd.f32 %v2146, %v2290
  %v2355 = vadd.f32 %v2147, %v2295
  %v2356 = vadd.f32 %v2148, %v2300
  %v2357 = vadd.f32 %v2149, %v2305
  %v2358 = vadd.f32 %v2150, %v2310
  %v2359 = vadd.f32 %v2151, %v2315
  %v2360 = vadd.f32 %v2152, %v2320
  %v2361 = vadd.f32 %v2153, %v2325
  %v2362 = vadd.f32 %v2154, %v2330
  %v2363 = vadd.f32 %v2155, %v2335
  %v2364 = vadd.f32 %v2156, %v2340
  %v2365 = vadd.f32 %v2157, %v2345
  %v2366 = vld [vmem:[#allocation2 + $0xa2] sm:$0xff]
  %v2367 = vld [vmem:[#allocation2 + $0xaa] sm:$0xff]
  %v2368 = vld [vmem:[#allocation2 + $0xb2] sm:$0xff]
  %v2369 = vld [vmem:[#allocation2 + $0xba] sm:$0xff]
  %v2370 = vld [vmem:[#allocation2 + $0xc2] sm:$0xff]
  %v2371 = vld [vmem:[#allocation2 + $0xca] sm:$0xff]
  %v2372 = vld [vmem:[#allocation2 + $0xd2] sm:$0xff]
  %v2373 = vld [vmem:[#allocation2 + $0xda] sm:$0xff]
  %v2374 = vld [vmem:[#allocation2 + $0xe2] sm:$0xff]
  %v2375 = vld [vmem:[#allocation2 + $0xea] sm:$0xff]
  %v2376 = vld [vmem:[#allocation2 + $0xf2] sm:$0xff]
  %v2377 = vld [vmem:[#allocation2 + $0xfa] sm:$0xff]
  %v2378 = vld [vmem:[#allocation2 + $0x102] sm:$0xff]
  %v2379 = vld [vmem:[#allocation2 + $0x10a] sm:$0xff]
  %v2380 = vld [vmem:[#allocation2 + $0x112] sm:$0xff]
  %v2381 = vld [vmem:[#allocation2 + $0x11a] sm:$0xff]
  %v2382 = vld [vmem:[#allocation2 + $0x122] sm:$0xff]
  %v2383 = vld [vmem:[#allocation2 + $0x12a] sm:$0x3f]
  %s2384 = scalar_lea.vmem %s2, 768
  %v2385 = vld [vmem:[%s2384] sm:$0xff]
  %v2386 = vld [vmem:[%s2384 + $0x8] sm:$0xff]
  %v2387 = vld [vmem:[%s2384 + $0x10] sm:$0xff]
  %v2388 = vld [vmem:[%s2384 + $0x18] sm:$0xff]
  %v2389 = vld [vmem:[%s2384 + $0x20] sm:$0xff]
  %v2390 = vld [vmem:[%s2384 + $0x28] sm:$0xff]
  %v2391 = vld [vmem:[%s2384 + $0x30] sm:$0xff]
  %v2392 = vld [vmem:[%s2384 + $0x38] sm:$0xff]
  %v2393 = vld [vmem:[%s2384 + $0x40] sm:$0xff]
  %v2394 = vld [vmem:[%s2384 + $0x48] sm:$0xff]
  %v2395 = vld [vmem:[%s2384 + $0x50] sm:$0xff]
  %v2396 = vld [vmem:[%s2384 + $0x58] sm:$0xff]
  %v2397 = vld [vmem:[%s2384 + $0x60] sm:$0xff]
  %v2398 = vld [vmem:[%s2384 + $0x68] sm:$0xff]
  %v2399 = vld [vmem:[%s2384 + $0x70] sm:$0xff]
  %v2400 = vld [vmem:[%s2384 + $0x78] sm:$0xff]
  %2401 = vmatprep.subr.mxu0 0.0
  %2402 = vmatpush1.msra.mxu0 %v2385
  %2403 = vmatprep.subr.mxu0 0.0
  %2404 = vmatpush1.msra.mxu0 %v2386
  %2405 = vmatprep.subr.mxu0 0.0
  %2406 = vmatpush1.msra.mxu0 %v2387
  %2407 = vmatprep.subr.mxu0 0.0
  %2408 = vmatpush1.msra.mxu0 %v2388
  %2409 = vmatprep.subr.mxu0 0.0
  %2410 = vmatpush1.msra.mxu0 %v2389
  %2411 = vmatprep.subr.mxu0 0.0
  %2412 = vmatpush1.msra.mxu0 %v2390
  %2413 = vmatprep.subr.mxu0 0.0
  %2414 = vmatpush1.msra.mxu0 %v2391
  %2415 = vmatprep.subr.mxu0 0.0
  %2416 = vmatpush1.msra.mxu0 %v2392
  %2417 = vmatprep.subr.mxu0 0.0
  %2418 = vmatpush1.msra.mxu0 %v2393
  %2419 = vmatprep.subr.mxu0 0.0
  %2420 = vmatpush1.msra.mxu0 %v2394
  %2421 = vmatprep.subr.mxu0 0.0
  %2422 = vmatpush1.msra.mxu0 %v2395
  %2423 = vmatprep.subr.mxu0 0.0
  %2424 = vmatpush1.msra.mxu0 %v2396
  %2425 = vmatprep.subr.mxu0 0.0
  %2426 = vmatpush1.msra.mxu0 %v2397
  %2427 = vmatprep.subr.mxu0 0.0
  %2428 = vmatpush1.msra.mxu0 %v2398
  %2429 = vmatprep.subr.mxu0 0.0
  %2430 = vmatpush1.msra.mxu0 %v2399
  %2431 = vmatprep.subr.mxu0 0.0
  %2432 = vmatpush1.msra.mxu0 %v2400
  %2433 = vmatprep.subr.mxu0 0.0
  %2434 = vmatpush1.msra.mxu0 0.0
  %2435 = vmatprep.subr.mxu0 0.0
  %2436 = vmatpush1.msra.mxu0 0.0
  %2437 = vmatprep.subr.mxu0 0.0
  %2438 = vmatpush1.msra.mxu0 0.0
  %2439 = vmatprep.subr.mxu0 0.0
  %2440 = vmatpush1.msra.mxu0 0.0
  %2441 = vmatprep.subr.mxu0 0.0
  %2442 = vmatpush1.msra.mxu0 0.0
  %2443 = vmatprep.subr.mxu0 0.0
  %2444 = vmatpush1.msra.mxu0 0.0
  %2445 = vmatprep.subr.mxu0 0.0
  %2446 = vmatpush1.msra.mxu0 0.0
  %2447 = vmatprep.subr.mxu0 0.0
  %2448 = vmatpush1.msra.mxu0 0.0
  %2449 = vmatprep.subr.mxu0 0.0
  %2450 = vmatpush1.msra.mxu0 0.0
  %2451 = vmatprep.subr.mxu0 0.0
  %2452 = vmatpush1.msra.mxu0 0.0
  %2453 = vmatprep.subr.mxu0 0.0
  %2454 = vmatpush1.msra.mxu0 0.0
  %2455 = vmatprep.subr.mxu0 0.0
  %2456 = vmatpush1.msra.mxu0 0.0
  %2457 = vmatprep.subr.mxu0 0.0
  %2458 = vmatpush1.msra.mxu0 0.0
  %2459 = vmatprep.subr.mxu0 0.0
  %2460 = vmatpush1.msra.mxu0 0.0
  %2461 = vmatprep.subr.mxu0 0.0
  %2462 = vmatpush1.msra.mxu0 0.0
  %2463 = vmatprep.subr.mxu0 0.0
  %2464 = vmatpush1.msra.mxu0 0.0
  %2465 = vmatprep.mubr.f32.mxu0 0.0
  %2466 = vmatmul.mubr.f32.gmra.mrb[0].mxu0 %v2366
  %v2467 = vpop.f32.mrb[0].mxu0
  %v2468 = vadd.f32 0.0, %v2467
  %v2469 = vpop.f32.mrb[0].mxu0
  %2470 = vmatprep.mubr.f32.mxu0 0.0
  %2471 = vmatmul.mubr.f32.gmra.mrb[0].mxu0 %v2367
  %v2472 = vpop.f32.mrb[0].mxu0
  %v2473 = vadd.f32 0.0, %v2472
  %v2474 = vpop.f32.mrb[0].mxu0
  %2475 = vmatprep.mubr.f32.mxu0 0.0
  %2476 = vmatmul.mubr.f32.gmra.mrb[0].mxu0 %v2368
  %v2477 = vpop.f32.mrb[0].mxu0
  %v2478 = vadd.f32 0.0, %v2477
  %v2479 = vpop.f32.mrb[0].mxu0
  %2480 = vmatprep.mubr.f32.mxu0 0.0
  %2481 = vmatmul.mubr.f32.gmra.mrb[0].mxu0 %v2369
  %v2482 = vpop.f32.mrb[0].mxu0
  %v2483 = vadd.f32 0.0, %v2482
  %v2484 = vpop.f32.mrb[0].mxu0
  %2485 = vmatprep.mubr.f32.mxu0 0.0
  %2486 = vmatmul.mubr.f32.gmra.mrb[0].mxu0 %v2370
  %v2487 = vpop.f32.mrb[0].mxu0
  %v2488 = vadd.f32 0.0, %v2487
  %v2489 = vpop.f32.mrb[0].mxu0
  %2490 = vmatprep.mubr.f32.mxu0 0.0
  %2491 = vmatmul.mubr.f32.gmra.mrb[0].mxu0 %v2371
  %v2492 = vpop.f32.mrb[0].mxu0
  %v2493 = vadd.f32 0.0, %v2492
  %v2494 = vpop.f32.mrb[0].mxu0
  %2495 = vmatprep.mubr.f32.mxu0 0.0
  %2496 = vmatmul.mubr.f32.gmra.mrb[0].mxu0 %v2372
  %v2497 = vpop.f32.mrb[0].mxu0
  %v2498 = vadd.f32 0.0, %v2497
  %v2499 = vpop.f32.mrb[0].mxu0
  %2500 = vmatprep.mubr.f32.mxu0 0.0
  %2501 = vmatmul.mubr.f32.gmra.mrb[0].mxu0 %v2373
  %v2502 = vpop.f32.mrb[0].mxu0
  %v2503 = vadd.f32 0.0, %v2502
  %v2504 = vpop.f32.mrb[0].mxu0
  %2505 = vmatprep.mubr.f32.mxu0 0.0
  %2506 = vmatmul.mubr.f32.gmra.mrb[0].mxu0 %v2374
  %v2507 = vpop.f32.mrb[0].mxu0
  %v2508 = vadd.f32 0.0, %v2507
  %v2509 = vpop.f32.mrb[0].mxu0
  %2510 = vmatprep.mubr.f32.mxu0 0.0
  %2511 = vmatmul.mubr.f32.gmra.mrb[0].mxu0 %v2375
  %v2512 = vpop.f32.mrb[0].mxu0
  %v2513 = vadd.f32 0.0, %v2512
  %v2514 = vpop.f32.mrb[0].mxu0
  %2515 = vmatprep.mubr.f32.mxu0 0.0
  %2516 = vmatmul.mubr.f32.gmra.mrb[0].mxu0 %v2376
  %v2517 = vpop.f32.mrb[0].mxu0
  %v2518 = vadd.f32 0.0, %v2517
  %v2519 = vpop.f32.mrb[0].mxu0
  %2520 = vmatprep.mubr.f32.mxu0 0.0
  %2521 = vmatmul.mubr.f32.gmra.mrb[0].mxu0 %v2377
  %v2522 = vpop.f32.mrb[0].mxu0
  %v2523 = vadd.f32 0.0, %v2522
  %v2524 = vpop.f32.mrb[0].mxu0
  %2525 = vmatprep.mubr.f32.mxu0 0.0
  %2526 = vmatmul.mubr.f32.gmra.mrb[0].mxu0 %v2378
  %v2527 = vpop.f32.mrb[0].mxu0
  %v2528 = vadd.f32 0.0, %v2527
  %v2529 = vpop.f32.mrb[0].mxu0
  %2530 = vmatprep.mubr.f32.mxu0 0.0
  %2531 = vmatmul.mubr.f32.gmra.mrb[0].mxu0 %v2379
  %v2532 = vpop.f32.mrb[0].mxu0
  %v2533 = vadd.f32 0.0, %v2532
  %v2534 = vpop.f32.mrb[0].mxu0
  %2535 = vmatprep.mubr.f32.mxu0 0.0
  %2536 = vmatmul.mubr.f32.gmra.mrb[0].mxu0 %v2380
  %v2537 = vpop.f32.mrb[0].mxu0
  %v2538 = vadd.f32 0.0, %v2537
  %v2539 = vpop.f32.mrb[0].mxu0
  %2540 = vmatprep.mubr.f32.mxu0 0.0
  %2541 = vmatmul.mubr.f32.gmra.mrb[0].mxu0 %v2381
  %v2542 = vpop.f32.mrb[0].mxu0
  %v2543 = vadd.f32 0.0, %v2542
  %v2544 = vpop.f32.mrb[0].mxu0
  %2545 = vmatprep.mubr.f32.mxu0 0.0
  %2546 = vmatmul.mubr.f32.gmra.mrb[0].mxu0 %v2382
  %v2547 = vpop.f32.mrb[0].mxu0
  %v2548 = vadd.f32 0.0, %v2547
  %v2549 = vpop.f32.mrb[0].mxu0
  %2550 = vmatprep.mubr.f32.mxu0 0.0
  %2551 = vmatmul.mubr.f32.gmra.mrb[0].mxu0 %v2383
  %v2552 = vpop.f32.mrb[0].mxu0
  %v2553 = vadd.f32 0.0, %v2552
  %v2554 = vpop.f32.mrb[0].mxu0
  %2555 = vdwg.mxu0
  %v2556 = vadd.f32 %v2348, %v2468
  %v2557 = vadd.f32 %v2349, %v2473
  %v2558 = vadd.f32 %v2350, %v2478
  %v2559 = vadd.f32 %v2351, %v2483
  %v2560 = vadd.f32 %v2352, %v2488
  %v2561 = vadd.f32 %v2353, %v2493
  %v2562 = vadd.f32 %v2354, %v2498
  %v2563 = vadd.f32 %v2355, %v2503
  %v2564 = vadd.f32 %v2356, %v2508
  %v2565 = vadd.f32 %v2357, %v2513
  %v2566 = vadd.f32 %v2358, %v2518
  %v2567 = vadd.f32 %v2359, %v2523
  %v2568 = vadd.f32 %v2360, %v2528
  %v2569 = vadd.f32 %v2361, %v2533
  %v2570 = vadd.f32 %v2362, %v2538
  %v2571 = vadd.f32 %v2363, %v2543
  %v2572 = vadd.f32 %v2364, %v2548
  %v2573 = vadd.f32 %v2365, %v2553
  %v2574 = vld [vmem:[#allocation2 + $0xab] sm:$0xff]
  %v2575 = vld [vmem:[#allocation2 + $0xb3] sm:$0xff]
  %v2576 = vld [vmem:[#allocation2 + $0xbb] sm:$0xff]
  %v2577 = vld [vmem:[#allocation2 + $0xc3] sm:$0xff]
  %v2578 = vld [vmem:[#allocation2 + $0xcb] sm:$0xff]
  %v2579 = vld [vmem:[#allocation2 + $0xd3] sm:$0xff]
  %v2580 = vld [vmem:[#allocation2 + $0xdb] sm:$0xff]
  %v2581 = vld [vmem:[#allocation2 + $0xe3] sm:$0xff]
  %v2582 = vld [vmem:[#allocation2 + $0xeb] sm:$0xff]
  %v2583 = vld [vmem:[#allocation2 + $0xf3] sm:$0xff]
  %v2584 = vld [vmem:[#allocation2 + $0xfb] sm:$0xff]
  %v2585 = vld [vmem:[#allocation2 + $0x103] sm:$0xff]
  %v2586 = vld [vmem:[#allocation2 + $0x10b] sm:$0xff]
  %v2587 = vld [vmem:[#allocation2 + $0x113] sm:$0xff]
  %v2588 = vld [vmem:[#allocation2 + $0x11b] sm:$0xff]
  %v2589 = vld [vmem:[#allocation2 + $0x123] sm:$0xff]
  %v2590 = vld [vmem:[#allocation2 + $0x12b] sm:$0xff]
  %v2591 = vld [vmem:[#allocation2 + $0x133] sm:$0x3f]
  %s2592 = scalar_lea.vmem %s2, 896
  %v2593 = vld [vmem:[%s2592] sm:$0xff]
  %v2594 = vld [vmem:[%s2592 + $0x8] sm:$0xff]
  %v2595 = vld [vmem:[%s2592 + $0x10] sm:$0xff]
  %v2596 = vld [vmem:[%s2592 + $0x18] sm:$0xff]
  %v2597 = vld [vmem:[%s2592 + $0x20] sm:$0xff]
  %v2598 = vld [vmem:[%s2592 + $0x28] sm:$0xff]
  %v2599 = vld [vmem:[%s2592 + $0x30] sm:$0xff]
  %v2600 = vld [vmem:[%s2592 + $0x38] sm:$0xff]
  %v2601 = vld [vmem:[%s2592 + $0x40] sm:$0xff]
  %v2602 = vld [vmem:[%s2592 + $0x48] sm:$0xff]
  %v2603 = vld [vmem:[%s2592 + $0x50] sm:$0xff]
  %v2604 = vld [vmem:[%s2592 + $0x58] sm:$0xff]
  %v2605 = vld [vmem:[%s2592 + $0x60] sm:$0xff]
  %v2606 = vld [vmem:[%s2592 + $0x68] sm:$0xff]
  %v2607 = vld [vmem:[%s2592 + $0x70] sm:$0xff]
  %v2608 = vld [vmem:[%s2592 + $0x78] sm:$0xff]
  %2609 = vmatprep.subr.mxu0 0.0
  %2610 = vmatpush1.msra.mxu0 %v2593
  %2611 = vmatprep.subr.mxu0 0.0
  %2612 = vmatpush1.msra.mxu0 %v2594
  %2613 = vmatprep.subr.mxu0 0.0
  %2614 = vmatpush1.msra.mxu0 %v2595
  %2615 = vmatprep.subr.mxu0 0.0
  %2616 = vmatpush1.msra.mxu0 %v2596
  %2617 = vmatprep.subr.mxu0 0.0
  %2618 = vmatpush1.msra.mxu0 %v2597
  %2619 = vmatprep.subr.mxu0 0.0
  %2620 = vmatpush1.msra.mxu0 %v2598
  %2621 = vmatprep.subr.mxu0 0.0
  %2622 = vmatpush1.msra.mxu0 %v2599
  %2623 = vmatprep.subr.mxu0 0.0
  %2624 = vmatpush1.msra.mxu0 %v2600
  %2625 = vmatprep.subr.mxu0 0.0
  %2626 = vmatpush1.msra.mxu0 %v2601
  %2627 = vmatprep.subr.mxu0 0.0
  %2628 = vmatpush1.msra.mxu0 %v2602
  %2629 = vmatprep.subr.mxu0 0.0
  %2630 = vmatpush1.msra.mxu0 %v2603
  %2631 = vmatprep.subr.mxu0 0.0
  %2632 = vmatpush1.msra.mxu0 %v2604
  %2633 = vmatprep.subr.mxu0 0.0
  %2634 = vmatpush1.msra.mxu0 %v2605
  %2635 = vmatprep.subr.mxu0 0.0
  %2636 = vmatpush1.msra.mxu0 %v2606
  %2637 = vmatprep.subr.mxu0 0.0
  %2638 = vmatpush1.msra.mxu0 %v2607
  %2639 = vmatprep.subr.mxu0 0.0
  %2640 = vmatpush1.msra.mxu0 %v2608
  %2641 = vmatprep.subr.mxu0 0.0
  %2642 = vmatpush1.msra.mxu0 0.0
  %2643 = vmatprep.subr.mxu0 0.0
  %2644 = vmatpush1.msra.mxu0 0.0
  %2645 = vmatprep.subr.mxu0 0.0
  %2646 = vmatpush1.msra.mxu0 0.0
  %2647 = vmatprep.subr.mxu0 0.0
  %2648 = vmatpush1.msra.mxu0 0.0
  %2649 = vmatprep.subr.mxu0 0.0
  %2650 = vmatpush1.msra.mxu0 0.0
  %2651 = vmatprep.subr.mxu0 0.0
  %2652 = vmatpush1.msra.mxu0 0.0
  %2653 = vmatprep.subr.mxu0 0.0
  %2654 = vmatpush1.msra.mxu0 0.0
  %2655 = vmatprep.subr.mxu0 0.0
  %2656 = vmatpush1.msra.mxu0 0.0
  %2657 = vmatprep.subr.mxu0 0.0
  %2658 = vmatpush1.msra.mxu0 0.0
  %2659 = vmatprep.subr.mxu0 0.0
  %2660 = vmatpush1.msra.mxu0 0.0
  %2661 = vmatprep.subr.mxu0 0.0
  %2662 = vmatpush1.msra.mxu0 0.0
  %2663 = vmatprep.subr.mxu0 0.0
  %2664 = vmatpush1.msra.mxu0 0.0
  %2665 = vmatprep.subr.mxu0 0.0
  %2666 = vmatpush1.msra.mxu0 0.0
  %2667 = vmatprep.subr.mxu0 0.0
  %2668 = vmatpush1.msra.mxu0 0.0
  %2669 = vmatprep.subr.mxu0 0.0
  %2670 = vmatpush1.msra.mxu0 0.0
  %2671 = vmatprep.subr.mxu0 0.0
  %2672 = vmatpush1.msra.mxu0 0.0
  %2673 = vmatprep.mubr.f32.mxu0 0.0
  %2674 = vmatmul.mubr.f32.gmra.mrb[0].mxu0 %v2574
  %v2675 = vpop.f32.mrb[0].mxu0
  %v2676 = vadd.f32 0.0, %v2675
  %v2677 = vpop.f32.mrb[0].mxu0
  %2678 = vmatprep.mubr.f32.mxu0 0.0
  %2679 = vmatmul.mubr.f32.gmra.mrb[0].mxu0 %v2575
  %v2680 = vpop.f32.mrb[0].mxu0
  %v2681 = vadd.f32 0.0, %v2680
  %v2682 = vpop.f32.mrb[0].mxu0
  %2683 = vmatprep.mubr.f32.mxu0 0.0
  %2684 = vmatmul.mubr.f32.gmra.mrb[0].mxu0 %v2576
  %v2685 = vpop.f32.mrb[0].mxu0
  %v2686 = vadd.f32 0.0, %v2685
  %v2687 = vpop.f32.mrb[0].mxu0
  %2688 = vmatprep.mubr.f32.mxu0 0.0
  %2689 = vmatmul.mubr.f32.gmra.mrb[0].mxu0 %v2577
  %v2690 = vpop.f32.mrb[0].mxu0
  %v2691 = vadd.f32 0.0, %v2690
  %v2692 = vpop.f32.mrb[0].mxu0
  %2693 = vmatprep.mubr.f32.mxu0 0.0
  %2694 = vmatmul.mubr.f32.gmra.mrb[0].mxu0 %v2578
  %v2695 = vpop.f32.mrb[0].mxu0
  %v2696 = vadd.f32 0.0, %v2695
  %v2697 = vpop.f32.mrb[0].mxu0
  %2698 = vmatprep.mubr.f32.mxu0 0.0
  %2699 = vmatmul.mubr.f32.gmra.mrb[0].mxu0 %v2579
  %v2700 = vpop.f32.mrb[0].mxu0
  %v2701 = vadd.f32 0.0, %v2700
  %v2702 = vpop.f32.mrb[0].mxu0
  %2703 = vmatprep.mubr.f32.mxu0 0.0
  %2704 = vmatmul.mubr.f32.gmra.mrb[0].mxu0 %v2580
  %v2705 = vpop.f32.mrb[0].mxu0
  %v2706 = vadd.f32 0.0, %v2705
  %v2707 = vpop.f32.mrb[0].mxu0
  %2708 = vmatprep.mubr.f32.mxu0 0.0
  %2709 = vmatmul.mubr.f32.gmra.mrb[0].mxu0 %v2581
  %v2710 = vpop.f32.mrb[0].mxu0
  %v2711 = vadd.f32 0.0, %v2710
  %v2712 = vpop.f32.mrb[0].mxu0
  %2713 = vmatprep.mubr.f32.mxu0 0.0
  %2714 = vmatmul.mubr.f32.gmra.mrb[0].mxu0 %v2582
  %v2715 = vpop.f32.mrb[0].mxu0
  %v2716 = vadd.f32 0.0, %v2715
  %v2717 = vpop.f32.mrb[0].mxu0
  %2718 = vmatprep.mubr.f32.mxu0 0.0
  %2719 = vmatmul.mubr.f32.gmra.mrb[0].mxu0 %v2583
  %v2720 = vpop.f32.mrb[0].mxu0
  %v2721 = vadd.f32 0.0, %v2720
  %v2722 = vpop.f32.mrb[0].mxu0
  %2723 = vmatprep.mubr.f32.mxu0 0.0
  %2724 = vmatmul.mubr.f32.gmra.mrb[0].mxu0 %v2584
  %v2725 = vpop.f32.mrb[0].mxu0
  %v2726 = vadd.f32 0.0, %v2725
  %v2727 = vpop.f32.mrb[0].mxu0
  %2728 = vmatprep.mubr.f32.mxu0 0.0
  %2729 = vmatmul.mubr.f32.gmra.mrb[0].mxu0 %v2585
  %v2730 = vpop.f32.mrb[0].mxu0
  %v2731 = vadd.f32 0.0, %v2730
  %v2732 = vpop.f32.mrb[0].mxu0
  %2733 = vmatprep.mubr.f32.mxu0 0.0
  %2734 = vmatmul.mubr.f32.gmra.mrb[0].mxu0 %v2586
  %v2735 = vpop.f32.mrb[0].mxu0
  %v2736 = vadd.f32 0.0, %v2735
  %v2737 = vpop.f32.mrb[0].mxu0
  %2738 = vmatprep.mubr.f32.mxu0 0.0
  %2739 = vmatmul.mubr.f32.gmra.mrb[0].mxu0 %v2587
  %v2740 = vpop.f32.mrb[0].mxu0
  %v2741 = vadd.f32 0.0, %v2740
  %v2742 = vpop.f32.mrb[0].mxu0
  %2743 = vmatprep.mubr.f32.mxu0 0.0
  %2744 = vmatmul.mubr.f32.gmra.mrb[0].mxu0 %v2588
  %v2745 = vpop.f32.mrb[0].mxu0
  %v2746 = vadd.f32 0.0, %v2745
  %v2747 = vpop.f32.mrb[0].mxu0
  %2748 = vmatprep.mubr.f32.mxu0 0.0
  %2749 = vmatmul.mubr.f32.gmra.mrb[0].mxu0 %v2589
  %v2750 = vpop.f32.mrb[0].mxu0
  %v2751 = vadd.f32 0.0, %v2750
  %v2752 = vpop.f32.mrb[0].mxu0
  %2753 = vmatprep.mubr.f32.mxu0 0.0
  %2754 = vmatmul.mubr.f32.gmra.mrb[0].mxu0 %v2590
  %v2755 = vpop.f32.mrb[0].mxu0
  %v2756 = vadd.f32 0.0, %v2755
  %v2757 = vpop.f32.mrb[0].mxu0
  %2758 = vmatprep.mubr.f32.mxu0 0.0
  %2759 = vmatmul.mubr.f32.gmra.mrb[0].mxu0 %v2591
  %v2760 = vpop.f32.mrb[0].mxu0
  %v2761 = vadd.f32 0.0, %v2760
  %v2762 = vpop.f32.mrb[0].mxu0
  %2763 = vdwg.mxu0
  %v2764 = vadd.f32 %v2556, %v2676
  %v2765 = vadd.f32 %v2557, %v2681
  %v2766 = vadd.f32 %v2558, %v2686
  %v2767 = vadd.f32 %v2559, %v2691
  %v2768 = vadd.f32 %v2560, %v2696
  %v2769 = vadd.f32 %v2561, %v2701
  %v2770 = vadd.f32 %v2562, %v2706
  %v2771 = vadd.f32 %v2563, %v2711
  %v2772 = vadd.f32 %v2564, %v2716
  %v2773 = vadd.f32 %v2565, %v2721
  %v2774 = vadd.f32 %v2566, %v2726
  %v2775 = vadd.f32 %v2567, %v2731
  %v2776 = vadd.f32 %v2568, %v2736
  %v2777 = vadd.f32 %v2569, %v2741
  %v2778 = vadd.f32 %v2570, %v2746
  %v2779 = vadd.f32 %v2571, %v2751
  %v2780 = vadd.f32 %v2572, %v2756
  %v2781 = vadd.f32 %v2573, %v2761
  %v2782 = vld [vmem:[#allocation2 + $0xb4] sm:$0xff]
  %v2783 = vld [vmem:[#allocation2 + $0xbc] sm:$0xff]
  %v2784 = vld [vmem:[#allocation2 + $0xc4] sm:$0xff]
  %v2785 = vld [vmem:[#allocation2 + $0xcc] sm:$0xff]
  %v2786 = vld [vmem:[#allocation2 + $0xd4] sm:$0xff]
  %v2787 = vld [vmem:[#allocation2 + $0xdc] sm:$0xff]
  %v2788 = vld [vmem:[#allocation2 + $0xe4] sm:$0xff]
  %v2789 = vld [vmem:[#allocation2 + $0xec] sm:$0xff]
  %v2790 = vld [vmem:[#allocation2 + $0xf4] sm:$0xff]
  %v2791 = vld [vmem:[#allocation2 + $0xfc] sm:$0xff]
  %v2792 = vld [vmem:[#allocation2 + $0x104] sm:$0xff]
  %v2793 = vld [vmem:[#allocation2 + $0x10c] sm:$0xff]
  %v2794 = vld [vmem:[#allocation2 + $0x114] sm:$0xff]
  %v2795 = vld [vmem:[#allocation2 + $0x11c] sm:$0xff]
  %v2796 = vld [vmem:[#allocation2 + $0x124] sm:$0xff]
  %v2797 = vld [vmem:[#allocation2 + $0x12c] sm:$0xff]
  %v2798 = vld [vmem:[#allocation2 + $0x134] sm:$0xff]
  %v2799 = vld [vmem:[#allocation2 + $0x13c] sm:$0x3f]
  %s2800 = scalar_lea.vmem %s2, 1024
  %v2801 = vld [vmem:[%s2800] sm:$0xff]
  %v2802 = vld [vmem:[%s2800 + $0x8] sm:$0xff]
  %v2803 = vld [vmem:[%s2800 + $0x10] sm:$0xff]
  %v2804 = vld [vmem:[%s2800 + $0x18] sm:$0xff]
  %v2805 = vld [vmem:[%s2800 + $0x20] sm:$0xff]
  %v2806 = vld [vmem:[%s2800 + $0x28] sm:$0xff]
  %v2807 = vld [vmem:[%s2800 + $0x30] sm:$0xff]
  %v2808 = vld [vmem:[%s2800 + $0x38] sm:$0xff]
  %v2809 = vld [vmem:[%s2800 + $0x40] sm:$0xff]
  %v2810 = vld [vmem:[%s2800 + $0x48] sm:$0xff]
  %v2811 = vld [vmem:[%s2800 + $0x50] sm:$0xff]
  %v2812 = vld [vmem:[%s2800 + $0x58] sm:$0xff]
  %v2813 = vld [vmem:[%s2800 + $0x60] sm:$0xff]
  %v2814 = vld [vmem:[%s2800 + $0x68] sm:$0xff]
  %v2815 = vld [vmem:[%s2800 + $0x70] sm:$0xff]
  %v2816 = vld [vmem:[%s2800 + $0x78] sm:$0xff]
  %2817 = vmatprep.subr.mxu0 0.0
  %2818 = vmatpush1.msra.mxu0 %v2801
  %2819 = vmatprep.subr.mxu0 0.0
  %2820 = vmatpush1.msra.mxu0 %v2802
  %2821 = vmatprep.subr.mxu0 0.0
  %2822 = vmatpush1.msra.mxu0 %v2803
  %2823 = vmatprep.subr.mxu0 0.0
  %2824 = vmatpush1.msra.mxu0 %v2804
  %2825 = vmatprep.subr.mxu0 0.0
  %2826 = vmatpush1.msra.mxu0 %v2805
  %2827 = vmatprep.subr.mxu0 0.0
  %2828 = vmatpush1.msra.mxu0 %v2806
  %2829 = vmatprep.subr.mxu0 0.0
  %2830 = vmatpush1.msra.mxu0 %v2807
  %2831 = vmatprep.subr.mxu0 0.0
  %2832 = vmatpush1.msra.mxu0 %v2808
  %2833 = vmatprep.subr.mxu0 0.0
  %2834 = vmatpush1.msra.mxu0 %v2809
  %2835 = vmatprep.subr.mxu0 0.0
  %2836 = vmatpush1.msra.mxu0 %v2810
  %2837 = vmatprep.subr.mxu0 0.0
  %2838 = vmatpush1.msra.mxu0 %v2811
  %2839 = vmatprep.subr.mxu0 0.0
  %2840 = vmatpush1.msra.mxu0 %v2812
  %2841 = vmatprep.subr.mxu0 0.0
  %2842 = vmatpush1.msra.mxu0 %v2813
  %2843 = vmatprep.subr.mxu0 0.0
  %2844 = vmatpush1.msra.mxu0 %v2814
  %2845 = vmatprep.subr.mxu0 0.0
  %2846 = vmatpush1.msra.mxu0 %v2815
  %2847 = vmatprep.subr.mxu0 0.0
  %2848 = vmatpush1.msra.mxu0 %v2816
  %2849 = vmatprep.subr.mxu0 0.0
  %2850 = vmatpush1.msra.mxu0 0.0
  %2851 = vmatprep.subr.mxu0 0.0
  %2852 = vmatpush1.msra.mxu0 0.0
  %2853 = vmatprep.subr.mxu0 0.0
  %2854 = vmatpush1.msra.mxu0 0.0
  %2855 = vmatprep.subr.mxu0 0.0
  %2856 = vmatpush1.msra.mxu0 0.0
  %2857 = vmatprep.subr.mxu0 0.0
  %2858 = vmatpush1.msra.mxu0 0.0
  %2859 = vmatprep.subr.mxu0 0.0
  %2860 = vmatpush1.msra.mxu0 0.0
  %2861 = vmatprep.subr.mxu0 0.0
  %2862 = vmatpush1.msra.mxu0 0.0
  %2863 = vmatprep.subr.mxu0 0.0
  %2864 = vmatpush1.msra.mxu0 0.0
  %2865 = vmatprep.subr.mxu0 0.0
  %2866 = vmatpush1.msra.mxu0 0.0
  %2867 = vmatprep.subr.mxu0 0.0
  %2868 = vmatpush1.msra.mxu0 0.0
  %2869 = vmatprep.subr.mxu0 0.0
  %2870 = vmatpush1.msra.mxu0 0.0
  %2871 = vmatprep.subr.mxu0 0.0
  %2872 = vmatpush1.msra.mxu0 0.0
  %2873 = vmatprep.subr.mxu0 0.0
  %2874 = vmatpush1.msra.mxu0 0.0
  %2875 = vmatprep.subr.mxu0 0.0
  %2876 = vmatpush1.msra.mxu0 0.0
  %2877 = vmatprep.subr.mxu0 0.0
  %2878 = vmatpush1.msra.mxu0 0.0
  %2879 = vmatprep.subr.mxu0 0.0
  %2880 = vmatpush1.msra.mxu0 0.0
  %2881 = vmatprep.mubr.f32.mxu0 0.0
  %2882 = vmatmul.mubr.f32.gmra.mrb[0].mxu0 %v2782
  %v2883 = vpop.f32.mrb[0].mxu0
  %v2884 = vadd.f32 0.0, %v2883
  %v2885 = vpop.f32.mrb[0].mxu0
  %2886 = vmatprep.mubr.f32.mxu0 0.0
  %2887 = vmatmul.mubr.f32.gmra.mrb[0].mxu0 %v2783
  %v2888 = vpop.f32.mrb[0].mxu0
  %v2889 = vadd.f32 0.0, %v2888
  %v2890 = vpop.f32.mrb[0].mxu0
  %2891 = vmatprep.mubr.f32.mxu0 0.0
  %2892 = vmatmul.mubr.f32.gmra.mrb[0].mxu0 %v2784
  %v2893 = vpop.f32.mrb[0].mxu0
  %v2894 = vadd.f32 0.0, %v2893
  %v2895 = vpop.f32.mrb[0].mxu0
  %2896 = vmatprep.mubr.f32.mxu0 0.0
  %2897 = vmatmul.mubr.f32.gmra.mrb[0].mxu0 %v2785
  %v2898 = vpop.f32.mrb[0].mxu0
  %v2899 = vadd.f32 0.0, %v2898
  %v2900 = vpop.f32.mrb[0].mxu0
  %2901 = vmatprep.mubr.f32.mxu0 0.0
  %2902 = vmatmul.mubr.f32.gmra.mrb[0].mxu0 %v2786
  %v2903 = vpop.f32.mrb[0].mxu0
  %v2904 = vadd.f32 0.0, %v2903
  %v2905 = vpop.f32.mrb[0].mxu0
  %2906 = vmatprep.mubr.f32.mxu0 0.0
  %2907 = vmatmul.mubr.f32.gmra.mrb[0].mxu0 %v2787
  %v2908 = vpop.f32.mrb[0].mxu0
  %v2909 = vadd.f32 0.0, %v2908
  %v2910 = vpop.f32.mrb[0].mxu0
  %2911 = vmatprep.mubr.f32.mxu0 0.0
  %2912 = vmatmul.mubr.f32.gmra.mrb[0].mxu0 %v2788
  %v2913 = vpop.f32.mrb[0].mxu0
  %v2914 = vadd.f32 0.0, %v2913
  %v2915 = vpop.f32.mrb[0].mxu0
  %2916 = vmatprep.mubr.f32.mxu0 0.0
  %2917 = vmatmul.mubr.f32.gmra.mrb[0].mxu0 %v2789
  %v2918 = vpop.f32.mrb[0].mxu0
  %v2919 = vadd.f32 0.0, %v2918
  %v2920 = vpop.f32.mrb[0].mxu0
  %2921 = vmatprep.mubr.f32.mxu0 0.0
  %2922 = vmatmul.mubr.f32.gmra.mrb[0].mxu0 %v2790
  %v2923 = vpop.f32.mrb[0].mxu0
  %v2924 = vadd.f32 0.0, %v2923
  %v2925 = vpop.f32.mrb[0].mxu0
  %2926 = vmatprep.mubr.f32.mxu0 0.0
  %2927 = vmatmul.mubr.f32.gmra.mrb[0].mxu0 %v2791
  %v2928 = vpop.f32.mrb[0].mxu0
  %v2929 = vadd.f32 0.0, %v2928
  %v2930 = vpop.f32.mrb[0].mxu0
  %2931 = vmatprep.mubr.f32.mxu0 0.0
  %2932 = vmatmul.mubr.f32.gmra.mrb[0].mxu0 %v2792
  %v2933 = vpop.f32.mrb[0].mxu0
  %v2934 = vadd.f32 0.0, %v2933
  %v2935 = vpop.f32.mrb[0].mxu0
  %2936 = vmatprep.mubr.f32.mxu0 0.0
  %2937 = vmatmul.mubr.f32.gmra.mrb[0].mxu0 %v2793
  %v2938 = vpop.f32.mrb[0].mxu0
  %v2939 = vadd.f32 0.0, %v2938
  %v2940 = vpop.f32.mrb[0].mxu0
  %2941 = vmatprep.mubr.f32.mxu0 0.0
  %2942 = vmatmul.mubr.f32.gmra.mrb[0].mxu0 %v2794
  %v2943 = vpop.f32.mrb[0].mxu0
  %v2944 = vadd.f32 0.0, %v2943
  %v2945 = vpop.f32.mrb[0].mxu0
  %2946 = vmatprep.mubr.f32.mxu0 0.0
  %2947 = vmatmul.mubr.f32.gmra.mrb[0].mxu0 %v2795
  %v2948 = vpop.f32.mrb[0].mxu0
  %v2949 = vadd.f32 0.0, %v2948
  %v2950 = vpop.f32.mrb[0].mxu0
  %2951 = vmatprep.mubr.f32.mxu0 0.0
  %2952 = vmatmul.mubr.f32.gmra.mrb[0].mxu0 %v2796
  %v2953 = vpop.f32.mrb[0].mxu0
  %v2954 = vadd.f32 0.0, %v2953
  %v2955 = vpop.f32.mrb[0].mxu0
  %2956 = vmatprep.mubr.f32.mxu0 0.0
  %2957 = vmatmul.mubr.f32.gmra.mrb[0].mxu0 %v2797
  %v2958 = vpop.f32.mrb[0].mxu0
  %v2959 = vadd.f32 0.0, %v2958
  %v2960 = vpop.f32.mrb[0].mxu0
  %2961 = vmatprep.mubr.f32.mxu0 0.0
  %2962 = vmatmul.mubr.f32.gmra.mrb[0].mxu0 %v2798
  %v2963 = vpop.f32.mrb[0].mxu0
  %v2964 = vadd.f32 0.0, %v2963
  %v2965 = vpop.f32.mrb[0].mxu0
  %2966 = vmatprep.mubr.f32.mxu0 0.0
  %2967 = vmatmul.mubr.f32.gmra.mrb[0].mxu0 %v2799
  %v2968 = vpop.f32.mrb[0].mxu0
  %v2969 = vadd.f32 0.0, %v2968
  %v2970 = vpop.f32.mrb[0].mxu0
  %2971 = vdwg.mxu0
  %v2972 = vadd.f32 %v2764, %v2884
  %v2973 = vadd.f32 %v2765, %v2889
  %v2974 = vadd.f32 %v2766, %v2894
  %v2975 = vadd.f32 %v2767, %v2899
  %v2976 = vadd.f32 %v2768, %v2904
  %v2977 = vadd.f32 %v2769, %v2909
  %v2978 = vadd.f32 %v2770, %v2914
  %v2979 = vadd.f32 %v2771, %v2919
  %v2980 = vadd.f32 %v2772, %v2924
  %v2981 = vadd.f32 %v2773, %v2929
  %v2982 = vadd.f32 %v2774, %v2934
  %v2983 = vadd.f32 %v2775, %v2939
  %v2984 = vadd.f32 %v2776, %v2944
  %v2985 = vadd.f32 %v2777, %v2949
  %v2986 = vadd.f32 %v2778, %v2954
  %v2987 = vadd.f32 %v2779, %v2959
  %v2988 = vadd.f32 %v2780, %v2964
  %v2989 = vadd.f32 %v2781, %v2969
  %v2990 = vld [vmem:[#allocation2 + $0x144] sm:$0xff]
  %v2991 = vld [vmem:[#allocation2 + $0x14c] sm:$0xff]
  %v2992 = vld [vmem:[#allocation2 + $0x154] sm:$0xff]
  %v2993 = vld [vmem:[#allocation2 + $0x15c] sm:$0xff]
  %v2994 = vld [vmem:[#allocation2 + $0x164] sm:$0xff]
  %v2995 = vld [vmem:[#allocation2 + $0x16c] sm:$0xff]
  %v2996 = vld [vmem:[#allocation2 + $0x174] sm:$0xff]
  %v2997 = vld [vmem:[#allocation2 + $0x17c] sm:$0xff]
  %v2998 = vld [vmem:[#allocation2 + $0x184] sm:$0xff]
  %v2999 = vld [vmem:[#allocation2 + $0x18c] sm:$0xff]
  %v3000 = vld [vmem:[#allocation2 + $0x194] sm:$0xff]
  %v3001 = vld [vmem:[#allocation2 + $0x19c] sm:$0xff]
  %v3002 = vld [vmem:[#allocation2 + $0x1a4] sm:$0xff]
  %v3003 = vld [vmem:[#allocation2 + $0x1ac] sm:$0xff]
  %v3004 = vld [vmem:[#allocation2 + $0x1b4] sm:$0xff]
  %v3005 = vld [vmem:[#allocation2 + $0x1bc] sm:$0xff]
  %v3006 = vld [vmem:[#allocation2 + $0x1c4] sm:$0xff]
  %v3007 = vld [vmem:[#allocation2 + $0x1cc] sm:$0x3f]
  %s3008 = scalar_lea.vmem %s2, 1152
  %v3009 = vld [vmem:[%s3008] sm:$0xff]
  %v3010 = vld [vmem:[%s3008 + $0x8] sm:$0xff]
  %v3011 = vld [vmem:[%s3008 + $0x10] sm:$0xff]
  %v3012 = vld [vmem:[%s3008 + $0x18] sm:$0xff]
  %v3013 = vld [vmem:[%s3008 + $0x20] sm:$0xff]
  %v3014 = vld [vmem:[%s3008 + $0x28] sm:$0xff]
  %v3015 = vld [vmem:[%s3008 + $0x30] sm:$0xff]
  %v3016 = vld [vmem:[%s3008 + $0x38] sm:$0xff]
  %v3017 = vld [vmem:[%s3008 + $0x40] sm:$0xff]
  %v3018 = vld [vmem:[%s3008 + $0x48] sm:$0xff]
  %v3019 = vld [vmem:[%s3008 + $0x50] sm:$0xff]
  %v3020 = vld [vmem:[%s3008 + $0x58] sm:$0xff]
  %v3021 = vld [vmem:[%s3008 + $0x60] sm:$0xff]
  %v3022 = vld [vmem:[%s3008 + $0x68] sm:$0xff]
  %v3023 = vld [vmem:[%s3008 + $0x70] sm:$0xff]
  %v3024 = vld [vmem:[%s3008 + $0x78] sm:$0xff]
  %3025 = vmatprep.subr.mxu0 0.0
  %3026 = vmatpush1.msra.mxu0 %v3009
  %3027 = vmatprep.subr.mxu0 0.0
  %3028 = vmatpush1.msra.mxu0 %v3010
  %3029 = vmatprep.subr.mxu0 0.0
  %3030 = vmatpush1.msra.mxu0 %v3011
  %3031 = vmatprep.subr.mxu0 0.0
  %3032 = vmatpush1.msra.mxu0 %v3012
  %3033 = vmatprep.subr.mxu0 0.0
  %3034 = vmatpush1.msra.mxu0 %v3013
  %3035 = vmatprep.subr.mxu0 0.0
  %3036 = vmatpush1.msra.mxu0 %v3014
  %3037 = vmatprep.subr.mxu0 0.0
  %3038 = vmatpush1.msra.mxu0 %v3015
  %3039 = vmatprep.subr.mxu0 0.0
  %3040 = vmatpush1.msra.mxu0 %v3016
  %3041 = vmatprep.subr.mxu0 0.0
  %3042 = vmatpush1.msra.mxu0 %v3017
  %3043 = vmatprep.subr.mxu0 0.0
  %3044 = vmatpush1.msra.mxu0 %v3018
  %3045 = vmatprep.subr.mxu0 0.0
  %3046 = vmatpush1.msra.mxu0 %v3019
  %3047 = vmatprep.subr.mxu0 0.0
  %3048 = vmatpush1.msra.mxu0 %v3020
  %3049 = vmatprep.subr.mxu0 0.0
  %3050 = vmatpush1.msra.mxu0 %v3021
  %3051 = vmatprep.subr.mxu0 0.0
  %3052 = vmatpush1.msra.mxu0 %v3022
  %3053 = vmatprep.subr.mxu0 0.0
  %3054 = vmatpush1.msra.mxu0 %v3023
  %3055 = vmatprep.subr.mxu0 0.0
  %3056 = vmatpush1.msra.mxu0 %v3024
  %3057 = vmatprep.subr.mxu0 0.0
  %3058 = vmatpush1.msra.mxu0 0.0
  %3059 = vmatprep.subr.mxu0 0.0
  %3060 = vmatpush1.msra.mxu0 0.0
  %3061 = vmatprep.subr.mxu0 0.0
  %3062 = vmatpush1.msra.mxu0 0.0
  %3063 = vmatprep.subr.mxu0 0.0
  %3064 = vmatpush1.msra.mxu0 0.0
  %3065 = vmatprep.subr.mxu0 0.0
  %3066 = vmatpush1.msra.mxu0 0.0
  %3067 = vmatprep.subr.mxu0 0.0
  %3068 = vmatpush1.msra.mxu0 0.0
  %3069 = vmatprep.subr.mxu0 0.0
  %3070 = vmatpush1.msra.mxu0 0.0
  %3071 = vmatprep.subr.mxu0 0.0
  %3072 = vmatpush1.msra.mxu0 0.0
  %3073 = vmatprep.subr.mxu0 0.0
  %3074 = vmatpush1.msra.mxu0 0.0
  %3075 = vmatprep.subr.mxu0 0.0
  %3076 = vmatpush1.msra.mxu0 0.0
  %3077 = vmatprep.subr.mxu0 0.0
  %3078 = vmatpush1.msra.mxu0 0.0
  %3079 = vmatprep.subr.mxu0 0.0
  %3080 = vmatpush1.msra.mxu0 0.0
  %3081 = vmatprep.subr.mxu0 0.0
  %3082 = vmatpush1.msra.mxu0 0.0
  %3083 = vmatprep.subr.mxu0 0.0
  %3084 = vmatpush1.msra.mxu0 0.0
  %3085 = vmatprep.subr.mxu0 0.0
  %3086 = vmatpush1.msra.mxu0 0.0
  %3087 = vmatprep.subr.mxu0 0.0
  %3088 = vmatpush1.msra.mxu0 0.0
  %3089 = vmatprep.mubr.f32.mxu0 0.0
  %3090 = vmatmul.mubr.f32.gmra.mrb[0].mxu0 %v2990
  %v3091 = vpop.f32.mrb[0].mxu0
  %v3092 = vadd.f32 0.0, %v3091
  %v3093 = vpop.f32.mrb[0].mxu0
  %3094 = vmatprep.mubr.f32.mxu0 0.0
  %3095 = vmatmul.mubr.f32.gmra.mrb[0].mxu0 %v2991
  %v3096 = vpop.f32.mrb[0].mxu0
  %v3097 = vadd.f32 0.0, %v3096
  %v3098 = vpop.f32.mrb[0].mxu0
  %3099 = vmatprep.mubr.f32.mxu0 0.0
  %3100 = vmatmul.mubr.f32.gmra.mrb[0].mxu0 %v2992
  %v3101 = vpop.f32.mrb[0].mxu0
  %v3102 = vadd.f32 0.0, %v3101
  %v3103 = vpop.f32.mrb[0].mxu0
  %3104 = vmatprep.mubr.f32.mxu0 0.0
  %3105 = vmatmul.mubr.f32.gmra.mrb[0].mxu0 %v2993
  %v3106 = vpop.f32.mrb[0].mxu0
  %v3107 = vadd.f32 0.0, %v3106
  %v3108 = vpop.f32.mrb[0].mxu0
  %3109 = vmatprep.mubr.f32.mxu0 0.0
  %3110 = vmatmul.mubr.f32.gmra.mrb[0].mxu0 %v2994
  %v3111 = vpop.f32.mrb[0].mxu0
  %v3112 = vadd.f32 0.0, %v3111
  %v3113 = vpop.f32.mrb[0].mxu0
  %3114 = vmatprep.mubr.f32.mxu0 0.0
  %3115 = vmatmul.mubr.f32.gmra.mrb[0].mxu0 %v2995
  %v3116 = vpop.f32.mrb[0].mxu0
  %v3117 = vadd.f32 0.0, %v3116
  %v3118 = vpop.f32.mrb[0].mxu0
  %3119 = vmatprep.mubr.f32.mxu0 0.0
  %3120 = vmatmul.mubr.f32.gmra.mrb[0].mxu0 %v2996
  %v3121 = vpop.f32.mrb[0].mxu0
  %v3122 = vadd.f32 0.0, %v3121
  %v3123 = vpop.f32.mrb[0].mxu0
  %3124 = vmatprep.mubr.f32.mxu0 0.0
  %3125 = vmatmul.mubr.f32.gmra.mrb[0].mxu0 %v2997
  %v3126 = vpop.f32.mrb[0].mxu0
  %v3127 = vadd.f32 0.0, %v3126
  %v3128 = vpop.f32.mrb[0].mxu0
  %3129 = vmatprep.mubr.f32.mxu0 0.0
  %3130 = vmatmul.mubr.f32.gmra.mrb[0].mxu0 %v2998
  %v3131 = vpop.f32.mrb[0].mxu0
  %v3132 = vadd.f32 0.0, %v3131
  %v3133 = vpop.f32.mrb[0].mxu0
  %3134 = vmatprep.mubr.f32.mxu0 0.0
  %3135 = vmatmul.mubr.f32.gmra.mrb[0].mxu0 %v2999
  %v3136 = vpop.f32.mrb[0].mxu0
  %v3137 = vadd.f32 0.0, %v3136
  %v3138 = vpop.f32.mrb[0].mxu0
  %3139 = vmatprep.mubr.f32.mxu0 0.0
  %3140 = vmatmul.mubr.f32.gmra.mrb[0].mxu0 %v3000
  %v3141 = vpop.f32.mrb[0].mxu0
  %v3142 = vadd.f32 0.0, %v3141
  %v3143 = vpop.f32.mrb[0].mxu0
  %3144 = vmatprep.mubr.f32.mxu0 0.0
  %3145 = vmatmul.mubr.f32.gmra.mrb[0].mxu0 %v3001
  %v3146 = vpop.f32.mrb[0].mxu0
  %v3147 = vadd.f32 0.0, %v3146
  %v3148 = vpop.f32.mrb[0].mxu0
  %3149 = vmatprep.mubr.f32.mxu0 0.0
  %3150 = vmatmul.mubr.f32.gmra.mrb[0].mxu0 %v3002
  %v3151 = vpop.f32.mrb[0].mxu0
  %v3152 = vadd.f32 0.0, %v3151
  %v3153 = vpop.f32.mrb[0].mxu0
  %3154 = vmatprep.mubr.f32.mxu0 0.0
  %3155 = vmatmul.mubr.f32.gmra.mrb[0].mxu0 %v3003
  %v3156 = vpop.f32.mrb[0].mxu0
  %v3157 = vadd.f32 0.0, %v3156
  %v3158 = vpop.f32.mrb[0].mxu0
  %3159 = vmatprep.mubr.f32.mxu0 0.0
  %3160 = vmatmul.mubr.f32.gmra.mrb[0].mxu0 %v3004
  %v3161 = vpop.f32.mrb[0].mxu0
  %v3162 = vadd.f32 0.0, %v3161
  %v3163 = vpop.f32.mrb[0].mxu0
  %3164 = vmatprep.mubr.f32.mxu0 0.0
  %3165 = vmatmul.mubr.f32.gmra.mrb[0].mxu0 %v3005
  %v3166 = vpop.f32.mrb[0].mxu0
  %v3167 = vadd.f32 0.0, %v3166
  %v3168 = vpop.f32.mrb[0].mxu0
  %3169 = vmatprep.mubr.f32.mxu0 0.0
  %3170 = vmatmul.mubr.f32.gmra.mrb[0].mxu0 %v3006
  %v3171 = vpop.f32.mrb[0].mxu0
  %v3172 = vadd.f32 0.0, %v3171
  %v3173 = vpop.f32.mrb[0].mxu0
  %3174 = vmatprep.mubr.f32.mxu0 0.0
  %3175 = vmatmul.mubr.f32.gmra.mrb[0].mxu0 %v3007
  %v3176 = vpop.f32.mrb[0].mxu0
  %v3177 = vadd.f32 0.0, %v3176
  %v3178 = vpop.f32.mrb[0].mxu0
  %3179 = vdwg.mxu0
  %v3180 = vadd.f32 %v2972, %v3092
  %v3181 = vadd.f32 %v2973, %v3097
  %v3182 = vadd.f32 %v2974, %v3102
  %v3183 = vadd.f32 %v2975, %v3107
  %v3184 = vadd.f32 %v2976, %v3112
  %v3185 = vadd.f32 %v2977, %v3117
  %v3186 = vadd.f32 %v2978, %v3122
  %v3187 = vadd.f32 %v2979, %v3127
  %v3188 = vadd.f32 %v2980, %v3132
  %v3189 = vadd.f32 %v2981, %v3137
  %v3190 = vadd.f32 %v2982, %v3142
  %v3191 = vadd.f32 %v2983, %v3147
  %v3192 = vadd.f32 %v2984, %v3152
  %v3193 = vadd.f32 %v2985, %v3157
  %v3194 = vadd.f32 %v2986, %v3162
  %v3195 = vadd.f32 %v2987, %v3167
  %v3196 = vadd.f32 %v2988, %v3172
  %v3197 = vadd.f32 %v2989, %v3177
  %v3198 = vld [vmem:[#allocation2 + $0x146] sm:$0xff]
  %v3199 = vld [vmem:[#allocation2 + $0x14e] sm:$0xff]
  %v3200 = vld [vmem:[#allocation2 + $0x156] sm:$0xff]
  %v3201 = vld [vmem:[#allocation2 + $0x15e] sm:$0xff]
  %v3202 = vld [vmem:[#allocation2 + $0x166] sm:$0xff]
  %v3203 = vld [vmem:[#allocation2 + $0x16e] sm:$0xff]
  %v3204 = vld [vmem:[#allocation2 + $0x176] sm:$0xff]
  %v3205 = vld [vmem:[#allocation2 + $0x17e] sm:$0xff]
  %v3206 = vld [vmem:[#allocation2 + $0x186] sm:$0xff]
  %v3207 = vld [vmem:[#allocation2 + $0x18e] sm:$0xff]
  %v3208 = vld [vmem:[#allocation2 + $0x196] sm:$0xff]
  %v3209 = vld [vmem:[#allocation2 + $0x19e] sm:$0xff]
  %v3210 = vld [vmem:[#allocation2 + $0x1a6] sm:$0xff]
  %v3211 = vld [vmem:[#allocation2 + $0x1ae] sm:$0xff]
  %v3212 = vld [vmem:[#allocation2 + $0x1b6] sm:$0xff]
  %v3213 = vld [vmem:[#allocation2 + $0x1be] sm:$0xff]
  %v3214 = vld [vmem:[#allocation2 + $0x1c6] sm:$0xff]
  %v3215 = vld [vmem:[#allocation2 + $0x1ce] sm:$0x3f]
  %s3216 = scalar_lea.vmem %s2, 1280
  %v3217 = vld [vmem:[%s3216] sm:$0xff]
  %v3218 = vld [vmem:[%s3216 + $0x8] sm:$0xff]
  %v3219 = vld [vmem:[%s3216 + $0x10] sm:$0xff]
  %v3220 = vld [vmem:[%s3216 + $0x18] sm:$0xff]
  %v3221 = vld [vmem:[%s3216 + $0x20] sm:$0xff]
  %v3222 = vld [vmem:[%s3216 + $0x28] sm:$0xff]
  %v3223 = vld [vmem:[%s3216 + $0x30] sm:$0xff]
  %v3224 = vld [vmem:[%s3216 + $0x38] sm:$0xff]
  %v3225 = vld [vmem:[%s3216 + $0x40] sm:$0xff]
  %v3226 = vld [vmem:[%s3216 + $0x48] sm:$0xff]
  %v3227 = vld [vmem:[%s3216 + $0x50] sm:$0xff]
  %v3228 = vld [vmem:[%s3216 + $0x58] sm:$0xff]
  %v3229 = vld [vmem:[%s3216 + $0x60] sm:$0xff]
  %v3230 = vld [vmem:[%s3216 + $0x68] sm:$0xff]
  %v3231 = vld [vmem:[%s3216 + $0x70] sm:$0xff]
  %v3232 = vld [vmem:[%s3216 + $0x78] sm:$0xff]
  %3233 = vmatprep.subr.mxu0 0.0
  %3234 = vmatpush1.msra.mxu0 %v3217
  %3235 = vmatprep.subr.mxu0 0.0
  %3236 = vmatpush1.msra.mxu0 %v3218
  %3237 = vmatprep.subr.mxu0 0.0
  %3238 = vmatpush1.msra.mxu0 %v3219
  %3239 = vmatprep.subr.mxu0 0.0
  %3240 = vmatpush1.msra.mxu0 %v3220
  %3241 = vmatprep.subr.mxu0 0.0
  %3242 = vmatpush1.msra.mxu0 %v3221
  %3243 = vmatprep.subr.mxu0 0.0
  %3244 = vmatpush1.msra.mxu0 %v3222
  %3245 = vmatprep.subr.mxu0 0.0
  %3246 = vmatpush1.msra.mxu0 %v3223
  %3247 = vmatprep.subr.mxu0 0.0
  %3248 = vmatpush1.msra.mxu0 %v3224
  %3249 = vmatprep.subr.mxu0 0.0
  %3250 = vmatpush1.msra.mxu0 %v3225
  %3251 = vmatprep.subr.mxu0 0.0
  %3252 = vmatpush1.msra.mxu0 %v3226
  %3253 = vmatprep.subr.mxu0 0.0
  %3254 = vmatpush1.msra.mxu0 %v3227
  %3255 = vmatprep.subr.mxu0 0.0
  %3256 = vmatpush1.msra.mxu0 %v3228
  %3257 = vmatprep.subr.mxu0 0.0
  %3258 = vmatpush1.msra.mxu0 %v3229
  %3259 = vmatprep.subr.mxu0 0.0
  %3260 = vmatpush1.msra.mxu0 %v3230
  %3261 = vmatprep.subr.mxu0 0.0
  %3262 = vmatpush1.msra.mxu0 %v3231
  %3263 = vmatprep.subr.mxu0 0.0
  %3264 = vmatpush1.msra.mxu0 %v3232
  %3265 = vmatprep.subr.mxu0 0.0
  %3266 = vmatpush1.msra.mxu0 0.0
  %3267 = vmatprep.subr.mxu0 0.0
  %3268 = vmatpush1.msra.mxu0 0.0
  %3269 = vmatprep.subr.mxu0 0.0
  %3270 = vmatpush1.msra.mxu0 0.0
  %3271 = vmatprep.subr.mxu0 0.0
  %3272 = vmatpush1.msra.mxu0 0.0
  %3273 = vmatprep.subr.mxu0 0.0
  %3274 = vmatpush1.msra.mxu0 0.0
  %3275 = vmatprep.subr.mxu0 0.0
  %3276 = vmatpush1.msra.mxu0 0.0
  %3277 = vmatprep.subr.mxu0 0.0
  %3278 = vmatpush1.msra.mxu0 0.0
  %3279 = vmatprep.subr.mxu0 0.0
  %3280 = vmatpush1.msra.mxu0 0.0
  %3281 = vmatprep.subr.mxu0 0.0
  %3282 = vmatpush1.msra.mxu0 0.0
  %3283 = vmatprep.subr.mxu0 0.0
  %3284 = vmatpush1.msra.mxu0 0.0
  %3285 = vmatprep.subr.mxu0 0.0
  %3286 = vmatpush1.msra.mxu0 0.0
  %3287 = vmatprep.subr.mxu0 0.0
  %3288 = vmatpush1.msra.mxu0 0.0
  %3289 = vmatprep.subr.mxu0 0.0
  %3290 = vmatpush1.msra.mxu0 0.0
  %3291 = vmatprep.subr.mxu0 0.0
  %3292 = vmatpush1.msra.mxu0 0.0
  %3293 = vmatprep.subr.mxu0 0.0
  %3294 = vmatpush1.msra.mxu0 0.0
  %3295 = vmatprep.subr.mxu0 0.0
  %3296 = vmatpush1.msra.mxu0 0.0
  %3297 = vmatprep.mubr.f32.mxu0 0.0
  %3298 = vmatmul.mubr.f32.gmra.mrb[0].mxu0 %v3198
  %v3299 = vpop.f32.mrb[0].mxu0
  %v3300 = vadd.f32 0.0, %v3299
  %v3301 = vpop.f32.mrb[0].mxu0
  %3302 = vmatprep.mubr.f32.mxu0 0.0
  %3303 = vmatmul.mubr.f32.gmra.mrb[0].mxu0 %v3199
  %v3304 = vpop.f32.mrb[0].mxu0
  %v3305 = vadd.f32 0.0, %v3304
  %v3306 = vpop.f32.mrb[0].mxu0
  %3307 = vmatprep.mubr.f32.mxu0 0.0
  %3308 = vmatmul.mubr.f32.gmra.mrb[0].mxu0 %v3200
  %v3309 = vpop.f32.mrb[0].mxu0
  %v3310 = vadd.f32 0.0, %v3309
  %v3311 = vpop.f32.mrb[0].mxu0
  %3312 = vmatprep.mubr.f32.mxu0 0.0
  %3313 = vmatmul.mubr.f32.gmra.mrb[0].mxu0 %v3201
  %v3314 = vpop.f32.mrb[0].mxu0
  %v3315 = vadd.f32 0.0, %v3314
  %v3316 = vpop.f32.mrb[0].mxu0
  %3317 = vmatprep.mubr.f32.mxu0 0.0
  %3318 = vmatmul.mubr.f32.gmra.mrb[0].mxu0 %v3202
  %v3319 = vpop.f32.mrb[0].mxu0
  %v3320 = vadd.f32 0.0, %v3319
  %v3321 = vpop.f32.mrb[0].mxu0
  %3322 = vmatprep.mubr.f32.mxu0 0.0
  %3323 = vmatmul.mubr.f32.gmra.mrb[0].mxu0 %v3203
  %v3324 = vpop.f32.mrb[0].mxu0
  %v3325 = vadd.f32 0.0, %v3324
  %v3326 = vpop.f32.mrb[0].mxu0
  %3327 = vmatprep.mubr.f32.mxu0 0.0
  %3328 = vmatmul.mubr.f32.gmra.mrb[0].mxu0 %v3204
  %v3329 = vpop.f32.mrb[0].mxu0
  %v3330 = vadd.f32 0.0, %v3329
  %v3331 = vpop.f32.mrb[0].mxu0
  %3332 = vmatprep.mubr.f32.mxu0 0.0
  %3333 = vmatmul.mubr.f32.gmra.mrb[0].mxu0 %v3205
  %v3334 = vpop.f32.mrb[0].mxu0
  %v3335 = vadd.f32 0.0, %v3334
  %v3336 = vpop.f32.mrb[0].mxu0
  %3337 = vmatprep.mubr.f32.mxu0 0.0
  %3338 = vmatmul.mubr.f32.gmra.mrb[0].mxu0 %v3206
  %v3339 = vpop.f32.mrb[0].mxu0
  %v3340 = vadd.f32 0.0, %v3339
  %v3341 = vpop.f32.mrb[0].mxu0
  %3342 = vmatprep.mubr.f32.mxu0 0.0
  %3343 = vmatmul.mubr.f32.gmra.mrb[0].mxu0 %v3207
  %v3344 = vpop.f32.mrb[0].mxu0
  %v3345 = vadd.f32 0.0, %v3344
  %v3346 = vpop.f32.mrb[0].mxu0
  %3347 = vmatprep.mubr.f32.mxu0 0.0
  %3348 = vmatmul.mubr.f32.gmra.mrb[0].mxu0 %v3208
  %v3349 = vpop.f32.mrb[0].mxu0
  %v3350 = vadd.f32 0.0, %v3349
  %v3351 = vpop.f32.mrb[0].mxu0
  %3352 = vmatprep.mubr.f32.mxu0 0.0
  %3353 = vmatmul.mubr.f32.gmra.mrb[0].mxu0 %v3209
  %v3354 = vpop.f32.mrb[0].mxu0
  %v3355 = vadd.f32 0.0, %v3354
  %v3356 = vpop.f32.mrb[0].mxu0
  %3357 = vmatprep.mubr.f32.mxu0 0.0
  %3358 = vmatmul.mubr.f32.gmra.mrb[0].mxu0 %v3210
  %v3359 = vpop.f32.mrb[0].mxu0
  %v3360 = vadd.f32 0.0, %v3359
  %v3361 = vpop.f32.mrb[0].mxu0
  %3362 = vmatprep.mubr.f32.mxu0 0.0
  %3363 = vmatmul.mubr.f32.gmra.mrb[0].mxu0 %v3211
  %v3364 = vpop.f32.mrb[0].mxu0
  %v3365 = vadd.f32 0.0, %v3364
  %v3366 = vpop.f32.mrb[0].mxu0
  %3367 = vmatprep.mubr.f32.mxu0 0.0
  %3368 = vmatmul.mubr.f32.gmra.mrb[0].mxu0 %v3212
  %v3369 = vpop.f32.mrb[0].mxu0
  %v3370 = vadd.f32 0.0, %v3369
  %v3371 = vpop.f32.mrb[0].mxu0
  %3372 = vmatprep.mubr.f32.mxu0 0.0
  %3373 = vmatmul.mubr.f32.gmra.mrb[0].mxu0 %v3213
  %v3374 = vpop.f32.mrb[0].mxu0
  %v3375 = vadd.f32 0.0, %v3374
  %v3376 = vpop.f32.mrb[0].mxu0
  %3377 = vmatprep.mubr.f32.mxu0 0.0
  %3378 = vmatmul.mubr.f32.gmra.mrb[0].mxu0 %v3214
  %v3379 = vpop.f32.mrb[0].mxu0
  %v3380 = vadd.f32 0.0, %v3379
  %v3381 = vpop.f32.mrb[0].mxu0
  %3382 = vmatprep.mubr.f32.mxu0 0.0
  %3383 = vmatmul.mubr.f32.gmra.mrb[0].mxu0 %v3215
  %v3384 = vpop.f32.mrb[0].mxu0
  %v3385 = vadd.f32 0.0, %v3384
  %v3386 = vpop.f32.mrb[0].mxu0
  %3387 = vdwg.mxu0
  %v3388 = vadd.f32 %v3180, %v3300
  %v3389 = vadd.f32 %v3181, %v3305
  %v3390 = vadd.f32 %v3182, %v3310
  %v3391 = vadd.f32 %v3183, %v3315
  %v3392 = vadd.f32 %v3184, %v3320
  %v3393 = vadd.f32 %v3185, %v3325
  %v3394 = vadd.f32 %v3186, %v3330
  %v3395 = vadd.f32 %v3187, %v3335
  %v3396 = vadd.f32 %v3188, %v3340
  %v3397 = vadd.f32 %v3189, %v3345
  %v3398 = vadd.f32 %v3190, %v3350
  %v3399 = vadd.f32 %v3191, %v3355
  %v3400 = vadd.f32 %v3192, %v3360
  %v3401 = vadd.f32 %v3193, %v3365
  %v3402 = vadd.f32 %v3194, %v3370
  %v3403 = vadd.f32 %v3195, %v3375
  %v3404 = vadd.f32 %v3196, %v3380
  %v3405 = vadd.f32 %v3197, %v3385
  %v3406 = vld [vmem:[#allocation2 + $0x14d] sm:$0xff]
  %v3407 = vld [vmem:[#allocation2 + $0x155] sm:$0xff]
  %v3408 = vld [vmem:[#allocation2 + $0x15d] sm:$0xff]
  %v3409 = vld [vmem:[#allocation2 + $0x165] sm:$0xff]
  %v3410 = vld [vmem:[#allocation2 + $0x16d] sm:$0xff]
  %v3411 = vld [vmem:[#allocation2 + $0x175] sm:$0xff]
  %v3412 = vld [vmem:[#allocation2 + $0x17d] sm:$0xff]
  %v3413 = vld [vmem:[#allocation2 + $0x185] sm:$0xff]
  %v3414 = vld [vmem:[#allocation2 + $0x18d] sm:$0xff]
  %v3415 = vld [vmem:[#allocation2 + $0x195] sm:$0xff]
  %v3416 = vld [vmem:[#allocation2 + $0x19d] sm:$0xff]
  %v3417 = vld [vmem:[#allocation2 + $0x1a5] sm:$0xff]
  %v3418 = vld [vmem:[#allocation2 + $0x1ad] sm:$0xff]
  %v3419 = vld [vmem:[#allocation2 + $0x1b5] sm:$0xff]
  %v3420 = vld [vmem:[#allocation2 + $0x1bd] sm:$0xff]
  %v3421 = vld [vmem:[#allocation2 + $0x1c5] sm:$0xff]
  %v3422 = vld [vmem:[#allocation2 + $0x1cd] sm:$0xff]
  %v3423 = vld [vmem:[#allocation2 + $0x1d5] sm:$0x3f]
  %s3424 = scalar_lea.vmem %s2, 1408
  %v3425 = vld [vmem:[%s3424] sm:$0xff]
  %v3426 = vld [vmem:[%s3424 + $0x8] sm:$0xff]
  %v3427 = vld [vmem:[%s3424 + $0x10] sm:$0xff]
  %v3428 = vld [vmem:[%s3424 + $0x18] sm:$0xff]
  %v3429 = vld [vmem:[%s3424 + $0x20] sm:$0xff]
  %v3430 = vld [vmem:[%s3424 + $0x28] sm:$0xff]
  %v3431 = vld [vmem:[%s3424 + $0x30] sm:$0xff]
  %v3432 = vld [vmem:[%s3424 + $0x38] sm:$0xff]
  %v3433 = vld [vmem:[%s3424 + $0x40] sm:$0xff]
  %v3434 = vld [vmem:[%s3424 + $0x48] sm:$0xff]
  %v3435 = vld [vmem:[%s3424 + $0x50] sm:$0xff]
  %v3436 = vld [vmem:[%s3424 + $0x58] sm:$0xff]
  %v3437 = vld [vmem:[%s3424 + $0x60] sm:$0xff]
  %v3438 = vld [vmem:[%s3424 + $0x68] sm:$0xff]
  %v3439 = vld [vmem:[%s3424 + $0x70] sm:$0xff]
  %v3440 = vld [vmem:[%s3424 + $0x78] sm:$0xff]
  %3441 = vmatprep.subr.mxu0 0.0
  %3442 = vmatpush1.msra.mxu0 %v3425
  %3443 = vmatprep.subr.mxu0 0.0
  %3444 = vmatpush1.msra.mxu0 %v3426
  %3445 = vmatprep.subr.mxu0 0.0
  %3446 = vmatpush1.msra.mxu0 %v3427
  %3447 = vmatprep.subr.mxu0 0.0
  %3448 = vmatpush1.msra.mxu0 %v3428
  %3449 = vmatprep.subr.mxu0 0.0
  %3450 = vmatpush1.msra.mxu0 %v3429
  %3451 = vmatprep.subr.mxu0 0.0
  %3452 = vmatpush1.msra.mxu0 %v3430
  %3453 = vmatprep.subr.mxu0 0.0
  %3454 = vmatpush1.msra.mxu0 %v3431
  %3455 = vmatprep.subr.mxu0 0.0
  %3456 = vmatpush1.msra.mxu0 %v3432
  %3457 = vmatprep.subr.mxu0 0.0
  %3458 = vmatpush1.msra.mxu0 %v3433
  %3459 = vmatprep.subr.mxu0 0.0
  %3460 = vmatpush1.msra.mxu0 %v3434
  %3461 = vmatprep.subr.mxu0 0.0
  %3462 = vmatpush1.msra.mxu0 %v3435
  %3463 = vmatprep.subr.mxu0 0.0
  %3464 = vmatpush1.msra.mxu0 %v3436
  %3465 = vmatprep.subr.mxu0 0.0
  %3466 = vmatpush1.msra.mxu0 %v3437
  %3467 = vmatprep.subr.mxu0 0.0
  %3468 = vmatpush1.msra.mxu0 %v3438
  %3469 = vmatprep.subr.mxu0 0.0
  %3470 = vmatpush1.msra.mxu0 %v3439
  %3471 = vmatprep.subr.mxu0 0.0
  %3472 = vmatpush1.msra.mxu0 %v3440
  %3473 = vmatprep.subr.mxu0 0.0
  %3474 = vmatpush1.msra.mxu0 0.0
  %3475 = vmatprep.subr.mxu0 0.0
  %3476 = vmatpush1.msra.mxu0 0.0
  %3477 = vmatprep.subr.mxu0 0.0
  %3478 = vmatpush1.msra.mxu0 0.0
  %3479 = vmatprep.subr.mxu0 0.0
  %3480 = vmatpush1.msra.mxu0 0.0
  %3481 = vmatprep.subr.mxu0 0.0
  %3482 = vmatpush1.msra.mxu0 0.0
  %3483 = vmatprep.subr.mxu0 0.0
  %3484 = vmatpush1.msra.mxu0 0.0
  %3485 = vmatprep.subr.mxu0 0.0
  %3486 = vmatpush1.msra.mxu0 0.0
  %3487 = vmatprep.subr.mxu0 0.0
  %3488 = vmatpush1.msra.mxu0 0.0
  %3489 = vmatprep.subr.mxu0 0.0
  %3490 = vmatpush1.msra.mxu0 0.0
  %3491 = vmatprep.subr.mxu0 0.0
  %3492 = vmatpush1.msra.mxu0 0.0
  %3493 = vmatprep.subr.mxu0 0.0
  %3494 = vmatpush1.msra.mxu0 0.0
  %3495 = vmatprep.subr.mxu0 0.0
  %3496 = vmatpush1.msra.mxu0 0.0
  %3497 = vmatprep.subr.mxu0 0.0
  %3498 = vmatpush1.msra.mxu0 0.0
  %3499 = vmatprep.subr.mxu0 0.0
  %3500 = vmatpush1.msra.mxu0 0.0
  %3501 = vmatprep.subr.mxu0 0.0
  %3502 = vmatpush1.msra.mxu0 0.0
  %3503 = vmatprep.subr.mxu0 0.0
  %3504 = vmatpush1.msra.mxu0 0.0
  %3505 = vmatprep.mubr.f32.mxu0 0.0
  %3506 = vmatmul.mubr.f32.gmra.mrb[0].mxu0 %v3406
  %v3507 = vpop.f32.mrb[0].mxu0
  %v3508 = vadd.f32 0.0, %v3507
  %v3509 = vpop.f32.mrb[0].mxu0
  %3510 = vmatprep.mubr.f32.mxu0 0.0
  %3511 = vmatmul.mubr.f32.gmra.mrb[0].mxu0 %v3407
  %v3512 = vpop.f32.mrb[0].mxu0
  %v3513 = vadd.f32 0.0, %v3512
  %v3514 = vpop.f32.mrb[0].mxu0
  %3515 = vmatprep.mubr.f32.mxu0 0.0
  %3516 = vmatmul.mubr.f32.gmra.mrb[0].mxu0 %v3408
  %v3517 = vpop.f32.mrb[0].mxu0
  %v3518 = vadd.f32 0.0, %v3517
  %v3519 = vpop.f32.mrb[0].mxu0
  %3520 = vmatprep.mubr.f32.mxu0 0.0
  %3521 = vmatmul.mubr.f32.gmra.mrb[0].mxu0 %v3409
  %v3522 = vpop.f32.mrb[0].mxu0
  %v3523 = vadd.f32 0.0, %v3522
  %v3524 = vpop.f32.mrb[0].mxu0
  %3525 = vmatprep.mubr.f32.mxu0 0.0
  %3526 = vmatmul.mubr.f32.gmra.mrb[0].mxu0 %v3410
  %v3527 = vpop.f32.mrb[0].mxu0
  %v3528 = vadd.f32 0.0, %v3527
  %v3529 = vpop.f32.mrb[0].mxu0
  %3530 = vmatprep.mubr.f32.mxu0 0.0
  %3531 = vmatmul.mubr.f32.gmra.mrb[0].mxu0 %v3411
  %v3532 = vpop.f32.mrb[0].mxu0
  %v3533 = vadd.f32 0.0, %v3532
  %v3534 = vpop.f32.mrb[0].mxu0
  %3535 = vmatprep.mubr.f32.mxu0 0.0
  %3536 = vmatmul.mubr.f32.gmra.mrb[0].mxu0 %v3412
  %v3537 = vpop.f32.mrb[0].mxu0
  %v3538 = vadd.f32 0.0, %v3537
  %v3539 = vpop.f32.mrb[0].mxu0
  %3540 = vmatprep.mubr.f32.mxu0 0.0
  %3541 = vmatmul.mubr.f32.gmra.mrb[0].mxu0 %v3413
  %v3542 = vpop.f32.mrb[0].mxu0
  %v3543 = vadd.f32 0.0, %v3542
  %v3544 = vpop.f32.mrb[0].mxu0
  %3545 = vmatprep.mubr.f32.mxu0 0.0
  %3546 = vmatmul.mubr.f32.gmra.mrb[0].mxu0 %v3414
  %v3547 = vpop.f32.mrb[0].mxu0
  %v3548 = vadd.f32 0.0, %v3547
  %v3549 = vpop.f32.mrb[0].mxu0
  %3550 = vmatprep.mubr.f32.mxu0 0.0
  %3551 = vmatmul.mubr.f32.gmra.mrb[0].mxu0 %v3415
  %v3552 = vpop.f32.mrb[0].mxu0
  %v3553 = vadd.f32 0.0, %v3552
  %v3554 = vpop.f32.mrb[0].mxu0
  %3555 = vmatprep.mubr.f32.mxu0 0.0
  %3556 = vmatmul.mubr.f32.gmra.mrb[0].mxu0 %v3416
  %v3557 = vpop.f32.mrb[0].mxu0
  %v3558 = vadd.f32 0.0, %v3557
  %v3559 = vpop.f32.mrb[0].mxu0
  %3560 = vmatprep.mubr.f32.mxu0 0.0
  %3561 = vmatmul.mubr.f32.gmra.mrb[0].mxu0 %v3417
  %v3562 = vpop.f32.mrb[0].mxu0
  %v3563 = vadd.f32 0.0, %v3562
  %v3564 = vpop.f32.mrb[0].mxu0
  %3565 = vmatprep.mubr.f32.mxu0 0.0
  %3566 = vmatmul.mubr.f32.gmra.mrb[0].mxu0 %v3418
  %v3567 = vpop.f32.mrb[0].mxu0
  %v3568 = vadd.f32 0.0, %v3567
  %v3569 = vpop.f32.mrb[0].mxu0
  %3570 = vmatprep.mubr.f32.mxu0 0.0
  %3571 = vmatmul.mubr.f32.gmra.mrb[0].mxu0 %v3419
  %v3572 = vpop.f32.mrb[0].mxu0
  %v3573 = vadd.f32 0.0, %v3572
  %v3574 = vpop.f32.mrb[0].mxu0
  %3575 = vmatprep.mubr.f32.mxu0 0.0
  %3576 = vmatmul.mubr.f32.gmra.mrb[0].mxu0 %v3420
  %v3577 = vpop.f32.mrb[0].mxu0
  %v3578 = vadd.f32 0.0, %v3577
  %v3579 = vpop.f32.mrb[0].mxu0
  %3580 = vmatprep.mubr.f32.mxu0 0.0
  %3581 = vmatmul.mubr.f32.gmra.mrb[0].mxu0 %v3421
  %v3582 = vpop.f32.mrb[0].mxu0
  %v3583 = vadd.f32 0.0, %v3582
  %v3584 = vpop.f32.mrb[0].mxu0
  %3585 = vmatprep.mubr.f32.mxu0 0.0
  %3586 = vmatmul.mubr.f32.gmra.mrb[0].mxu0 %v3422
  %v3587 = vpop.f32.mrb[0].mxu0
  %v3588 = vadd.f32 0.0, %v3587
  %v3589 = vpop.f32.mrb[0].mxu0
  %3590 = vmatprep.mubr.f32.mxu0 0.0
  %3591 = vmatmul.mubr.f32.gmra.mrb[0].mxu0 %v3423
  %v3592 = vpop.f32.mrb[0].mxu0
  %v3593 = vadd.f32 0.0, %v3592
  %v3594 = vpop.f32.mrb[0].mxu0
  %3595 = vdwg.mxu0
  %v3596 = vadd.f32 %v3388, %v3508
  %v3597 = vadd.f32 %v3389, %v3513
  %v3598 = vadd.f32 %v3390, %v3518
  %v3599 = vadd.f32 %v3391, %v3523
  %v3600 = vadd.f32 %v3392, %v3528
  %v3601 = vadd.f32 %v3393, %v3533
  %v3602 = vadd.f32 %v3394, %v3538
  %v3603 = vadd.f32 %v3395, %v3543
  %v3604 = vadd.f32 %v3396, %v3548
  %v3605 = vadd.f32 %v3397, %v3553
  %v3606 = vadd.f32 %v3398, %v3558
  %v3607 = vadd.f32 %v3399, %v3563
  %v3608 = vadd.f32 %v3400, %v3568
  %v3609 = vadd.f32 %v3401, %v3573
  %v3610 = vadd.f32 %v3402, %v3578
  %v3611 = vadd.f32 %v3403, %v3583
  %v3612 = vadd.f32 %v3404, %v3588
  %v3613 = vadd.f32 %v3405, %v3593
  %v3614 = vld [vmem:[#allocation2 + $0x14f] sm:$0xff]
  %v3615 = vld [vmem:[#allocation2 + $0x157] sm:$0xff]
  %v3616 = vld [vmem:[#allocation2 + $0x15f] sm:$0xff]
  %v3617 = vld [vmem:[#allocation2 + $0x167] sm:$0xff]
  %v3618 = vld [vmem:[#allocation2 + $0x16f] sm:$0xff]
  %v3619 = vld [vmem:[#allocation2 + $0x177] sm:$0xff]
  %v3620 = vld [vmem:[#allocation2 + $0x17f] sm:$0xff]
  %v3621 = vld [vmem:[#allocation2 + $0x187] sm:$0xff]
  %v3622 = vld [vmem:[#allocation2 + $0x18f] sm:$0xff]
  %v3623 = vld [vmem:[#allocation2 + $0x197] sm:$0xff]
  %v3624 = vld [vmem:[#allocation2 + $0x19f] sm:$0xff]
  %v3625 = vld [vmem:[#allocation2 + $0x1a7] sm:$0xff]
  %v3626 = vld [vmem:[#allocation2 + $0x1af] sm:$0xff]
  %v3627 = vld [vmem:[#allocation2 + $0x1b7] sm:$0xff]
  %v3628 = vld [vmem:[#allocation2 + $0x1bf] sm:$0xff]
  %v3629 = vld [vmem:[#allocation2 + $0x1c7] sm:$0xff]
  %v3630 = vld [vmem:[#allocation2 + $0x1cf] sm:$0xff]
  %v3631 = vld [vmem:[#allocation2 + $0x1d7] sm:$0x3f]
  %s3632 = scalar_lea.vmem %s2, 1536
  %v3633 = vld [vmem:[%s3632] sm:$0xff]
  %v3634 = vld [vmem:[%s3632 + $0x8] sm:$0xff]
  %v3635 = vld [vmem:[%s3632 + $0x10] sm:$0xff]
  %v3636 = vld [vmem:[%s3632 + $0x18] sm:$0xff]
  %v3637 = vld [vmem:[%s3632 + $0x20] sm:$0xff]
  %v3638 = vld [vmem:[%s3632 + $0x28] sm:$0xff]
  %v3639 = vld [vmem:[%s3632 + $0x30] sm:$0xff]
  %v3640 = vld [vmem:[%s3632 + $0x38] sm:$0xff]
  %v3641 = vld [vmem:[%s3632 + $0x40] sm:$0xff]
  %v3642 = vld [vmem:[%s3632 + $0x48] sm:$0xff]
  %v3643 = vld [vmem:[%s3632 + $0x50] sm:$0xff]
  %v3644 = vld [vmem:[%s3632 + $0x58] sm:$0xff]
  %v3645 = vld [vmem:[%s3632 + $0x60] sm:$0xff]
  %v3646 = vld [vmem:[%s3632 + $0x68] sm:$0xff]
  %v3647 = vld [vmem:[%s3632 + $0x70] sm:$0xff]
  %v3648 = vld [vmem:[%s3632 + $0x78] sm:$0xff]
  %3649 = vmatprep.subr.mxu0 0.0
  %3650 = vmatpush1.msra.mxu0 %v3633
  %3651 = vmatprep.subr.mxu0 0.0
  %3652 = vmatpush1.msra.mxu0 %v3634
  %3653 = vmatprep.subr.mxu0 0.0
  %3654 = vmatpush1.msra.mxu0 %v3635
  %3655 = vmatprep.subr.mxu0 0.0
  %3656 = vmatpush1.msra.mxu0 %v3636
  %3657 = vmatprep.subr.mxu0 0.0
  %3658 = vmatpush1.msra.mxu0 %v3637
  %3659 = vmatprep.subr.mxu0 0.0
  %3660 = vmatpush1.msra.mxu0 %v3638
  %3661 = vmatprep.subr.mxu0 0.0
  %3662 = vmatpush1.msra.mxu0 %v3639
  %3663 = vmatprep.subr.mxu0 0.0
  %3664 = vmatpush1.msra.mxu0 %v3640
  %3665 = vmatprep.subr.mxu0 0.0
  %3666 = vmatpush1.msra.mxu0 %v3641
  %3667 = vmatprep.subr.mxu0 0.0
  %3668 = vmatpush1.msra.mxu0 %v3642
  %3669 = vmatprep.subr.mxu0 0.0
  %3670 = vmatpush1.msra.mxu0 %v3643
  %3671 = vmatprep.subr.mxu0 0.0
  %3672 = vmatpush1.msra.mxu0 %v3644
  %3673 = vmatprep.subr.mxu0 0.0
  %3674 = vmatpush1.msra.mxu0 %v3645
  %3675 = vmatprep.subr.mxu0 0.0
  %3676 = vmatpush1.msra.mxu0 %v3646
  %3677 = vmatprep.subr.mxu0 0.0
  %3678 = vmatpush1.msra.mxu0 %v3647
  %3679 = vmatprep.subr.mxu0 0.0
  %3680 = vmatpush1.msra.mxu0 %v3648
  %3681 = vmatprep.subr.mxu0 0.0
  %3682 = vmatpush1.msra.mxu0 0.0
  %3683 = vmatprep.subr.mxu0 0.0
  %3684 = vmatpush1.msra.mxu0 0.0
  %3685 = vmatprep.subr.mxu0 0.0
  %3686 = vmatpush1.msra.mxu0 0.0
  %3687 = vmatprep.subr.mxu0 0.0
  %3688 = vmatpush1.msra.mxu0 0.0
  %3689 = vmatprep.subr.mxu0 0.0
  %3690 = vmatpush1.msra.mxu0 0.0
  %3691 = vmatprep.subr.mxu0 0.0
  %3692 = vmatpush1.msra.mxu0 0.0
  %3693 = vmatprep.subr.mxu0 0.0
  %3694 = vmatpush1.msra.mxu0 0.0
  %3695 = vmatprep.subr.mxu0 0.0
  %3696 = vmatpush1.msra.mxu0 0.0
  %3697 = vmatprep.subr.mxu0 0.0
  %3698 = vmatpush1.msra.mxu0 0.0
  %3699 = vmatprep.subr.mxu0 0.0
  %3700 = vmatpush1.msra.mxu0 0.0
  %3701 = vmatprep.subr.mxu0 0.0
  %3702 = vmatpush1.msra.mxu0 0.0
  %3703 = vmatprep.subr.mxu0 0.0
  %3704 = vmatpush1.msra.mxu0 0.0
  %3705 = vmatprep.subr.mxu0 0.0
  %3706 = vmatpush1.msra.mxu0 0.0
  %3707 = vmatprep.subr.mxu0 0.0
  %3708 = vmatpush1.msra.mxu0 0.0
  %3709 = vmatprep.subr.mxu0 0.0
  %3710 = vmatpush1.msra.mxu0 0.0
  %3711 = vmatprep.subr.mxu0 0.0
  %3712 = vmatpush1.msra.mxu0 0.0
  %3713 = vmatprep.mubr.f32.mxu0 0.0
  %3714 = vmatmul.mubr.f32.gmra.mrb[0].mxu0 %v3614
  %v3715 = vpop.f32.mrb[0].mxu0
  %v3716 = vadd.f32 0.0, %v3715
  %v3717 = vpop.f32.mrb[0].mxu0
  %3718 = vmatprep.mubr.f32.mxu0 0.0
  %3719 = vmatmul.mubr.f32.gmra.mrb[0].mxu0 %v3615
  %v3720 = vpop.f32.mrb[0].mxu0
  %v3721 = vadd.f32 0.0, %v3720
  %v3722 = vpop.f32.mrb[0].mxu0
  %3723 = vmatprep.mubr.f32.mxu0 0.0
  %3724 = vmatmul.mubr.f32.gmra.mrb[0].mxu0 %v3616
  %v3725 = vpop.f32.mrb[0].mxu0
  %v3726 = vadd.f32 0.0, %v3725
  %v3727 = vpop.f32.mrb[0].mxu0
  %3728 = vmatprep.mubr.f32.mxu0 0.0
  %3729 = vmatmul.mubr.f32.gmra.mrb[0].mxu0 %v3617
  %v3730 = vpop.f32.mrb[0].mxu0
  %v3731 = vadd.f32 0.0, %v3730
  %v3732 = vpop.f32.mrb[0].mxu0
  %3733 = vmatprep.mubr.f32.mxu0 0.0
  %3734 = vmatmul.mubr.f32.gmra.mrb[0].mxu0 %v3618
  %v3735 = vpop.f32.mrb[0].mxu0
  %v3736 = vadd.f32 0.0, %v3735
  %v3737 = vpop.f32.mrb[0].mxu0
  %3738 = vmatprep.mubr.f32.mxu0 0.0
  %3739 = vmatmul.mubr.f32.gmra.mrb[0].mxu0 %v3619
  %v3740 = vpop.f32.mrb[0].mxu0
  %v3741 = vadd.f32 0.0, %v3740
  %v3742 = vpop.f32.mrb[0].mxu0
  %3743 = vmatprep.mubr.f32.mxu0 0.0
  %3744 = vmatmul.mubr.f32.gmra.mrb[0].mxu0 %v3620
  %v3745 = vpop.f32.mrb[0].mxu0
  %v3746 = vadd.f32 0.0, %v3745
  %v3747 = vpop.f32.mrb[0].mxu0
  %3748 = vmatprep.mubr.f32.mxu0 0.0
  %3749 = vmatmul.mubr.f32.gmra.mrb[0].mxu0 %v3621
  %v3750 = vpop.f32.mrb[0].mxu0
  %v3751 = vadd.f32 0.0, %v3750
  %v3752 = vpop.f32.mrb[0].mxu0
  %3753 = vmatprep.mubr.f32.mxu0 0.0
  %3754 = vmatmul.mubr.f32.gmra.mrb[0].mxu0 %v3622
  %v3755 = vpop.f32.mrb[0].mxu0
  %v3756 = vadd.f32 0.0, %v3755
  %v3757 = vpop.f32.mrb[0].mxu0
  %3758 = vmatprep.mubr.f32.mxu0 0.0
  %3759 = vmatmul.mubr.f32.gmra.mrb[0].mxu0 %v3623
  %v3760 = vpop.f32.mrb[0].mxu0
  %v3761 = vadd.f32 0.0, %v3760
  %v3762 = vpop.f32.mrb[0].mxu0
  %3763 = vmatprep.mubr.f32.mxu0 0.0
  %3764 = vmatmul.mubr.f32.gmra.mrb[0].mxu0 %v3624
  %v3765 = vpop.f32.mrb[0].mxu0
  %v3766 = vadd.f32 0.0, %v3765
  %v3767 = vpop.f32.mrb[0].mxu0
  %3768 = vmatprep.mubr.f32.mxu0 0.0
  %3769 = vmatmul.mubr.f32.gmra.mrb[0].mxu0 %v3625
  %v3770 = vpop.f32.mrb[0].mxu0
  %v3771 = vadd.f32 0.0, %v3770
  %v3772 = vpop.f32.mrb[0].mxu0
  %3773 = vmatprep.mubr.f32.mxu0 0.0
  %3774 = vmatmul.mubr.f32.gmra.mrb[0].mxu0 %v3626
  %v3775 = vpop.f32.mrb[0].mxu0
  %v3776 = vadd.f32 0.0, %v3775
  %v3777 = vpop.f32.mrb[0].mxu0
  %3778 = vmatprep.mubr.f32.mxu0 0.0
  %3779 = vmatmul.mubr.f32.gmra.mrb[0].mxu0 %v3627
  %v3780 = vpop.f32.mrb[0].mxu0
  %v3781 = vadd.f32 0.0, %v3780
  %v3782 = vpop.f32.mrb[0].mxu0
  %3783 = vmatprep.mubr.f32.mxu0 0.0
  %3784 = vmatmul.mubr.f32.gmra.mrb[0].mxu0 %v3628
  %v3785 = vpop.f32.mrb[0].mxu0
  %v3786 = vadd.f32 0.0, %v3785
  %v3787 = vpop.f32.mrb[0].mxu0
  %3788 = vmatprep.mubr.f32.mxu0 0.0
  %3789 = vmatmul.mubr.f32.gmra.mrb[0].mxu0 %v3629
  %v3790 = vpop.f32.mrb[0].mxu0
  %v3791 = vadd.f32 0.0, %v3790
  %v3792 = vpop.f32.mrb[0].mxu0
  %3793 = vmatprep.mubr.f32.mxu0 0.0
  %3794 = vmatmul.mubr.f32.gmra.mrb[0].mxu0 %v3630
  %v3795 = vpop.f32.mrb[0].mxu0
  %v3796 = vadd.f32 0.0, %v3795
  %v3797 = vpop.f32.mrb[0].mxu0
  %3798 = vmatprep.mubr.f32.mxu0 0.0
  %3799 = vmatmul.mubr.f32.gmra.mrb[0].mxu0 %v3631
  %v3800 = vpop.f32.mrb[0].mxu0
  %v3801 = vadd.f32 0.0, %v3800
  %v3802 = vpop.f32.mrb[0].mxu0
  %3803 = vdwg.mxu0
  %v3804 = vadd.f32 %v3596, %v3716
  %v3805 = vadd.f32 %v3597, %v3721
  %v3806 = vadd.f32 %v3598, %v3726
  %v3807 = vadd.f32 %v3599, %v3731
  %v3808 = vadd.f32 %v3600, %v3736
  %v3809 = vadd.f32 %v3601, %v3741
  %v3810 = vadd.f32 %v3602, %v3746
  %v3811 = vadd.f32 %v3603, %v3751
  %v3812 = vadd.f32 %v3604, %v3756
  %v3813 = vadd.f32 %v3605, %v3761
  %v3814 = vadd.f32 %v3606, %v3766
  %v3815 = vadd.f32 %v3607, %v3771
  %v3816 = vadd.f32 %v3608, %v3776
  %v3817 = vadd.f32 %v3609, %v3781
  %v3818 = vadd.f32 %v3610, %v3786
  %v3819 = vadd.f32 %v3611, %v3791
  %v3820 = vadd.f32 %v3612, %v3796
  %v3821 = vadd.f32 %v3613, %v3801
  %v3822 = vld [vmem:[#allocation2 + $0x1e6] sm:$0xff]
  %v3823 = vld [vmem:[#allocation2 + $0x1ee] sm:$0xff]
  %v3824 = vld [vmem:[#allocation2 + $0x1f6] sm:$0xff]
  %v3825 = vld [vmem:[#allocation2 + $0x1fe] sm:$0xff]
  %v3826 = vld [vmem:[#allocation2 + $0x206] sm:$0xff]
  %v3827 = vld [vmem:[#allocation2 + $0x20e] sm:$0xff]
  %v3828 = vld [vmem:[#allocation2 + $0x216] sm:$0xff]
  %v3829 = vld [vmem:[#allocation2 + $0x21e] sm:$0xff]
  %v3830 = vld [vmem:[#allocation2 + $0x226] sm:$0xff]
  %v3831 = vld [vmem:[#allocation2 + $0x22e] sm:$0xff]
  %v3832 = vld [vmem:[#allocation2 + $0x236] sm:$0xff]
  %v3833 = vld [vmem:[#allocation2 + $0x23e] sm:$0xff]
  %v3834 = vld [vmem:[#allocation2 + $0x246] sm:$0xff]
  %v3835 = vld [vmem:[#allocation2 + $0x24e] sm:$0xff]
  %v3836 = vld [vmem:[#allocation2 + $0x256] sm:$0xff]
  %v3837 = vld [vmem:[#allocation2 + $0x25e] sm:$0xff]
  %v3838 = vld [vmem:[#allocation2 + $0x266] sm:$0xff]
  %v3839 = vld [vmem:[#allocation2 + $0x26e] sm:$0x3f]
  %s3840 = scalar_lea.vmem %s2, 1664
  %v3841 = vld [vmem:[%s3840] sm:$0xff]
  %v3842 = vld [vmem:[%s3840 + $0x8] sm:$0xff]
  %v3843 = vld [vmem:[%s3840 + $0x10] sm:$0xff]
  %v3844 = vld [vmem:[%s3840 + $0x18] sm:$0xff]
  %v3845 = vld [vmem:[%s3840 + $0x20] sm:$0xff]
  %v3846 = vld [vmem:[%s3840 + $0x28] sm:$0xff]
  %v3847 = vld [vmem:[%s3840 + $0x30] sm:$0xff]
  %v3848 = vld [vmem:[%s3840 + $0x38] sm:$0xff]
  %v3849 = vld [vmem:[%s3840 + $0x40] sm:$0xff]
  %v3850 = vld [vmem:[%s3840 + $0x48] sm:$0xff]
  %v3851 = vld [vmem:[%s3840 + $0x50] sm:$0xff]
  %v3852 = vld [vmem:[%s3840 + $0x58] sm:$0xff]
  %v3853 = vld [vmem:[%s3840 + $0x60] sm:$0xff]
  %v3854 = vld [vmem:[%s3840 + $0x68] sm:$0xff]
  %v3855 = vld [vmem:[%s3840 + $0x70] sm:$0xff]
  %v3856 = vld [vmem:[%s3840 + $0x78] sm:$0xff]
  %3857 = vmatprep.subr.mxu0 0.0
  %3858 = vmatpush1.msra.mxu0 %v3841
  %3859 = vmatprep.subr.mxu0 0.0
  %3860 = vmatpush1.msra.mxu0 %v3842
  %3861 = vmatprep.subr.mxu0 0.0
  %3862 = vmatpush1.msra.mxu0 %v3843
  %3863 = vmatprep.subr.mxu0 0.0
  %3864 = vmatpush1.msra.mxu0 %v3844
  %3865 = vmatprep.subr.mxu0 0.0
  %3866 = vmatpush1.msra.mxu0 %v3845
  %3867 = vmatprep.subr.mxu0 0.0
  %3868 = vmatpush1.msra.mxu0 %v3846
  %3869 = vmatprep.subr.mxu0 0.0
  %3870 = vmatpush1.msra.mxu0 %v3847
  %3871 = vmatprep.subr.mxu0 0.0
  %3872 = vmatpush1.msra.mxu0 %v3848
  %3873 = vmatprep.subr.mxu0 0.0
  %3874 = vmatpush1.msra.mxu0 %v3849
  %3875 = vmatprep.subr.mxu0 0.0
  %3876 = vmatpush1.msra.mxu0 %v3850
  %3877 = vmatprep.subr.mxu0 0.0
  %3878 = vmatpush1.msra.mxu0 %v3851
  %3879 = vmatprep.subr.mxu0 0.0
  %3880 = vmatpush1.msra.mxu0 %v3852
  %3881 = vmatprep.subr.mxu0 0.0
  %3882 = vmatpush1.msra.mxu0 %v3853
  %3883 = vmatprep.subr.mxu0 0.0
  %3884 = vmatpush1.msra.mxu0 %v3854
  %3885 = vmatprep.subr.mxu0 0.0
  %3886 = vmatpush1.msra.mxu0 %v3855
  %3887 = vmatprep.subr.mxu0 0.0
  %3888 = vmatpush1.msra.mxu0 %v3856
  %3889 = vmatprep.subr.mxu0 0.0
  %3890 = vmatpush1.msra.mxu0 0.0
  %3891 = vmatprep.subr.mxu0 0.0
  %3892 = vmatpush1.msra.mxu0 0.0
  %3893 = vmatprep.subr.mxu0 0.0
  %3894 = vmatpush1.msra.mxu0 0.0
  %3895 = vmatprep.subr.mxu0 0.0
  %3896 = vmatpush1.msra.mxu0 0.0
  %3897 = vmatprep.subr.mxu0 0.0
  %3898 = vmatpush1.msra.mxu0 0.0
  %3899 = vmatprep.subr.mxu0 0.0
  %3900 = vmatpush1.msra.mxu0 0.0
  %3901 = vmatprep.subr.mxu0 0.0
  %3902 = vmatpush1.msra.mxu0 0.0
  %3903 = vmatprep.subr.mxu0 0.0
  %3904 = vmatpush1.msra.mxu0 0.0
  %3905 = vmatprep.subr.mxu0 0.0
  %3906 = vmatpush1.msra.mxu0 0.0
  %3907 = vmatprep.subr.mxu0 0.0
  %3908 = vmatpush1.msra.mxu0 0.0
  %3909 = vmatprep.subr.mxu0 0.0
  %3910 = vmatpush1.msra.mxu0 0.0
  %3911 = vmatprep.subr.mxu0 0.0
  %3912 = vmatpush1.msra.mxu0 0.0
  %3913 = vmatprep.subr.mxu0 0.0
  %3914 = vmatpush1.msra.mxu0 0.0
  %3915 = vmatprep.subr.mxu0 0.0
  %3916 = vmatpush1.msra.mxu0 0.0
  %3917 = vmatprep.subr.mxu0 0.0
  %3918 = vmatpush1.msra.mxu0 0.0
  %3919 = vmatprep.subr.mxu0 0.0
  %3920 = vmatpush1.msra.mxu0 0.0
  %3921 = vmatprep.mubr.f32.mxu0 0.0
  %3922 = vmatmul.mubr.f32.gmra.mrb[0].mxu0 %v3822
  %v3923 = vpop.f32.mrb[0].mxu0
  %v3924 = vadd.f32 0.0, %v3923
  %v3925 = vpop.f32.mrb[0].mxu0
  %3926 = vmatprep.mubr.f32.mxu0 0.0
  %3927 = vmatmul.mubr.f32.gmra.mrb[0].mxu0 %v3823
  %v3928 = vpop.f32.mrb[0].mxu0
  %v3929 = vadd.f32 0.0, %v3928
  %v3930 = vpop.f32.mrb[0].mxu0
  %3931 = vmatprep.mubr.f32.mxu0 0.0
  %3932 = vmatmul.mubr.f32.gmra.mrb[0].mxu0 %v3824
  %v3933 = vpop.f32.mrb[0].mxu0
  %v3934 = vadd.f32 0.0, %v3933
  %v3935 = vpop.f32.mrb[0].mxu0
  %3936 = vmatprep.mubr.f32.mxu0 0.0
  %3937 = vmatmul.mubr.f32.gmra.mrb[0].mxu0 %v3825
  %v3938 = vpop.f32.mrb[0].mxu0
  %v3939 = vadd.f32 0.0, %v3938
  %v3940 = vpop.f32.mrb[0].mxu0
  %3941 = vmatprep.mubr.f32.mxu0 0.0
  %3942 = vmatmul.mubr.f32.gmra.mrb[0].mxu0 %v3826
  %v3943 = vpop.f32.mrb[0].mxu0
  %v3944 = vadd.f32 0.0, %v3943
  %v3945 = vpop.f32.mrb[0].mxu0
  %3946 = vmatprep.mubr.f32.mxu0 0.0
  %3947 = vmatmul.mubr.f32.gmra.mrb[0].mxu0 %v3827
  %v3948 = vpop.f32.mrb[0].mxu0
  %v3949 = vadd.f32 0.0, %v3948
  %v3950 = vpop.f32.mrb[0].mxu0
  %3951 = vmatprep.mubr.f32.mxu0 0.0
  %3952 = vmatmul.mubr.f32.gmra.mrb[0].mxu0 %v3828
  %v3953 = vpop.f32.mrb[0].mxu0
  %v3954 = vadd.f32 0.0, %v3953
  %v3955 = vpop.f32.mrb[0].mxu0
  %3956 = vmatprep.mubr.f32.mxu0 0.0
  %3957 = vmatmul.mubr.f32.gmra.mrb[0].mxu0 %v3829
  %v3958 = vpop.f32.mrb[0].mxu0
  %v3959 = vadd.f32 0.0, %v3958
  %v3960 = vpop.f32.mrb[0].mxu0
  %3961 = vmatprep.mubr.f32.mxu0 0.0
  %3962 = vmatmul.mubr.f32.gmra.mrb[0].mxu0 %v3830
  %v3963 = vpop.f32.mrb[0].mxu0
  %v3964 = vadd.f32 0.0, %v3963
  %v3965 = vpop.f32.mrb[0].mxu0
  %3966 = vmatprep.mubr.f32.mxu0 0.0
  %3967 = vmatmul.mubr.f32.gmra.mrb[0].mxu0 %v3831
  %v3968 = vpop.f32.mrb[0].mxu0
  %v3969 = vadd.f32 0.0, %v3968
  %v3970 = vpop.f32.mrb[0].mxu0
  %3971 = vmatprep.mubr.f32.mxu0 0.0
  %3972 = vmatmul.mubr.f32.gmra.mrb[0].mxu0 %v3832
  %v3973 = vpop.f32.mrb[0].mxu0
  %v3974 = vadd.f32 0.0, %v3973
  %v3975 = vpop.f32.mrb[0].mxu0
  %3976 = vmatprep.mubr.f32.mxu0 0.0
  %3977 = vmatmul.mubr.f32.gmra.mrb[0].mxu0 %v3833
  %v3978 = vpop.f32.mrb[0].mxu0
  %v3979 = vadd.f32 0.0, %v3978
  %v3980 = vpop.f32.mrb[0].mxu0
  %3981 = vmatprep.mubr.f32.mxu0 0.0
  %3982 = vmatmul.mubr.f32.gmra.mrb[0].mxu0 %v3834
  %v3983 = vpop.f32.mrb[0].mxu0
  %v3984 = vadd.f32 0.0, %v3983
  %v3985 = vpop.f32.mrb[0].mxu0
  %3986 = vmatprep.mubr.f32.mxu0 0.0
  %3987 = vmatmul.mubr.f32.gmra.mrb[0].mxu0 %v3835
  %v3988 = vpop.f32.mrb[0].mxu0
  %v3989 = vadd.f32 0.0, %v3988
  %v3990 = vpop.f32.mrb[0].mxu0
  %3991 = vmatprep.mubr.f32.mxu0 0.0
  %3992 = vmatmul.mubr.f32.gmra.mrb[0].mxu0 %v3836
  %v3993 = vpop.f32.mrb[0].mxu0
  %v3994 = vadd.f32 0.0, %v3993
  %v3995 = vpop.f32.mrb[0].mxu0
  %3996 = vmatprep.mubr.f32.mxu0 0.0
  %3997 = vmatmul.mubr.f32.gmra.mrb[0].mxu0 %v3837
  %v3998 = vpop.f32.mrb[0].mxu0
  %v3999 = vadd.f32 0.0, %v3998
  %v4000 = vpop.f32.mrb[0].mxu0
  %4001 = vmatprep.mubr.f32.mxu0 0.0
  %4002 = vmatmul.mubr.f32.gmra.mrb[0].mxu0 %v3838
  %v4003 = vpop.f32.mrb[0].mxu0
  %v4004 = vadd.f32 0.0, %v4003
  %v4005 = vpop.f32.mrb[0].mxu0
  %4006 = vmatprep.mubr.f32.mxu0 0.0
  %4007 = vmatmul.mubr.f32.gmra.mrb[0].mxu0 %v3839
  %v4008 = vpop.f32.mrb[0].mxu0
  %v4009 = vadd.f32 0.0, %v4008
  %v4010 = vpop.f32.mrb[0].mxu0
  %4011 = vdwg.mxu0
  %v4012 = vadd.f32 %v3804, %v3924
  %v4013 = vadd.f32 %v3805, %v3929
  %v4014 = vadd.f32 %v3806, %v3934
  %v4015 = vadd.f32 %v3807, %v3939
  %v4016 = vadd.f32 %v3808, %v3944
  %v4017 = vadd.f32 %v3809, %v3949
  %v4018 = vadd.f32 %v3810, %v3954
  %v4019 = vadd.f32 %v3811, %v3959
  %v4020 = vadd.f32 %v3812, %v3964
  %v4021 = vadd.f32 %v3813, %v3969
  %v4022 = vadd.f32 %v3814, %v3974
  %v4023 = vadd.f32 %v3815, %v3979
  %v4024 = vadd.f32 %v3816, %v3984
  %v4025 = vadd.f32 %v3817, %v3989
  %v4026 = vadd.f32 %v3818, %v3994
  %v4027 = vadd.f32 %v3819, %v3999
  %v4028 = vadd.f32 %v3820, %v4004
  %v4029 = vadd.f32 %v3821, %v4009
  %v4030 = vld [vmem:[#allocation2 + $0x1ef] sm:$0xff]
  %v4031 = vld [vmem:[#allocation2 + $0x1f7] sm:$0xff]
  %v4032 = vld [vmem:[#allocation2 + $0x1ff] sm:$0xff]
  %v4033 = vld [vmem:[#allocation2 + $0x207] sm:$0xff]
  %v4034 = vld [vmem:[#allocation2 + $0x20f] sm:$0xff]
  %v4035 = vld [vmem:[#allocation2 + $0x217] sm:$0xff]
  %v4036 = vld [vmem:[#allocation2 + $0x21f] sm:$0xff]
  %v4037 = vld [vmem:[#allocation2 + $0x227] sm:$0xff]
  %v4038 = vld [vmem:[#allocation2 + $0x22f] sm:$0xff]
  %v4039 = vld [vmem:[#allocation2 + $0x237] sm:$0xff]
  %v4040 = vld [vmem:[#allocation2 + $0x23f] sm:$0xff]
  %v4041 = vld [vmem:[#allocation2 + $0x247] sm:$0xff]
  %v4042 = vld [vmem:[#allocation2 + $0x24f] sm:$0xff]
  %v4043 = vld [vmem:[#allocation2 + $0x257] sm:$0xff]
  %v4044 = vld [vmem:[#allocation2 + $0x25f] sm:$0xff]
  %v4045 = vld [vmem:[#allocation2 + $0x267] sm:$0xff]
  %v4046 = vld [vmem:[#allocation2 + $0x26f] sm:$0xff]
  %v4047 = vld [vmem:[#allocation2 + $0x277] sm:$0x3f]
  %s4048 = scalar_lea.vmem %s2, 1792
  %v4049 = vld [vmem:[%s4048] sm:$0xff]
  %v4050 = vld [vmem:[%s4048 + $0x8] sm:$0xff]
  %v4051 = vld [vmem:[%s4048 + $0x10] sm:$0xff]
  %v4052 = vld [vmem:[%s4048 + $0x18] sm:$0xff]
  %v4053 = vld [vmem:[%s4048 + $0x20] sm:$0xff]
  %v4054 = vld [vmem:[%s4048 + $0x28] sm:$0xff]
  %v4055 = vld [vmem:[%s4048 + $0x30] sm:$0xff]
  %v4056 = vld [vmem:[%s4048 + $0x38] sm:$0xff]
  %v4057 = vld [vmem:[%s4048 + $0x40] sm:$0xff]
  %v4058 = vld [vmem:[%s4048 + $0x48] sm:$0xff]
  %v4059 = vld [vmem:[%s4048 + $0x50] sm:$0xff]
  %v4060 = vld [vmem:[%s4048 + $0x58] sm:$0xff]
  %v4061 = vld [vmem:[%s4048 + $0x60] sm:$0xff]
  %v4062 = vld [vmem:[%s4048 + $0x68] sm:$0xff]
  %v4063 = vld [vmem:[%s4048 + $0x70] sm:$0xff]
  %v4064 = vld [vmem:[%s4048 + $0x78] sm:$0xff]
  %4065 = vmatprep.subr.mxu0 0.0
  %4066 = vmatpush1.msra.mxu0 %v4049
  %4067 = vmatprep.subr.mxu0 0.0
  %4068 = vmatpush1.msra.mxu0 %v4050
  %4069 = vmatprep.subr.mxu0 0.0
  %4070 = vmatpush1.msra.mxu0 %v4051
  %4071 = vmatprep.subr.mxu0 0.0
  %4072 = vmatpush1.msra.mxu0 %v4052
  %4073 = vmatprep.subr.mxu0 0.0
  %4074 = vmatpush1.msra.mxu0 %v4053
  %4075 = vmatprep.subr.mxu0 0.0
  %4076 = vmatpush1.msra.mxu0 %v4054
  %4077 = vmatprep.subr.mxu0 0.0
  %4078 = vmatpush1.msra.mxu0 %v4055
  %4079 = vmatprep.subr.mxu0 0.0
  %4080 = vmatpush1.msra.mxu0 %v4056
  %4081 = vmatprep.subr.mxu0 0.0
  %4082 = vmatpush1.msra.mxu0 %v4057
  %4083 = vmatprep.subr.mxu0 0.0
  %4084 = vmatpush1.msra.mxu0 %v4058
  %4085 = vmatprep.subr.mxu0 0.0
  %4086 = vmatpush1.msra.mxu0 %v4059
  %4087 = vmatprep.subr.mxu0 0.0
  %4088 = vmatpush1.msra.mxu0 %v4060
  %4089 = vmatprep.subr.mxu0 0.0
  %4090 = vmatpush1.msra.mxu0 %v4061
  %4091 = vmatprep.subr.mxu0 0.0
  %4092 = vmatpush1.msra.mxu0 %v4062
  %4093 = vmatprep.subr.mxu0 0.0
  %4094 = vmatpush1.msra.mxu0 %v4063
  %4095 = vmatprep.subr.mxu0 0.0
  %4096 = vmatpush1.msra.mxu0 %v4064
  %4097 = vmatprep.subr.mxu0 0.0
  %4098 = vmatpush1.msra.mxu0 0.0
  %4099 = vmatprep.subr.mxu0 0.0
  %4100 = vmatpush1.msra.mxu0 0.0
  %4101 = vmatprep.subr.mxu0 0.0
  %4102 = vmatpush1.msra.mxu0 0.0
  %4103 = vmatprep.subr.mxu0 0.0
  %4104 = vmatpush1.msra.mxu0 0.0
  %4105 = vmatprep.subr.mxu0 0.0
  %4106 = vmatpush1.msra.mxu0 0.0
  %4107 = vmatprep.subr.mxu0 0.0
  %4108 = vmatpush1.msra.mxu0 0.0
  %4109 = vmatprep.subr.mxu0 0.0
  %4110 = vmatpush1.msra.mxu0 0.0
  %4111 = vmatprep.subr.mxu0 0.0
  %4112 = vmatpush1.msra.mxu0 0.0
  %4113 = vmatprep.subr.mxu0 0.0
  %4114 = vmatpush1.msra.mxu0 0.0
  %4115 = vmatprep.subr.mxu0 0.0
  %4116 = vmatpush1.msra.mxu0 0.0
  %4117 = vmatprep.subr.mxu0 0.0
  %4118 = vmatpush1.msra.mxu0 0.0
  %4119 = vmatprep.subr.mxu0 0.0
  %4120 = vmatpush1.msra.mxu0 0.0
  %4121 = vmatprep.subr.mxu0 0.0
  %4122 = vmatpush1.msra.mxu0 0.0
  %4123 = vmatprep.subr.mxu0 0.0
  %4124 = vmatpush1.msra.mxu0 0.0
  %4125 = vmatprep.subr.mxu0 0.0
  %4126 = vmatpush1.msra.mxu0 0.0
  %4127 = vmatprep.subr.mxu0 0.0
  %4128 = vmatpush1.msra.mxu0 0.0
  %4129 = vmatprep.mubr.f32.mxu0 0.0
  %4130 = vmatmul.mubr.f32.gmra.mrb[0].mxu0 %v4030
  %v4131 = vpop.f32.mrb[0].mxu0
  %v4132 = vadd.f32 0.0, %v4131
  %v4133 = vpop.f32.mrb[0].mxu0
  %4134 = vmatprep.mubr.f32.mxu0 0.0
  %4135 = vmatmul.mubr.f32.gmra.mrb[0].mxu0 %v4031
  %v4136 = vpop.f32.mrb[0].mxu0
  %v4137 = vadd.f32 0.0, %v4136
  %v4138 = vpop.f32.mrb[0].mxu0
  %4139 = vmatprep.mubr.f32.mxu0 0.0
  %4140 = vmatmul.mubr.f32.gmra.mrb[0].mxu0 %v4032
  %v4141 = vpop.f32.mrb[0].mxu0
  %v4142 = vadd.f32 0.0, %v4141
  %v4143 = vpop.f32.mrb[0].mxu0
  %4144 = vmatprep.mubr.f32.mxu0 0.0
  %4145 = vmatmul.mubr.f32.gmra.mrb[0].mxu0 %v4033
  %v4146 = vpop.f32.mrb[0].mxu0
  %v4147 = vadd.f32 0.0, %v4146
  %v4148 = vpop.f32.mrb[0].mxu0
  %4149 = vmatprep.mubr.f32.mxu0 0.0
  %4150 = vmatmul.mubr.f32.gmra.mrb[0].mxu0 %v4034
  %v4151 = vpop.f32.mrb[0].mxu0
  %v4152 = vadd.f32 0.0, %v4151
  %v4153 = vpop.f32.mrb[0].mxu0
  %4154 = vmatprep.mubr.f32.mxu0 0.0
  %4155 = vmatmul.mubr.f32.gmra.mrb[0].mxu0 %v4035
  %v4156 = vpop.f32.mrb[0].mxu0
  %v4157 = vadd.f32 0.0, %v4156
  %v4158 = vpop.f32.mrb[0].mxu0
  %4159 = vmatprep.mubr.f32.mxu0 0.0
  %4160 = vmatmul.mubr.f32.gmra.mrb[0].mxu0 %v4036
  %v4161 = vpop.f32.mrb[0].mxu0
  %v4162 = vadd.f32 0.0, %v4161
  %v4163 = vpop.f32.mrb[0].mxu0
  %4164 = vmatprep.mubr.f32.mxu0 0.0
  %4165 = vmatmul.mubr.f32.gmra.mrb[0].mxu0 %v4037
  %v4166 = vpop.f32.mrb[0].mxu0
  %v4167 = vadd.f32 0.0, %v4166
  %v4168 = vpop.f32.mrb[0].mxu0
  %4169 = vmatprep.mubr.f32.mxu0 0.0
  %4170 = vmatmul.mubr.f32.gmra.mrb[0].mxu0 %v4038
  %v4171 = vpop.f32.mrb[0].mxu0
  %v4172 = vadd.f32 0.0, %v4171
  %v4173 = vpop.f32.mrb[0].mxu0
  %4174 = vmatprep.mubr.f32.mxu0 0.0
  %4175 = vmatmul.mubr.f32.gmra.mrb[0].mxu0 %v4039
  %v4176 = vpop.f32.mrb[0].mxu0
  %v4177 = vadd.f32 0.0, %v4176
  %v4178 = vpop.f32.mrb[0].mxu0
  %4179 = vmatprep.mubr.f32.mxu0 0.0
  %4180 = vmatmul.mubr.f32.gmra.mrb[0].mxu0 %v4040
  %v4181 = vpop.f32.mrb[0].mxu0
  %v4182 = vadd.f32 0.0, %v4181
  %v4183 = vpop.f32.mrb[0].mxu0
  %4184 = vmatprep.mubr.f32.mxu0 0.0
  %4185 = vmatmul.mubr.f32.gmra.mrb[0].mxu0 %v4041
  %v4186 = vpop.f32.mrb[0].mxu0
  %v4187 = vadd.f32 0.0, %v4186
  %v4188 = vpop.f32.mrb[0].mxu0
  %4189 = vmatprep.mubr.f32.mxu0 0.0
  %4190 = vmatmul.mubr.f32.gmra.mrb[0].mxu0 %v4042
  %v4191 = vpop.f32.mrb[0].mxu0
  %v4192 = vadd.f32 0.0, %v4191
  %v4193 = vpop.f32.mrb[0].mxu0
  %4194 = vmatprep.mubr.f32.mxu0 0.0
  %4195 = vmatmul.mubr.f32.gmra.mrb[0].mxu0 %v4043
  %v4196 = vpop.f32.mrb[0].mxu0
  %v4197 = vadd.f32 0.0, %v4196
  %v4198 = vpop.f32.mrb[0].mxu0
  %4199 = vmatprep.mubr.f32.mxu0 0.0
  %4200 = vmatmul.mubr.f32.gmra.mrb[0].mxu0 %v4044
  %v4201 = vpop.f32.mrb[0].mxu0
  %v4202 = vadd.f32 0.0, %v4201
  %v4203 = vpop.f32.mrb[0].mxu0
  %4204 = vmatprep.mubr.f32.mxu0 0.0
  %4205 = vmatmul.mubr.f32.gmra.mrb[0].mxu0 %v4045
  %v4206 = vpop.f32.mrb[0].mxu0
  %v4207 = vadd.f32 0.0, %v4206
  %v4208 = vpop.f32.mrb[0].mxu0
  %4209 = vmatprep.mubr.f32.mxu0 0.0
  %4210 = vmatmul.mubr.f32.gmra.mrb[0].mxu0 %v4046
  %v4211 = vpop.f32.mrb[0].mxu0
  %v4212 = vadd.f32 0.0, %v4211
  %v4213 = vpop.f32.mrb[0].mxu0
  %4214 = vmatprep.mubr.f32.mxu0 0.0
  %4215 = vmatmul.mubr.f32.gmra.mrb[0].mxu0 %v4047
  %v4216 = vpop.f32.mrb[0].mxu0
  %v4217 = vadd.f32 0.0, %v4216
  %v4218 = vpop.f32.mrb[0].mxu0
  %4219 = vdwg.mxu0
  %v4220 = vadd.f32 %v4012, %v4132
  %v4221 = vadd.f32 %v4013, %v4137
  %v4222 = vadd.f32 %v4014, %v4142
  %v4223 = vadd.f32 %v4015, %v4147
  %v4224 = vadd.f32 %v4016, %v4152
  %v4225 = vadd.f32 %v4017, %v4157
  %v4226 = vadd.f32 %v4018, %v4162
  %v4227 = vadd.f32 %v4019, %v4167
  %v4228 = vadd.f32 %v4020, %v4172
  %v4229 = vadd.f32 %v4021, %v4177
  %v4230 = vadd.f32 %v4022, %v4182
  %v4231 = vadd.f32 %v4023, %v4187
  %v4232 = vadd.f32 %v4024, %v4192
  %v4233 = vadd.f32 %v4025, %v4197
  %v4234 = vadd.f32 %v4026, %v4202
  %v4235 = vadd.f32 %v4027, %v4207
  %v4236 = vadd.f32 %v4028, %v4212
  %v4237 = vadd.f32 %v4029, %v4217
  %v4238 = vld [vmem:[%s3] sm:$0x1]
  %v4240 = vlaneseq
  %v4241 = vshrl.u32 %v4240, 7
  %v4242 = vsub.s32 0, %v4241
  %v4243 = vrot.slane %v4238, %v4242
  %v4245 = vadd.f32 %v4220, %v4243
  %v4246 = vadd.f32 %v4221, %v4243
  %v4247 = vadd.f32 %v4222, %v4243
  %v4248 = vadd.f32 %v4223, %v4243
  %v4249 = vadd.f32 %v4224, %v4243
  %v4250 = vadd.f32 %v4225, %v4243
  %v4251 = vadd.f32 %v4226, %v4243
  %v4252 = vadd.f32 %v4227, %v4243
  %v4253 = vadd.f32 %v4228, %v4243
  %v4254 = vadd.f32 %v4229, %v4243
  %v4255 = vadd.f32 %v4230, %v4243
  %v4256 = vadd.f32 %v4231, %v4243
  %v4257 = vadd.f32 %v4232, %v4243
  %v4258 = vadd.f32 %v4233, %v4243
  %v4259 = vadd.f32 %v4234, %v4243
  %v4260 = vadd.f32 %v4235, %v4243
  %v4261 = vadd.f32 %v4236, %v4243
  %v4262 = vadd.f32 %v4237, %v4243
  %vm4263 = vcmp.ge.f32.partialorder %v4245, 0.0
  %vm4264 = vcmp.ge.f32.partialorder %v4246, 0.0
  %vm4265 = vcmp.ge.f32.partialorder %v4247, 0.0
  %vm4266 = vcmp.ge.f32.partialorder %v4248, 0.0
  %vm4267 = vcmp.ge.f32.partialorder %v4249, 0.0
  %vm4268 = vcmp.ge.f32.partialorder %v4250, 0.0
  %vm4269 = vcmp.ge.f32.partialorder %v4251, 0.0
  %vm4270 = vcmp.ge.f32.partialorder %v4252, 0.0
  %vm4271 = vcmp.ge.f32.partialorder %v4253, 0.0
  %vm4272 = vcmp.ge.f32.partialorder %v4254, 0.0
  %vm4273 = vcmp.ge.f32.partialorder %v4255, 0.0
  %vm4274 = vcmp.ge.f32.partialorder %v4256, 0.0
  %vm4275 = vcmp.ge.f32.partialorder %v4257, 0.0
  %vm4276 = vcmp.ge.f32.partialorder %v4258, 0.0
  %vm4277 = vcmp.ge.f32.partialorder %v4259, 0.0
  %vm4278 = vcmp.ge.f32.partialorder %v4260, 0.0
  %vm4279 = vcmp.ge.f32.partialorder %v4261, 0.0
  %vm4280 = vcmp.ge.f32.partialorder %v4262, 0.0
  %v4281 = vmul.f32 %v4245, 0.01
  %v4282 = vmul.f32 %v4246, 0.01
  %v4283 = vmul.f32 %v4247, 0.01
  %v4284 = vmul.f32 %v4248, 0.01
  %v4285 = vmul.f32 %v4249, 0.01
  %v4286 = vmul.f32 %v4250, 0.01
  %v4287 = vmul.f32 %v4251, 0.01
  %v4288 = vmul.f32 %v4252, 0.01
  %v4289 = vmul.f32 %v4253, 0.01
  %v4290 = vmul.f32 %v4254, 0.01
  %v4291 = vmul.f32 %v4255, 0.01
  %v4292 = vmul.f32 %v4256, 0.01
  %v4293 = vmul.f32 %v4257, 0.01
  %v4294 = vmul.f32 %v4258, 0.01
  %v4295 = vmul.f32 %v4259, 0.01
  %v4296 = vmul.f32 %v4260, 0.01
  %v4297 = vmul.f32 %v4261, 0.01
  %v4298 = vmul.f32 %v4262, 0.01
  %v4299 = vsel %vm4263, %v4245, %v4281
  %v4300 = vsel %vm4264, %v4246, %v4282
  %v4301 = vsel %vm4265, %v4247, %v4283
  %v4302 = vsel %vm4266, %v4248, %v4284
  %v4303 = vsel %vm4267, %v4249, %v4285
  %v4304 = vsel %vm4268, %v4250, %v4286
  %v4305 = vsel %vm4269, %v4251, %v4287
  %v4306 = vsel %vm4270, %v4252, %v4288
  %v4307 = vsel %vm4271, %v4253, %v4289
  %v4308 = vsel %vm4272, %v4254, %v4290
  %v4309 = vsel %vm4273, %v4255, %v4291
  %v4310 = vsel %vm4274, %v4256, %v4292
  %v4311 = vsel %vm4275, %v4257, %v4293
  %v4312 = vsel %vm4276, %v4258, %v4294
  %v4313 = vsel %vm4277, %v4259, %v4295
  %v4314 = vsel %vm4278, %v4260, %v4296
  %v4315 = vsel %vm4279, %v4261, %v4297
  %v4316 = vsel %vm4280, %v4262, %v4298
  %v4317 = vld [vmem:[%s4] sm:$0xff]
  %v4318 = vld [vmem:[%s4 + $0x8] sm:$0xff]
  %v4319 = vld [vmem:[%s4 + $0x10] sm:$0xff]
  %v4320 = vld [vmem:[%s4 + $0x18] sm:$0xff]
  %v4321 = vld [vmem:[%s4 + $0x20] sm:$0xff]
  %v4322 = vld [vmem:[%s4 + $0x28] sm:$0xff]
  %v4323 = vld [vmem:[%s4 + $0x30] sm:$0xff]
  %v4324 = vld [vmem:[%s4 + $0x38] sm:$0xff]
  %v4325 = vld [vmem:[%s4 + $0x40] sm:$0xff]
  %v4326 = vld [vmem:[%s4 + $0x48] sm:$0xff]
  %v4327 = vld [vmem:[%s4 + $0x50] sm:$0xff]
  %v4328 = vld [vmem:[%s4 + $0x58] sm:$0xff]
  %v4329 = vld [vmem:[%s4 + $0x60] sm:$0xff]
  %v4330 = vld [vmem:[%s4 + $0x68] sm:$0xff]
  %v4331 = vld [vmem:[%s4 + $0x70] sm:$0xff]
  %v4332 = vld [vmem:[%s4 + $0x78] sm:$0xff]
  %v4333 = vld [vmem:[%s4 + $0x80] sm:$0xff]
  %v4334 = vld [vmem:[%s4 + $0x88] sm:$0x3f]
  %v4335 = vmul.f32 %v4299, %v4317
  %v4336 = vmul.f32 %v4300, %v4318
  %v4337 = vmul.f32 %v4301, %v4319
  %v4338 = vmul.f32 %v4302, %v4320
  %v4339 = vmul.f32 %v4303, %v4321
  %v4340 = vmul.f32 %v4304, %v4322
  %v4341 = vmul.f32 %v4305, %v4323
  %v4342 = vmul.f32 %v4306, %v4324
  %v4343 = vmul.f32 %v4307, %v4325
  %v4344 = vmul.f32 %v4308, %v4326
  %v4345 = vmul.f32 %v4309, %v4327
  %v4346 = vmul.f32 %v4310, %v4328
  %v4347 = vmul.f32 %v4311, %v4329
  %v4348 = vmul.f32 %v4312, %v4330
  %v4349 = vmul.f32 %v4313, %v4331
  %v4350 = vmul.f32 %v4314, %v4332
  %v4351 = vmul.f32 %v4315, %v4333
  %v4352 = vmul.f32 %v4316, %v4334
  %v4353 = vadd.f32 %v4335, %v4336
  %v4354 = vadd.f32 %v4353, %v4337
  %v4355 = vadd.f32 %v4354, %v4338
  %v4356 = vadd.f32 %v4355, %v4339
  %v4357 = vadd.f32 %v4356, %v4340
  %v4358 = vadd.f32 %v4357, %v4341
  %v4359 = vadd.f32 %v4358, %v4342
  %v4360 = vadd.f32 %v4359, %v4343
  %v4361 = vadd.f32 %v4360, %v4344
  %v4362 = vadd.f32 %v4361, %v4345
  %v4363 = vadd.f32 %v4362, %v4346
  %v4364 = vadd.f32 %v4363, %v4347
  %v4365 = vadd.f32 %v4364, %v4348
  %v4366 = vadd.f32 %v4365, %v4349
  %v4367 = vadd.f32 %v4366, %v4350
  %v4368 = vadd.f32 %v4367, %v4351
  %vm4369 = vcmask 1045504
  %v4370 = vsel %vm4369, %v4352, 0.0
  %v4371 = vadd.f32 %v4368, %v4370
  %v4372 = vrot.slane %v4371, 4
  %v4373 = vadd.f32 %v4371, %v4372
  %v4374 = vrot.slane %v4373, 2
  %v4375 = vadd.f32 %v4373, %v4374
  %v4376 = vrot.slane %v4375, 1
  %v4377 = vadd.f32 %v4375, %v4376
  %v4378 = vld [vmem:[%s5] sm:$0xff]
  %v4379 = vld [vmem:[%s5 + $0x8] sm:$0xff]
  %v4380 = vld [vmem:[%s5 + $0x10] sm:$0xff]
  %v4381 = vld [vmem:[%s5 + $0x18] sm:$0xff]
  %v4382 = vld [vmem:[%s5 + $0x20] sm:$0xff]
  %v4383 = vld [vmem:[%s5 + $0x28] sm:$0xff]
  %v4384 = vld [vmem:[%s5 + $0x30] sm:$0xff]
  %v4385 = vld [vmem:[%s5 + $0x38] sm:$0xff]
  %v4386 = vld [vmem:[%s5 + $0x40] sm:$0xff]
  %v4387 = vld [vmem:[%s5 + $0x48] sm:$0xff]
  %v4388 = vld [vmem:[%s5 + $0x50] sm:$0xff]
  %v4389 = vld [vmem:[%s5 + $0x58] sm:$0xff]
  %v4390 = vld [vmem:[%s5 + $0x60] sm:$0xff]
  %v4391 = vld [vmem:[%s5 + $0x68] sm:$0xff]
  %v4392 = vld [vmem:[%s5 + $0x70] sm:$0xff]
  %v4393 = vld [vmem:[%s5 + $0x78] sm:$0xff]
  %v4394 = vld [vmem:[%s5 + $0x80] sm:$0xff]
  %v4395 = vld [vmem:[%s5 + $0x88] sm:$0x3f]
  %v4396 = vmul.f32 %v4299, %v4378
  %v4397 = vmul.f32 %v4300, %v4379
  %v4398 = vmul.f32 %v4301, %v4380
  %v4399 = vmul.f32 %v4302, %v4381
  %v4400 = vmul.f32 %v4303, %v4382
  %v4401 = vmul.f32 %v4304, %v4383
  %v4402 = vmul.f32 %v4305, %v4384
  %v4403 = vmul.f32 %v4306, %v4385
  %v4404 = vmul.f32 %v4307, %v4386
  %v4405 = vmul.f32 %v4308, %v4387
  %v4406 = vmul.f32 %v4309, %v4388
  %v4407 = vmul.f32 %v4310, %v4389
  %v4408 = vmul.f32 %v4311, %v4390
  %v4409 = vmul.f32 %v4312, %v4391
  %v4410 = vmul.f32 %v4313, %v4392
  %v4411 = vmul.f32 %v4314, %v4393
  %v4412 = vmul.f32 %v4315, %v4394
  %v4413 = vmul.f32 %v4316, %v4395
  %v4414 = vadd.f32 %v4396, %v4397
  %v4415 = vadd.f32 %v4414, %v4398
  %v4416 = vadd.f32 %v4415, %v4399
  %v4417 = vadd.f32 %v4416, %v4400
  %v4418 = vadd.f32 %v4417, %v4401
  %v4419 = vadd.f32 %v4418, %v4402
  %v4420 = vadd.f32 %v4419, %v4403
  %v4421 = vadd.f32 %v4420, %v4404
  %v4422 = vadd.f32 %v4421, %v4405
  %v4423 = vadd.f32 %v4422, %v4406
  %v4424 = vadd.f32 %v4423, %v4407
  %v4425 = vadd.f32 %v4424, %v4408
  %v4426 = vadd.f32 %v4425, %v4409
  %v4427 = vadd.f32 %v4426, %v4410
  %v4428 = vadd.f32 %v4427, %v4411
  %v4429 = vadd.f32 %v4428, %v4412
  %v4430 = vsel %vm4369, %v4413, 0.0
  %v4431 = vadd.f32 %v4429, %v4430
  %v4432 = vrot.slane %v4431, 4
  %v4433 = vadd.f32 %v4431, %v4432
  %v4434 = vrot.slane %v4433, 2
  %v4435 = vadd.f32 %v4433, %v4434
  %v4436 = vrot.slane %v4435, 1
  %v4437 = vadd.f32 %v4435, %v4436
  %vm4438 = vcmask 1040384
  %v4439 = vsel %vm4438, %v4377, %v4437
  %vm4440 = vcmask 1041408
  %v4441 = vsel %vm4440, %v4439, 0.0
  %4442 = vadd.xlane.f32.xlu0 %v4441
  %v4443 = vpop.xlane.xlu0 %4442
  %v4444 = vld [vmem:[#allocation3] sm:$0x1]
  %v4446 = vlaneseq
  %v4447 = vshrl.u32 %v4446, 7
  %v4448 = vsub.s32 0, %v4447
  %v4449 = vrot.slane %v4444, %v4448
  %v4451 = vadd.f32 %v4443, %v4449
  %v4452 = vxor.u32 %v4451, 2147483648
  %v4453 = vmul.f32 %v4452, 1.442695
  %v4454 = vpow.pop %v4453
  %v4455 = vadd.f32 %v4454, 1.0
  %v4456 = vrcp.pop %v4455
  %v4457 = vmul.f32 1.0, %v4456
  %vm4458 = vcmask 1024
  %4459 = vst.msk [vmem:[%s7] sm:$0x3] %vm4458, %v4457
  // Predicated region
  $region30: #{discriminator_forward.1} parent=0 // pred_check
    _
  $region31: #{discriminator_forward.1} parent=0 // pred_check_branch
    %4461 = sbr.rel (0) target = $region33
  $region32: #{discriminator_forward.1} parent=0 // pred_region
    _
  $region33: #{discriminator_forward.1} parent=0 // pred_fallthru
    _
  // Predicated region
  $region34: #{discriminator_forward.1} parent=0 // pred_check
    _
  $region35: #{discriminator_forward.1} parent=0 // pred_check_branch
    %4463 = sbr.rel (0) target = $region37
  $region36: #{discriminator_forward.1} parent=0 // pred_region
    _
  $region37: #{discriminator_forward.1} parent=0 // pred_fallthru
    _

</llo_original>
